<compile_context>
chip_gen: v5e
topology: v5e:2x2
jax: 0.10.0
libtpu: 0.0.40
codegen_flags: <defaults>
</compile_context>

<pallas_src>
import functools

import jax
import jax.numpy as jnp
from jax import lax
from jax.experimental import pallas as pl
from jax.experimental.pallas import tpu as pltpu

SELU_ALPHA = 1.6732632423543772848170429916717
SELU_SCALE = 1.0507009873554804934193349852946
BN_EPS = 1e-5
OUT_PAD = 128   # lane-dense padding for the 2-channel output conv


def _selu(x):
    return SELU_SCALE * jnp.where(x > 0, x, SELU_ALPHA * (jnp.exp(x) - 1.0))


def _batchnorm(x, gamma, beta):
    # BatchNorm2d training-mode forward: batch mean / biased variance over P = N*H*W.
    mean = jnp.mean(x, axis=0, keepdims=True)
    var = jnp.mean(jnp.square(x - mean), axis=0, keepdims=True)
    return (x - mean) * lax.rsqrt(var + BN_EPS) * gamma + beta


# ------------------------------- fused kernel ------------------------------ #

def chess_cnn_kernel(mask_ref, xcol_ref, win_ref, bin_ref,
                     w1_ref, b1_ref, g1_ref, be1_ref,
                     w2_ref, b2_ref, g2_ref, be2_ref,
                     wout_ref, bout_ref, o_ref, act_ref, *, board_w):
    layer = pl.program_id(0)
    n_layers = pl.num_programs(0)
    mask = mask_ref[...]                       # (P, 9) border masks, f32 {0, 1}

    def conv3x3(act_f32, w_bf16, bias_f32):
        # act_f32: (P, C).  Build the 9 shifted taps -> (P, 9*C), then a single
        # K = 9*C bf16 matmul on the MXU with f32 accumulation.
        cols = []
        for k in range(9):
            dy, dx = k // 3 - 1, k % 3 - 1
            s = dy * board_w + dx
            if s == 0:
                shifted = act_f32
            else:
                # output[p] = act[p + s] (cyclic); wrapped rows are zeroed by the mask.
                shifted = jnp.concatenate([act_f32[s:], act_f32[:s]], axis=0)
            cols.append(shifted * mask[:, k:k + 1])
        taps = jnp.concatenate(cols, axis=-1).astype(jnp.bfloat16)
        return jnp.dot(taps, w_bf16, preferred_element_type=jnp.float32) + bias_f32

    # Input conv (6 -> C) + ReLU on the first grid step only.  The raw input was
    # im2col'd once on the host (tiny, one-time, not per layer).
    @pl.when(layer == 0)
    def _():
        h0 = jnp.dot(xcol_ref[...], win_ref[...],
                     preferred_element_type=jnp.float32) + bin_ref[...]
        act_ref[...] = jnp.maximum(h0, 0.0)

    # Residual ChessModule for this grid step (per-block weights streamed by BlockSpec).
    res = act_ref[...]
    h = conv3x3(res, w1_ref[0], b1_ref[0])
    h = _selu(_batchnorm(h, g1_ref[0], be1_ref[0]))
    h = conv3x3(h, w2_ref[0], b2_ref[0])
    h = _selu(_batchnorm(h, g2_ref[0], be2_ref[0]) + res)
    act_ref[...] = h

    # Output conv (C -> 2, lane-padded to OUT_PAD) on the last grid step.
    @pl.when(layer == n_layers - 1)
    def _():
        o = conv3x3(h, wout_ref[...], bout_ref[...])
        o_ref[...] = o.astype(o_ref.dtype)


# ------------------------------ host wrappers ------------------------------ #

def _w9(w):
    # (Cout, Cin, 3, 3) -> (9*Cin, Cout); rows ordered (ky, kx, cin) to match the
    # in-kernel tap concatenation order.
    cout, cin = w.shape[0], w.shape[1]
    return jnp.transpose(w, (2, 3, 1, 0)).reshape(9 * cin, cout)


def _border_mask(N, H, W):
    p = jnp.arange(N * H * W)
    yy = (p % (H * W)) // W
    xx = p % W
    cols = []
    for ky in range(3):
        for kx in range(3):
            dy, dx = ky - 1, kx - 1
            cols.append((yy + dy >= 0) & (yy + dy < H) & (xx + dx >= 0) & (xx + dx < W))
    return jnp.stack(cols, axis=1).astype(jnp.float32)       # (P, 9)


def _im2col(x_nhwc):
    N, H, W, C = x_nhwc.shape
    xp = jnp.pad(x_nhwc, ((0, 0), (1, 1), (1, 1), (0, 0)))
    cols = [xp[:, ky:ky + H, kx:kx + W, :].reshape(N * H * W, C)
            for ky in range(3) for kx in range(3)]
    return jnp.concatenate(cols, axis=-1)                    # (P, 9*C)


def chess_cnn_forward(x_nchw, params):
    N, Cin, H, W = x_nchw.shape
    C = params["in_b"].shape[0]
    L = len(params["blocks"])
    P = N * H * W

    x_nhwc = jnp.transpose(x_nchw, (0, 2, 3, 1)).astype(jnp.float32)
    xcol = _im2col(x_nhwc).astype(jnp.bfloat16)                      # (P, 9*Cin)
    mask = _border_mask(N, H, W)                                     # (P, 9)

    win9 = _w9(params["in_w"]).astype(jnp.bfloat16)                  # (9*Cin, C)
    bin2 = params["in_b"].reshape(1, C).astype(jnp.float32)

    blocks = params["blocks"]
    W1 = jnp.stack([_w9(b["w1"]) for b in blocks]).astype(jnp.bfloat16)         # (L, 9C, C)
    B1 = jnp.stack([b["b1"].reshape(1, C) for b in blocks]).astype(jnp.float32)  # (L, 1, C)
    G1 = jnp.stack([b["g1"].reshape(1, C) for b in blocks]).astype(jnp.float32)
    Be1 = jnp.stack([b["be1"].reshape(1, C) for b in blocks]).astype(jnp.float32)
    W2 = jnp.stack([_w9(b["w2"]) for b in blocks]).astype(jnp.bfloat16)
    B2 = jnp.stack([b["b2"].reshape(1, C) for b in blocks]).astype(jnp.float32)
    G2 = jnp.stack([b["g2"].reshape(1, C) for b in blocks]).astype(jnp.float32)
    Be2 = jnp.stack([b["be2"].reshape(1, C) for b in blocks]).astype(jnp.float32)

    cout = params["out_b"].shape[0]
    wout9 = jnp.pad(_w9(params["out_w"]),
                    ((0, 0), (0, OUT_PAD - cout))).astype(jnp.bfloat16)   # (9C, OUT_PAD)
    bout2 = jnp.pad(params["out_b"].reshape(1, cout),
                    ((0, 0), (0, OUT_PAD - cout))).astype(jnp.float32)    # (1, OUT_PAD)

    grid_spec = pltpu.PrefetchScalarGridSpec(
        num_scalar_prefetch=0,
        grid=(L,),
        in_specs=[
            pl.BlockSpec((P, 9), lambda i: (0, 0)),                 # border mask
            pl.BlockSpec((P, 9 * Cin), lambda i: (0, 0)),           # input im2col
            pl.BlockSpec((9 * Cin, C), lambda i: (0, 0)),           # input conv W
            pl.BlockSpec((1, C), lambda i: (0, 0)),                 # input conv b
            pl.BlockSpec((1, 9 * C, C), lambda i: (i, 0, 0)),       # W1 (streamed)
            pl.BlockSpec((1, 1, C), lambda i: (i, 0, 0)),           # b1
            pl.BlockSpec((1, 1, C), lambda i: (i, 0, 0)),           # gamma1
            pl.BlockSpec((1, 1, C), lambda i: (i, 0, 0)),           # beta1
            pl.BlockSpec((1, 9 * C, C), lambda i: (i, 0, 0)),       # W2 (streamed)
            pl.BlockSpec((1, 1, C), lambda i: (i, 0, 0)),           # b2
            pl.BlockSpec((1, 1, C), lambda i: (i, 0, 0)),           # gamma2
            pl.BlockSpec((1, 1, C), lambda i: (i, 0, 0)),           # beta2
            pl.BlockSpec((9 * C, OUT_PAD), lambda i: (0, 0)),       # output conv W (padded)
            pl.BlockSpec((1, OUT_PAD), lambda i: (0, 0)),           # output conv b (padded)
        ],
        out_specs=pl.BlockSpec((P, OUT_PAD), lambda i: (0, 0)),
        scratch_shapes=[pltpu.VMEM((P, C), jnp.float32)],           # resident activation
    )

    out = pl.pallas_call(
        functools.partial(chess_cnn_kernel, board_w=W),
        out_shape=jax.ShapeDtypeStruct((P, OUT_PAD), jnp.float32),
        grid_spec=grid_spec,
        compiler_params=pltpu.CompilerParams(dimension_semantics=("arbitrary",)),
    )(mask, xcol, win9, bin2, W1, B1, G1, Be1, W2, B2, G2, Be2, wout9, bout2)

    out = out[:, :cout].reshape(N, H, W, cout)
    return jnp.transpose(out, (0, 3, 1, 2))                          # back to NCHW


# ----------------------------- parameter init ------------------------------ #

def init_params(key, hidden_layers, hidden_size, in_channels=6, out_channels=2):
    def conv_init(k, cout, cin):
        kw, kb = jax.random.split(k)
        fan_in = cin * 9
        w = jax.random.normal(kw, (cout, cin, 3, 3), jnp.float32) / jnp.sqrt(fan_in)
        b = jax.random.normal(kb, (cout,), jnp.float32) * 0.01
        return w, b

    keys = jax.random.split(key, hidden_layers + 2)
    in_w, in_b = conv_init(keys[0], hidden_size, in_channels)
    blocks = []
    for i in range(hidden_layers):
        k1, k2 = jax.random.split(keys[1 + i])
        w1, b1 = conv_init(k1, hidden_size, hidden_size)
        w2, b2 = conv_init(k2, hidden_size, hidden_size)
        blocks.append(dict(
            w1=w1, b1=b1, g1=jnp.ones((hidden_size,), jnp.float32),
            be1=jnp.zeros((hidden_size,), jnp.float32),
            w2=w2, b2=b2, g2=jnp.ones((hidden_size,), jnp.float32),
            be2=jnp.zeros((hidden_size,), jnp.float32),
        ))
    out_w, out_b = conv_init(keys[-1], out_channels, hidden_size)
    return dict(in_w=in_w, in_b=in_b, blocks=blocks, out_w=out_w, out_b=out_b)


if __name__ == "__main__":
    # Chess-board-shaped config: batch=2, 6 input planes, 8x8 board,
    # hidden_size=32, hidden_layers=2 (module defaults 200 / 64 scaled down).
    key = jax.random.PRNGKey(0)
    k_params, k_x = jax.random.split(key)

    hidden_layers, hidden_size = 2, 32
    params = init_params(k_params, hidden_layers, hidden_size)
    x = jax.random.normal(k_x, (2, 6, 8, 8), jnp.float32)   # NCHW like PyTorch

    fwd = jax.jit(lambda inp: chess_cnn_forward(inp, params))
    out = fwd(x)
    jax.block_until_ready(out)
    assert out.shape == (2, 2, 8, 8), out.shape
    assert bool(jnp.all(jnp.isfinite(out)))
    print("KERNEL_OK")
</pallas_src>

<mosaic_0001>
module attributes {stable_mosaic.version = 11 : i64} {
  func.func @chess_cnn_kernel(%arg0: i32, %arg1: memref<128x9xf32, #tpu.memory_space<vmem>>, %arg2: memref<128x54xbf16, #tpu.memory_space<vmem>>, %arg3: memref<54x32xbf16, #tpu.memory_space<vmem>>, %arg4: memref<1x32xf32, #tpu.memory_space<vmem>>, %arg5: memref<1x288x32xbf16, #tpu.memory_space<vmem>>, %arg6: memref<1x1x32xf32, #tpu.memory_space<vmem>>, %arg7: memref<1x1x32xf32, #tpu.memory_space<vmem>>, %arg8: memref<1x1x32xf32, #tpu.memory_space<vmem>>, %arg9: memref<1x288x32xbf16, #tpu.memory_space<vmem>>, %arg10: memref<1x1x32xf32, #tpu.memory_space<vmem>>, %arg11: memref<1x1x32xf32, #tpu.memory_space<vmem>>, %arg12: memref<1x1x32xf32, #tpu.memory_space<vmem>>, %arg13: memref<288x128xbf16, #tpu.memory_space<vmem>>, %arg14: memref<1x128xf32, #tpu.memory_space<vmem>>, %arg15: memref<128x128xf32, #tpu.memory_space<vmem>>, %arg16: memref<128x32xf32, #tpu.memory_space<vmem>>) attributes {dimension_semantics = [#tpu.dimension_semantics<arbitrary>], iteration_bounds = array<i64: 2>, scalar_prefetch = 0 : i64, scratch_operands = 1 : i64, tpu.core_type = #tpu.core_type<tc>, window_params = [{pipeline_mode = #tpu.pipeline_mode<synchronous>, transform_indices = @transform_0, window_bounds = array<i64: 128, 9>}, {pipeline_mode = #tpu.pipeline_mode<synchronous>, transform_indices = @transform_1, window_bounds = array<i64: 128, 54>}, {pipeline_mode = #tpu.pipeline_mode<synchronous>, transform_indices = @transform_2, window_bounds = array<i64: 54, 32>}, {pipeline_mode = #tpu.pipeline_mode<synchronous>, transform_indices = @transform_3, window_bounds = array<i64: 1, 32>}, {transform_indices = @transform_4, window_bounds = array<i64: 1, 288, 32>}, {transform_indices = @transform_5, window_bounds = array<i64: 1, 1, 32>}, {transform_indices = @transform_6, window_bounds = array<i64: 1, 1, 32>}, {transform_indices = @transform_7, window_bounds = array<i64: 1, 1, 32>}, {transform_indices = @transform_8, window_bounds = array<i64: 1, 288, 32>}, {transform_indices = @transform_9, window_bounds = array<i64: 1, 1, 32>}, {transform_indices = @transform_10, window_bounds = array<i64: 1, 1, 32>}, {transform_indices = @transform_11, window_bounds = array<i64: 1, 1, 32>}, {pipeline_mode = #tpu.pipeline_mode<synchronous>, transform_indices = @transform_12, window_bounds = array<i64: 288, 128>}, {pipeline_mode = #tpu.pipeline_mode<synchronous>, transform_indices = @transform_13, window_bounds = array<i64: 1, 128>}, {pipeline_mode = #tpu.pipeline_mode<synchronous>, transform_indices = @transform_14, window_bounds = array<i64: 128, 128>}]} {
    %c0 = arith.constant 0 : index
    %c0_0 = arith.constant 0 : index
    %0 = vector.load %arg1[%c0, %c0_0] : memref<128x9xf32, #tpu.memory_space<vmem>>, vector<128x9xf32>
    %c0_i32 = arith.constant 0 : i32
    %1 = arith.cmpi eq, %arg0, %c0_i32 : i32
    %2 = arith.extui %1 : i1 to i32
    %c0_i32_1 = arith.constant 0 : i32
    %3 = arith.cmpi ne, %2, %c0_i32_1 : i32
    scf.if %3 {
      %c0_50 = arith.constant 0 : index
      %c0_51 = arith.constant 0 : index
      %202 = vector.load %arg2[%c0_50, %c0_51] : memref<128x54xbf16, #tpu.memory_space<vmem>>, vector<128x54xbf16>
      %c0_52 = arith.constant 0 : index
      %c0_53 = arith.constant 0 : index
      %203 = vector.load %arg3[%c0_52, %c0_53] : memref<54x32xbf16, #tpu.memory_space<vmem>>, vector<54x32xbf16>
      %cst_54 = arith.constant dense<0.000000e+00> : vector<128x32xf32>
      %204 = tpu.matmul %202, %203, %cst_54 {dimension_numbers = #tpu.dot_dimension_numbers<[1], [0], [0], [1], [0, 0, 1, 1], [], []>} : vector<128x54xbf16>, vector<54x32xbf16>, vector<128x32xf32> -> vector<128x32xf32>
      %c0_55 = arith.constant 0 : index
      %c0_56 = arith.constant 0 : index
      %205 = vector.load %arg4[%c0_55, %c0_56] : memref<1x32xf32, #tpu.memory_space<vmem>>, vector<1x32xf32>
      %206 = vector.broadcast %205 : vector<1x32xf32> to vector<128x32xf32>
      %207 = arith.addf %204, %206 : vector<128x32xf32>
      %cst_57 = arith.constant 0.000000e+00 : f32
      %208 = vector.broadcast %cst_57 : f32 to vector<128x32xf32>
      %209 = arith.maximumf %207, %208 : vector<128x32xf32>
      %c0_58 = arith.constant 0 : index
      %c0_59 = arith.constant 0 : index
      %210 = vector.load %arg16[%c0_58, %c0_59] : memref<128x32xf32, #tpu.memory_space<vmem>>, vector<128x32xf32>
      tpu.vector_store %arg16[%c0_58, %c0_59], %209 {strides = array<i32>} : memref<128x32xf32, #tpu.memory_space<vmem>>, vector<128x32xf32>,
    } else {
    }
    %c0_2 = arith.constant 0 : index
    %c0_3 = arith.constant 0 : index
    %4 = vector.load %arg16[%c0_2, %c0_3] : memref<128x32xf32, #tpu.memory_space<vmem>>, vector<128x32xf32>
    %c0_4 = arith.constant 0 : index
    %c0_5 = arith.constant 0 : index
    %c0_6 = arith.constant 0 : index
    %5 = vector.load %arg5[%c0_4, %c0_5, %c0_6] : memref<1x288x32xbf16, #tpu.memory_space<vmem>>, vector<1x288x32xbf16>
    %6 = vector.shape_cast %5 : vector<1x288x32xbf16> to vector<288x32xbf16>
    %c0_7 = arith.constant 0 : index
    %c0_8 = arith.constant 0 : index
    %c0_9 = arith.constant 0 : index
    %7 = vector.load %arg6[%c0_7, %c0_8, %c0_9] : memref<1x1x32xf32, #tpu.memory_space<vmem>>, vector<1x1x32xf32>
    %8 = vector.shape_cast %7 : vector<1x1x32xf32> to vector<1x32xf32>
    %9 = vector.extract_strided_slice %4 {offsets = [119, 0], sizes = [9, 32], strides = [1, 1]} : vector<128x32xf32> to vector<9x32xf32>
    %10 = vector.extract_strided_slice %4 {offsets = [0, 0], sizes = [119, 32], strides = [1, 1]} : vector<128x32xf32> to vector<119x32xf32>
    %11 = tpu.concatenate %9, %10 in 0 : vector<9x32xf32>, vector<119x32xf32> -> vector<128x32xf32>
    %12 = vector.extract_strided_slice %0 {offsets = [0, 0], sizes = [128, 1], strides = [1, 1]} : vector<128x9xf32> to vector<128x1xf32>
    %13 = vector.broadcast %12 : vector<128x1xf32> to vector<128x32xf32>
    %14 = arith.mulf %11, %13 : vector<128x32xf32>
    %15 = vector.extract_strided_slice %4 {offsets = [120, 0], sizes = [8, 32], strides = [1, 1]} : vector<128x32xf32> to vector<8x32xf32>
    %16 = vector.extract_strided_slice %4 {offsets = [0, 0], sizes = [120, 32], strides = [1, 1]} : vector<128x32xf32> to vector<120x32xf32>
    %17 = tpu.concatenate %15, %16 in 0 : vector<8x32xf32>, vector<120x32xf32> -> vector<128x32xf32>
    %18 = vector.extract_strided_slice %0 {offsets = [0, 1], sizes = [128, 1], strides = [1, 1]} : vector<128x9xf32> to vector<128x1xf32>
    %19 = vector.broadcast %18 : vector<128x1xf32> to vector<128x32xf32>
    %20 = arith.mulf %17, %19 : vector<128x32xf32>
    %21 = vector.extract_strided_slice %4 {offsets = [121, 0], sizes = [7, 32], strides = [1, 1]} : vector<128x32xf32> to vector<7x32xf32>
    %22 = vector.extract_strided_slice %4 {offsets = [0, 0], sizes = [121, 32], strides = [1, 1]} : vector<128x32xf32> to vector<121x32xf32>
    %23 = tpu.concatenate %21, %22 in 0 : vector<7x32xf32>, vector<121x32xf32> -> vector<128x32xf32>
    %24 = vector.extract_strided_slice %0 {offsets = [0, 2], sizes = [128, 1], strides = [1, 1]} : vector<128x9xf32> to vector<128x1xf32>
    %25 = vector.broadcast %24 : vector<128x1xf32> to vector<128x32xf32>
    %26 = arith.mulf %23, %25 : vector<128x32xf32>
    %27 = vector.extract_strided_slice %4 {offsets = [127, 0], sizes = [1, 32], strides = [1, 1]} : vector<128x32xf32> to vector<1x32xf32>
    %28 = vector.extract_strided_slice %4 {offsets = [0, 0], sizes = [127, 32], strides = [1, 1]} : vector<128x32xf32> to vector<127x32xf32>
    %29 = tpu.concatenate %27, %28 in 0 : vector<1x32xf32>, vector<127x32xf32> -> vector<128x32xf32>
    %30 = vector.extract_strided_slice %0 {offsets = [0, 3], sizes = [128, 1], strides = [1, 1]} : vector<128x9xf32> to vector<128x1xf32>
    %31 = vector.broadcast %30 : vector<128x1xf32> to vector<128x32xf32>
    %32 = arith.mulf %29, %31 : vector<128x32xf32>
    %33 = vector.extract_strided_slice %0 {offsets = [0, 4], sizes = [128, 1], strides = [1, 1]} : vector<128x9xf32> to vector<128x1xf32>
    %34 = vector.broadcast %33 : vector<128x1xf32> to vector<128x32xf32>
    %35 = arith.mulf %4, %34 : vector<128x32xf32>
    %36 = vector.extract_strided_slice %4 {offsets = [1, 0], sizes = [127, 32], strides = [1, 1]} : vector<128x32xf32> to vector<127x32xf32>
    %37 = vector.extract_strided_slice %4 {offsets = [0, 0], sizes = [1, 32], strides = [1, 1]} : vector<128x32xf32> to vector<1x32xf32>
    %38 = tpu.concatenate %36, %37 in 0 : vector<127x32xf32>, vector<1x32xf32> -> vector<128x32xf32>
    %39 = vector.extract_strided_slice %0 {offsets = [0, 5], sizes = [128, 1], strides = [1, 1]} : vector<128x9xf32> to vector<128x1xf32>
    %40 = vector.broadcast %39 : vector<128x1xf32> to vector<128x32xf32>
    %41 = arith.mulf %38, %40 : vector<128x32xf32>
    %42 = vector.extract_strided_slice %4 {offsets = [7, 0], sizes = [121, 32], strides = [1, 1]} : vector<128x32xf32> to vector<121x32xf32>
    %43 = vector.extract_strided_slice %4 {offsets = [0, 0], sizes = [7, 32], strides = [1, 1]} : vector<128x32xf32> to vector<7x32xf32>
    %44 = tpu.concatenate %42, %43 in 0 : vector<121x32xf32>, vector<7x32xf32> -> vector<128x32xf32>
    %45 = vector.extract_strided_slice %0 {offsets = [0, 6], sizes = [128, 1], strides = [1, 1]} : vector<128x9xf32> to vector<128x1xf32>
    %46 = vector.broadcast %45 : vector<128x1xf32> to vector<128x32xf32>
    %47 = arith.mulf %44, %46 : vector<128x32xf32>
    %48 = vector.extract_strided_slice %4 {offsets = [8, 0], sizes = [120, 32], strides = [1, 1]} : vector<128x32xf32> to vector<120x32xf32>
    %49 = vector.extract_strided_slice %4 {offsets = [0, 0], sizes = [8, 32], strides = [1, 1]} : vector<128x32xf32> to vector<8x32xf32>
    %50 = tpu.concatenate %48, %49 in 0 : vector<120x32xf32>, vector<8x32xf32> -> vector<128x32xf32>
    %51 = vector.extract_strided_slice %0 {offsets = [0, 7], sizes = [128, 1], strides = [1, 1]} : vector<128x9xf32> to vector<128x1xf32>
    %52 = vector.broadcast %51 : vector<128x1xf32> to vector<128x32xf32>
    %53 = arith.mulf %50, %52 : vector<128x32xf32>
    %54 = vector.extract_strided_slice %4 {offsets = [9, 0], sizes = [119, 32], strides = [1, 1]} : vector<128x32xf32> to vector<119x32xf32>
    %55 = vector.extract_strided_slice %4 {offsets = [0, 0], sizes = [9, 32], strides = [1, 1]} : vector<128x32xf32> to vector<9x32xf32>
    %56 = tpu.concatenate %54, %55 in 0 : vector<119x32xf32>, vector<9x32xf32> -> vector<128x32xf32>
    %57 = vector.extract_strided_slice %0 {offsets = [0, 8], sizes = [128, 1], strides = [1, 1]} : vector<128x9xf32> to vector<128x1xf32>
    %58 = vector.broadcast %57 : vector<128x1xf32> to vector<128x32xf32>
    %59 = arith.mulf %56, %58 : vector<128x32xf32>
    %60 = tpu.concatenate %14, %20, %26, %32, %35, %41, %47, %53, %59 in 1 : vector<128x32xf32>, vector<128x32xf32>, vector<128x32xf32>, vector<128x32xf32>, vector<128x32xf32>, vector<128x32xf32>, vector<128x32xf32>, vector<128x32xf32>, vector<128x32xf32> -> vector<128x288xf32>
    %61 = arith.truncf %60 : vector<128x288xf32> to vector<128x288xbf16>
    %cst = arith.constant dense<0.000000e+00> : vector<128x32xf32>
    %62 = tpu.matmul %61, %6, %cst {dimension_numbers = #tpu.dot_dimension_numbers<[1], [0], [0], [1], [0, 0, 1, 1], [], []>} : vector<128x288xbf16>, vector<288x32xbf16>, vector<128x32xf32> -> vector<128x32xf32>
    %63 = vector.broadcast %8 : vector<1x32xf32> to vector<128x32xf32>
    %64 = arith.addf %62, %63 : vector<128x32xf32>
    %c0_10 = arith.constant 0 : index
    %c0_11 = arith.constant 0 : index
    %c0_12 = arith.constant 0 : index
    %65 = vector.load %arg7[%c0_10, %c0_11, %c0_12] : memref<1x1x32xf32, #tpu.memory_space<vmem>>, vector<1x1x32xf32>
    %66 = vector.shape_cast %65 : vector<1x1x32xf32> to vector<1x32xf32>
    %c0_13 = arith.constant 0 : index
    %c0_14 = arith.constant 0 : index
    %c0_15 = arith.constant 0 : index
    %67 = vector.load %arg8[%c0_13, %c0_14, %c0_15] : memref<1x1x32xf32, #tpu.memory_space<vmem>>, vector<1x1x32xf32>
    %68 = vector.shape_cast %67 : vector<1x1x32xf32> to vector<1x32xf32>
    %cst_16 = arith.constant dense<0.000000e+00> : vector<32xf32>
    %69 = vector.multi_reduction <add>, %64, %cst_16 [0] : vector<128x32xf32> to vector<32xf32>
    %70 = vector.shape_cast %69 : vector<32xf32> to vector<1x32xf32>
    %cst_17 = arith.constant 1.280000e+02 : f32
    %71 = vector.broadcast %cst_17 : f32 to vector<1x32xf32>
    %72 = arith.divf %70, %71 : vector<1x32xf32>
    %73 = vector.broadcast %72 : vector<1x32xf32> to vector<128x32xf32>
    %74 = arith.subf %64, %73 : vector<128x32xf32>
    %75 = arith.mulf %74, %74 : vector<128x32xf32>
    %cst_18 = arith.constant dense<0.000000e+00> : vector<32xf32>
    %76 = vector.multi_reduction <add>, %75, %cst_18 [0] : vector<128x32xf32> to vector<32xf32>
    %77 = vector.shape_cast %76 : vector<32xf32> to vector<1x32xf32>
    %cst_19 = arith.constant 1.280000e+02 : f32
    %78 = vector.broadcast %cst_19 : f32 to vector<1x32xf32>
    %79 = arith.divf %77, %78 : vector<1x32xf32>
    %80 = vector.broadcast %72 : vector<1x32xf32> to vector<128x32xf32>
    %81 = arith.subf %64, %80 : vector<128x32xf32>
    %cst_20 = arith.constant 9.99999974E-6 : f32
    %82 = vector.broadcast %cst_20 : f32 to vector<1x32xf32>
    %83 = arith.addf %79, %82 : vector<1x32xf32>
    %84 = math.rsqrt %83 : vector<1x32xf32>
    %85 = vector.broadcast %84 : vector<1x32xf32> to vector<128x32xf32>
    %86 = arith.mulf %81, %85 : vector<128x32xf32>
    %87 = vector.broadcast %66 : vector<1x32xf32> to vector<128x32xf32>
    %88 = arith.mulf %86, %87 : vector<128x32xf32>
    %89 = vector.broadcast %68 : vector<1x32xf32> to vector<128x32xf32>
    %90 = arith.addf %88, %89 : vector<128x32xf32>
    %cst_21 = arith.constant 0.000000e+00 : f32
    %91 = vector.broadcast %cst_21 : f32 to vector<128x32xf32>
    %92 = arith.cmpf ogt, %90, %91 : vector<128x32xf32>
    %93 = math.exp %90 : vector<128x32xf32>
    %cst_22 = arith.constant 1.000000e+00 : f32
    %94 = vector.broadcast %cst_22 : f32 to vector<128x32xf32>
    %95 = arith.subf %93, %94 : vector<128x32xf32>
    %cst_23 = arith.constant 1.67326319 : f32
    %96 = vector.broadcast %cst_23 : f32 to vector<128x32xf32>
    %97 = arith.mulf %96, %95 : vector<128x32xf32>
    %98 = arith.select %92, %90, %97 : vector<128x32xi1>, vector<128x32xf32>
    %cst_24 = arith.constant 1.05070102 : f32
    %99 = vector.broadcast %cst_24 : f32 to vector<128x32xf32>
    %100 = arith.mulf %99, %98 : vector<128x32xf32>
    %c0_25 = arith.constant 0 : index
    %c0_26 = arith.constant 0 : index
    %c0_27 = arith.constant 0 : index
    %101 = vector.load %arg9[%c0_25, %c0_26, %c0_27] : memref<1x288x32xbf16, #tpu.memory_space<vmem>>, vector<1x288x32xbf16>
    %102 = vector.shape_cast %101 : vector<1x288x32xbf16> to vector<288x32xbf16>
    %c0_28 = arith.constant 0 : index
    %c0_29 = arith.constant 0 : index
    %c0_30 = arith.constant 0 : index
    %103 = vector.load %arg10[%c0_28, %c0_29, %c0_30] : memref<1x1x32xf32, #tpu.memory_space<vmem>>, vector<1x1x32xf32>
    %104 = vector.shape_cast %103 : vector<1x1x32xf32> to vector<1x32xf32>
    %105 = vector.extract_strided_slice %100 {offsets = [119, 0], sizes = [9, 32], strides = [1, 1]} : vector<128x32xf32> to vector<9x32xf32>
    %106 = vector.extract_strided_slice %100 {offsets = [0, 0], sizes = [119, 32], strides = [1, 1]} : vector<128x32xf32> to vector<119x32xf32>
    %107 = tpu.concatenate %105, %106 in 0 : vector<9x32xf32>, vector<119x32xf32> -> vector<128x32xf32>
    %108 = vector.extract_strided_slice %0 {offsets = [0, 0], sizes = [128, 1], strides = [1, 1]} : vector<128x9xf32> to vector<128x1xf32>
    %109 = vector.broadcast %108 : vector<128x1xf32> to vector<128x32xf32>
    %110 = arith.mulf %107, %109 : vector<128x32xf32>
    %111 = vector.extract_strided_slice %100 {offsets = [120, 0], sizes = [8, 32], strides = [1, 1]} : vector<128x32xf32> to vector<8x32xf32>
    %112 = vector.extract_strided_slice %100 {offsets = [0, 0], sizes = [120, 32], strides = [1, 1]} : vector<128x32xf32> to vector<120x32xf32>
    %113 = tpu.concatenate %111, %112 in 0 : vector<8x32xf32>, vector<120x32xf32> -> vector<128x32xf32>
    %114 = vector.extract_strided_slice %0 {offsets = [0, 1], sizes = [128, 1], strides = [1, 1]} : vector<128x9xf32> to vector<128x1xf32>
    %115 = vector.broadcast %114 : vector<128x1xf32> to vector<128x32xf32>
    %116 = arith.mulf %113, %115 : vector<128x32xf32>
    %117 = vector.extract_strided_slice %100 {offsets = [121, 0], sizes = [7, 32], strides = [1, 1]} : vector<128x32xf32> to vector<7x32xf32>
    %118 = vector.extract_strided_slice %100 {offsets = [0, 0], sizes = [121, 32], strides = [1, 1]} : vector<128x32xf32> to vector<121x32xf32>
    %119 = tpu.concatenate %117, %118 in 0 : vector<7x32xf32>, vector<121x32xf32> -> vector<128x32xf32>
    %120 = vector.extract_strided_slice %0 {offsets = [0, 2], sizes = [128, 1], strides = [1, 1]} : vector<128x9xf32> to vector<128x1xf32>
    %121 = vector.broadcast %120 : vector<128x1xf32> to vector<128x32xf32>
    %122 = arith.mulf %119, %121 : vector<128x32xf32>
    %123 = vector.extract_strided_slice %100 {offsets = [127, 0], sizes = [1, 32], strides = [1, 1]} : vector<128x32xf32> to vector<1x32xf32>
    %124 = vector.extract_strided_slice %100 {offsets = [0, 0], sizes = [127, 32], strides = [1, 1]} : vector<128x32xf32> to vector<127x32xf32>
    %125 = tpu.concatenate %123, %124 in 0 : vector<1x32xf32>, vector<127x32xf32> -> vector<128x32xf32>
    %126 = vector.extract_strided_slice %0 {offsets = [0, 3], sizes = [128, 1], strides = [1, 1]} : vector<128x9xf32> to vector<128x1xf32>
    %127 = vector.broadcast %126 : vector<128x1xf32> to vector<128x32xf32>
    %128 = arith.mulf %125, %127 : vector<128x32xf32>
    %129 = vector.extract_strided_slice %0 {offsets = [0, 4], sizes = [128, 1], strides = [1, 1]} : vector<128x9xf32> to vector<128x1xf32>
    %130 = vector.broadcast %129 : vector<128x1xf32> to vector<128x32xf32>
    %131 = arith.mulf %100, %130 : vector<128x32xf32>
    %132 = vector.extract_strided_slice %100 {offsets = [1, 0], sizes = [127, 32], strides = [1, 1]} : vector<128x32xf32> to vector<127x32xf32>
    %133 = vector.extract_strided_slice %100 {offsets = [0, 0], sizes = [1, 32], strides = [1, 1]} : vector<128x32xf32> to vector<1x32xf32>
    %134 = tpu.concatenate %132, %133 in 0 : vector<127x32xf32>, vector<1x32xf32> -> vector<128x32xf32>
    %135 = vector.extract_strided_slice %0 {offsets = [0, 5], sizes = [128, 1], strides = [1, 1]} : vector<128x9xf32> to vector<128x1xf32>
    %136 = vector.broadcast %135 : vector<128x1xf32> to vector<128x32xf32>
    %137 = arith.mulf %134, %136 : vector<128x32xf32>
    %138 = vector.extract_strided_slice %100 {offsets = [7, 0], sizes = [121, 32], strides = [1, 1]} : vector<128x32xf32> to vector<121x32xf32>
    %139 = vector.extract_strided_slice %100 {offsets = [0, 0], sizes = [7, 32], strides = [1, 1]} : vector<128x32xf32> to vector<7x32xf32>
    %140 = tpu.concatenate %138, %139 in 0 : vector<121x32xf32>, vector<7x32xf32> -> vector<128x32xf32>
    %141 = vector.extract_strided_slice %0 {offsets = [0, 6], sizes = [128, 1], strides = [1, 1]} : vector<128x9xf32> to vector<128x1xf32>
    %142 = vector.broadcast %141 : vector<128x1xf32> to vector<128x32xf32>
    %143 = arith.mulf %140, %142 : vector<128x32xf32>
    %144 = vector.extract_strided_slice %100 {offsets = [8, 0], sizes = [120, 32], strides = [1, 1]} : vector<128x32xf32> to vector<120x32xf32>
    %145 = vector.extract_strided_slice %100 {offsets = [0, 0], sizes = [8, 32], strides = [1, 1]} : vector<128x32xf32> to vector<8x32xf32>
    %146 = tpu.concatenate %144, %145 in 0 : vector<120x32xf32>, vector<8x32xf32> -> vector<128x32xf32>
    %147 = vector.extract_strided_slice %0 {offsets = [0, 7], sizes = [128, 1], strides = [1, 1]} : vector<128x9xf32> to vector<128x1xf32>
    %148 = vector.broadcast %147 : vector<128x1xf32> to vector<128x32xf32>
    %149 = arith.mulf %146, %148 : vector<128x32xf32>
    %150 = vector.extract_strided_slice %100 {offsets = [9, 0], sizes = [119, 32], strides = [1, 1]} : vector<128x32xf32> to vector<119x32xf32>
    %151 = vector.extract_strided_slice %100 {offsets = [0, 0], sizes = [9, 32], strides = [1, 1]} : vector<128x32xf32> to vector<9x32xf32>
    %152 = tpu.concatenate %150, %151 in 0 : vector<119x32xf32>, vector<9x32xf32> -> vector<128x32xf32>
    %153 = vector.extract_strided_slice %0 {offsets = [0, 8], sizes = [128, 1], strides = [1, 1]} : vector<128x9xf32> to vector<128x1xf32>
    %154 = vector.broadcast %153 : vector<128x1xf32> to vector<128x32xf32>
    %155 = arith.mulf %152, %154 : vector<128x32xf32>
    %156 = tpu.concatenate %110, %116, %122, %128, %131, %137, %143, %149, %155 in 1 : vector<128x32xf32>, vector<128x32xf32>, vector<128x32xf32>, vector<128x32xf32>, vector<128x32xf32>, vector<128x32xf32>, vector<128x32xf32>, vector<128x32xf32>, vector<128x32xf32> -> vector<128x288xf32>
    %157 = arith.truncf %156 : vector<128x288xf32> to vector<128x288xbf16>
    %cst_31 = arith.constant dense<0.000000e+00> : vector<128x32xf32>
    %158 = tpu.matmul %157, %102, %cst_31 {dimension_numbers = #tpu.dot_dimension_numbers<[1], [0], [0], [1], [0, 0, 1, 1], [], []>} : vector<128x288xbf16>, vector<288x32xbf16>, vector<128x32xf32> -> vector<128x32xf32>
    %159 = vector.broadcast %104 : vector<1x32xf32> to vector<128x32xf32>
    %160 = arith.addf %158, %159 : vector<128x32xf32>
    %c0_32 = arith.constant 0 : index
    %c0_33 = arith.constant 0 : index
    %c0_34 = arith.constant 0 : index
    %161 = vector.load %arg11[%c0_32, %c0_33, %c0_34] : memref<1x1x32xf32, #tpu.memory_space<vmem>>, vector<1x1x32xf32>
    %162 = vector.shape_cast %161 : vector<1x1x32xf32> to vector<1x32xf32>
    %c0_35 = arith.constant 0 : index
    %c0_36 = arith.constant 0 : index
    %c0_37 = arith.constant 0 : index
    %163 = vector.load %arg12[%c0_35, %c0_36, %c0_37] : memref<1x1x32xf32, #tpu.memory_space<vmem>>, vector<1x1x32xf32>
    %164 = vector.shape_cast %163 : vector<1x1x32xf32> to vector<1x32xf32>
    %cst_38 = arith.constant dense<0.000000e+00> : vector<32xf32>
    %165 = vector.multi_reduction <add>, %160, %cst_38 [0] : vector<128x32xf32> to vector<32xf32>
    %166 = vector.shape_cast %165 : vector<32xf32> to vector<1x32xf32>
    %cst_39 = arith.constant 1.280000e+02 : f32
    %167 = vector.broadcast %cst_39 : f32 to vector<1x32xf32>
    %168 = arith.divf %166, %167 : vector<1x32xf32>
    %169 = vector.broadcast %168 : vector<1x32xf32> to vector<128x32xf32>
    %170 = arith.subf %160, %169 : vector<128x32xf32>
    %171 = arith.mulf %170, %170 : vector<128x32xf32>
    %cst_40 = arith.constant dense<0.000000e+00> : vector<32xf32>
    %172 = vector.multi_reduction <add>, %171, %cst_40 [0] : vector<128x32xf32> to vector<32xf32>
    %173 = vector.shape_cast %172 : vector<32xf32> to vector<1x32xf32>
    %cst_41 = arith.constant 1.280000e+02 : f32
    %174 = vector.broadcast %cst_41 : f32 to vector<1x32xf32>
    %175 = arith.divf %173, %174 : vector<1x32xf32>
    %176 = vector.broadcast %168 : vector<1x32xf32> to vector<128x32xf32>
    %177 = arith.subf %160, %176 : vector<128x32xf32>
    %cst_42 = arith.constant 9.99999974E-6 : f32
    %178 = vector.broadcast %cst_42 : f32 to vector<1x32xf32>
    %179 = arith.addf %175, %178 : vector<1x32xf32>
    %180 = math.rsqrt %179 : vector<1x32xf32>
    %181 = vector.broadcast %180 : vector<1x32xf32> to vector<128x32xf32>
    %182 = arith.mulf %177, %181 : vector<128x32xf32>
    %183 = vector.broadcast %162 : vector<1x32xf32> to vector<128x32xf32>
    %184 = arith.mulf %182, %183 : vector<128x32xf32>
    %185 = vector.broadcast %164 : vector<1x32xf32> to vector<128x32xf32>
    %186 = arith.addf %184, %185 : vector<128x32xf32>
    %187 = arith.addf %186, %4 : vector<128x32xf32>
    %cst_43 = arith.constant 0.000000e+00 : f32
    %188 = vector.broadcast %cst_43 : f32 to vector<128x32xf32>
    %189 = arith.cmpf ogt, %187, %188 : vector<128x32xf32>
    %190 = math.exp %187 : vector<128x32xf32>
    %cst_44 = arith.constant 1.000000e+00 : f32
    %191 = vector.broadcast %cst_44 : f32 to vector<128x32xf32>
    %192 = arith.subf %190, %191 : vector<128x32xf32>
    %cst_45 = arith.constant 1.67326319 : f32
    %193 = vector.broadcast %cst_45 : f32 to vector<128x32xf32>
    %194 = arith.mulf %193, %192 : vector<128x32xf32>
    %195 = arith.select %189, %187, %194 : vector<128x32xi1>, vector<128x32xf32>
    %cst_46 = arith.constant 1.05070102 : f32
    %196 = vector.broadcast %cst_46 : f32 to vector<128x32xf32>
    %197 = arith.mulf %196, %195 : vector<128x32xf32>
    %c0_47 = arith.constant 0 : index
    %c0_48 = arith.constant 0 : index
    %198 = vector.load %arg16[%c0_47, %c0_48] : memref<128x32xf32, #tpu.memory_space<vmem>>, vector<128x32xf32>
    tpu.vector_store %arg16[%c0_47, %c0_48], %197 {strides = array<i32>} : memref<128x32xf32, #tpu.memory_space<vmem>>, vector<128x32xf32>,
    %c1_i32 = arith.constant 1 : i32
    %199 = arith.cmpi eq, %arg0, %c1_i32 : i32
    %200 = arith.extui %199 : i1 to i32
    %c0_i32_49 = arith.constant 0 : i32
    %201 = arith.cmpi ne, %200, %c0_i32_49 : i32
    scf.if %201 {
      %c0_50 = arith.constant 0 : index
      %c0_51 = arith.constant 0 : index
      %202 = vector.load %arg13[%c0_50, %c0_51] : memref<288x128xbf16, #tpu.memory_space<vmem>>, vector<288x128xbf16>
      %c0_52 = arith.constant 0 : index
      %c0_53 = arith.constant 0 : index
      %203 = vector.load %arg14[%c0_52, %c0_53] : memref<1x128xf32, #tpu.memory_space<vmem>>, vector<1x128xf32>
      %204 = vector.extract_strided_slice %197 {offsets = [119, 0], sizes = [9, 32], strides = [1, 1]} : vector<128x32xf32> to vector<9x32xf32>
      %205 = vector.extract_strided_slice %197 {offsets = [0, 0], sizes = [119, 32], strides = [1, 1]} : vector<128x32xf32> to vector<119x32xf32>
      %206 = tpu.concatenate %204, %205 in 0 : vector<9x32xf32>, vector<119x32xf32> -> vector<128x32xf32>
      %207 = vector.extract_strided_slice %0 {offsets = [0, 0], sizes = [128, 1], strides = [1, 1]} : vector<128x9xf32> to vector<128x1xf32>
      %208 = vector.broadcast %207 : vector<128x1xf32> to vector<128x32xf32>
      %209 = arith.mulf %206, %208 : vector<128x32xf32>
      %210 = vector.extract_strided_slice %197 {offsets = [120, 0], sizes = [8, 32], strides = [1, 1]} : vector<128x32xf32> to vector<8x32xf32>
      %211 = vector.extract_strided_slice %197 {offsets = [0, 0], sizes = [120, 32], strides = [1, 1]} : vector<128x32xf32> to vector<120x32xf32>
      %212 = tpu.concatenate %210, %211 in 0 : vector<8x32xf32>, vector<120x32xf32> -> vector<128x32xf32>
      %213 = vector.extract_strided_slice %0 {offsets = [0, 1], sizes = [128, 1], strides = [1, 1]} : vector<128x9xf32> to vector<128x1xf32>
      %214 = vector.broadcast %213 : vector<128x1xf32> to vector<128x32xf32>
      %215 = arith.mulf %212, %214 : vector<128x32xf32>
      %216 = vector.extract_strided_slice %197 {offsets = [121, 0], sizes = [7, 32], strides = [1, 1]} : vector<128x32xf32> to vector<7x32xf32>
      %217 = vector.extract_strided_slice %197 {offsets = [0, 0], sizes = [121, 32], strides = [1, 1]} : vector<128x32xf32> to vector<121x32xf32>
      %218 = tpu.concatenate %216, %217 in 0 : vector<7x32xf32>, vector<121x32xf32> -> vector<128x32xf32>
      %219 = vector.extract_strided_slice %0 {offsets = [0, 2], sizes = [128, 1], strides = [1, 1]} : vector<128x9xf32> to vector<128x1xf32>
      %220 = vector.broadcast %219 : vector<128x1xf32> to vector<128x32xf32>
      %221 = arith.mulf %218, %220 : vector<128x32xf32>
      %222 = vector.extract_strided_slice %197 {offsets = [127, 0], sizes = [1, 32], strides = [1, 1]} : vector<128x32xf32> to vector<1x32xf32>
      %223 = vector.extract_strided_slice %197 {offsets = [0, 0], sizes = [127, 32], strides = [1, 1]} : vector<128x32xf32> to vector<127x32xf32>
      %224 = tpu.concatenate %222, %223 in 0 : vector<1x32xf32>, vector<127x32xf32> -> vector<128x32xf32>
      %225 = vector.extract_strided_slice %0 {offsets = [0, 3], sizes = [128, 1], strides = [1, 1]} : vector<128x9xf32> to vector<128x1xf32>
      %226 = vector.broadcast %225 : vector<128x1xf32> to vector<128x32xf32>
      %227 = arith.mulf %224, %226 : vector<128x32xf32>
      %228 = vector.extract_strided_slice %0 {offsets = [0, 4], sizes = [128, 1], strides = [1, 1]} : vector<128x9xf32> to vector<128x1xf32>
      %229 = vector.broadcast %228 : vector<128x1xf32> to vector<128x32xf32>
      %230 = arith.mulf %197, %229 : vector<128x32xf32>
      %231 = vector.extract_strided_slice %197 {offsets = [1, 0], sizes = [127, 32], strides = [1, 1]} : vector<128x32xf32> to vector<127x32xf32>
      %232 = vector.extract_strided_slice %197 {offsets = [0, 0], sizes = [1, 32], strides = [1, 1]} : vector<128x32xf32> to vector<1x32xf32>
      %233 = tpu.concatenate %231, %232 in 0 : vector<127x32xf32>, vector<1x32xf32> -> vector<128x32xf32>
      %234 = vector.extract_strided_slice %0 {offsets = [0, 5], sizes = [128, 1], strides = [1, 1]} : vector<128x9xf32> to vector<128x1xf32>
      %235 = vector.broadcast %234 : vector<128x1xf32> to vector<128x32xf32>
      %236 = arith.mulf %233, %235 : vector<128x32xf32>
      %237 = vector.extract_strided_slice %197 {offsets = [7, 0], sizes = [121, 32], strides = [1, 1]} : vector<128x32xf32> to vector<121x32xf32>
      %238 = vector.extract_strided_slice %197 {offsets = [0, 0], sizes = [7, 32], strides = [1, 1]} : vector<128x32xf32> to vector<7x32xf32>
      %239 = tpu.concatenate %237, %238 in 0 : vector<121x32xf32>, vector<7x32xf32> -> vector<128x32xf32>
      %240 = vector.extract_strided_slice %0 {offsets = [0, 6], sizes = [128, 1], strides = [1, 1]} : vector<128x9xf32> to vector<128x1xf32>
      %241 = vector.broadcast %240 : vector<128x1xf32> to vector<128x32xf32>
      %242 = arith.mulf %239, %241 : vector<128x32xf32>
      %243 = vector.extract_strided_slice %197 {offsets = [8, 0], sizes = [120, 32], strides = [1, 1]} : vector<128x32xf32> to vector<120x32xf32>
      %244 = vector.extract_strided_slice %197 {offsets = [0, 0], sizes = [8, 32], strides = [1, 1]} : vector<128x32xf32> to vector<8x32xf32>
      %245 = tpu.concatenate %243, %244 in 0 : vector<120x32xf32>, vector<8x32xf32> -> vector<128x32xf32>
      %246 = vector.extract_strided_slice %0 {offsets = [0, 7], sizes = [128, 1], strides = [1, 1]} : vector<128x9xf32> to vector<128x1xf32>
      %247 = vector.broadcast %246 : vector<128x1xf32> to vector<128x32xf32>
      %248 = arith.mulf %245, %247 : vector<128x32xf32>
      %249 = vector.extract_strided_slice %197 {offsets = [9, 0], sizes = [119, 32], strides = [1, 1]} : vector<128x32xf32> to vector<119x32xf32>
      %250 = vector.extract_strided_slice %197 {offsets = [0, 0], sizes = [9, 32], strides = [1, 1]} : vector<128x32xf32> to vector<9x32xf32>
      %251 = tpu.concatenate %249, %250 in 0 : vector<119x32xf32>, vector<9x32xf32> -> vector<128x32xf32>
      %252 = vector.extract_strided_slice %0 {offsets = [0, 8], sizes = [128, 1], strides = [1, 1]} : vector<128x9xf32> to vector<128x1xf32>
      %253 = vector.broadcast %252 : vector<128x1xf32> to vector<128x32xf32>
      %254 = arith.mulf %251, %253 : vector<128x32xf32>
      %255 = tpu.concatenate %209, %215, %221, %227, %230, %236, %242, %248, %254 in 1 : vector<128x32xf32>, vector<128x32xf32>, vector<128x32xf32>, vector<128x32xf32>, vector<128x32xf32>, vector<128x32xf32>, vector<128x32xf32>, vector<128x32xf32>, vector<128x32xf32> -> vector<128x288xf32>
      %256 = arith.truncf %255 : vector<128x288xf32> to vector<128x288xbf16>
      %cst_54 = arith.constant dense<0.000000e+00> : vector<128x128xf32>
      %257 = tpu.matmul %256, %202, %cst_54 {dimension_numbers = #tpu.dot_dimension_numbers<[1], [0], [0], [1], [0, 0, 1, 1], [], []>} : vector<128x288xbf16>, vector<288x128xbf16>, vector<128x128xf32> -> vector<128x128xf32>
      %258 = vector.broadcast %203 : vector<1x128xf32> to vector<128x128xf32>
      %259 = arith.addf %257, %258 : vector<128x128xf32>
      %c0_55 = arith.constant 0 : index
      %c0_56 = arith.constant 0 : index
      %260 = vector.load %arg15[%c0_55, %c0_56] : memref<128x128xf32, #tpu.memory_space<vmem>>, vector<128x128xf32>
      tpu.vector_store %arg15[%c0_55, %c0_56], %259 {strides = array<i32>} : memref<128x128xf32, #tpu.memory_space<vmem>>, vector<128x128xf32>,
    } else {
    }
    return
  }
  func.func @transform_0(%arg0: i32) -> (i32, i32) {
    %c0_i32 = arith.constant 0 : i32
    %c0_i32_0 = arith.constant 0 : i32
    %c0_i32_1 = arith.constant 0 : i32
    return %c0_i32, %c0_i32_0 : i32, i32
  }
  func.func @transform_1(%arg0: i32) -> (i32, i32) {
    %c0_i32 = arith.constant 0 : i32
    %c0_i32_0 = arith.constant 0 : i32
    %c0_i32_1 = arith.constant 0 : i32
    return %c0_i32, %c0_i32_0 : i32, i32
  }
  func.func @transform_2(%arg0: i32) -> (i32, i32) {
    %c0_i32 = arith.constant 0 : i32
    %c0_i32_0 = arith.constant 0 : i32
    %c0_i32_1 = arith.constant 0 : i32
    return %c0_i32, %c0_i32_0 : i32, i32
  }
  func.func @transform_3(%arg0: i32) -> (i32, i32) {
    %c0_i32 = arith.constant 0 : i32
    %c0_i32_0 = arith.constant 0 : i32
    %c0_i32_1 = arith.constant 0 : i32
    return %c0_i32, %c0_i32_0 : i32, i32
  }
  func.func @transform_4(%arg0: i32) -> (i32, i32, i32) {
    %c0_i32 = arith.constant 0 : i32
    %c0_i32_0 = arith.constant 0 : i32
    %c0_i32_1 = arith.constant 0 : i32
    return %arg0, %c0_i32, %c0_i32_0 : i32, i32, i32
  }
  func.func @transform_5(%arg0: i32) -> (i32, i32, i32) {
    %c0_i32 = arith.constant 0 : i32
    %c0_i32_0 = arith.constant 0 : i32
    %c0_i32_1 = arith.constant 0 : i32
    return %arg0, %c0_i32, %c0_i32_0 : i32, i32, i32
  }
  func.func @transform_6(%arg0: i32) -> (i32, i32, i32) {
    %c0_i32 = arith.constant 0 : i32
    %c0_i32_0 = arith.constant 0 : i32
    %c0_i32_1 = arith.constant 0 : i32
    return %arg0, %c0_i32, %c0_i32_0 : i32, i32, i32
  }
  func.func @transform_7(%arg0: i32) -> (i32, i32, i32) {
    %c0_i32 = arith.constant 0 : i32
    %c0_i32_0 = arith.constant 0 : i32
    %c0_i32_1 = arith.constant 0 : i32
    return %arg0, %c0_i32, %c0_i32_0 : i32, i32, i32
  }
  func.func @transform_8(%arg0: i32) -> (i32, i32, i32) {
    %c0_i32 = arith.constant 0 : i32
    %c0_i32_0 = arith.constant 0 : i32
    %c0_i32_1 = arith.constant 0 : i32
    return %arg0, %c0_i32, %c0_i32_0 : i32, i32, i32
  }
  func.func @transform_9(%arg0: i32) -> (i32, i32, i32) {
    %c0_i32 = arith.constant 0 : i32
    %c0_i32_0 = arith.constant 0 : i32
    %c0_i32_1 = arith.constant 0 : i32
    return %arg0, %c0_i32, %c0_i32_0 : i32, i32, i32
  }
  func.func @transform_10(%arg0: i32) -> (i32, i32, i32) {
    %c0_i32 = arith.constant 0 : i32
    %c0_i32_0 = arith.constant 0 : i32
    %c0_i32_1 = arith.constant 0 : i32
    return %arg0, %c0_i32, %c0_i32_0 : i32, i32, i32
  }
  func.func @transform_11(%arg0: i32) -> (i32, i32, i32) {
    %c0_i32 = arith.constant 0 : i32
    %c0_i32_0 = arith.constant 0 : i32
    %c0_i32_1 = arith.constant 0 : i32
    return %arg0, %c0_i32, %c0_i32_0 : i32, i32, i32
  }
  func.func @transform_12(%arg0: i32) -> (i32, i32) {
    %c0_i32 = arith.constant 0 : i32
    %c0_i32_0 = arith.constant 0 : i32
    %c0_i32_1 = arith.constant 0 : i32
    return %c0_i32, %c0_i32_0 : i32, i32
  }
  func.func @transform_13(%arg0: i32) -> (i32, i32) {
    %c0_i32 = arith.constant 0 : i32
    %c0_i32_0 = arith.constant 0 : i32
    %c0_i32_1 = arith.constant 0 : i32
    return %c0_i32, %c0_i32_0 : i32, i32
  }
  func.func @transform_14(%arg0: i32) -> (i32, i32) {
    %c0_i32 = arith.constant 0 : i32
    %c0_i32_0 = arith.constant 0 : i32
    %c0_i32_1 = arith.constant 0 : i32
    return %c0_i32, %c0_i32_0 : i32, i32
  }
}

</mosaic_0001>

<llo_original>
// kernel: _lambda_.1
$region0: #{_lambda_.1}
  #allocation0 [shape = 'u32[]', space=smem, size = 0x4, offset = 0x4, fixed_abs, tag = 'smem constant byte address 0x4 - core index']
  #allocation1 [shape = 'u32[72,128]{1,0:T(1,128)}', space=vmem, size = 0x9000, scoped, tag = 'internal scratch']
  #allocation2 [shape = 'f32[128,32]{1,0:T(8,128)}', space=vmem, size = 0x10000, scoped, tag = 'scratch operand']
  %s0 = inlined_call_operand.vmem [shape: f32[128,9], index: 0, kind: input, shape index: {}]
  %s1 = inlined_call_operand.vmem [shape: bf16[128,54], index: 1, kind: input, shape index: {}]
  %s2 = inlined_call_operand.vmem [shape: bf16[54,32], index: 2, kind: input, shape index: {}]
  %s3 = inlined_call_operand.vmem [shape: f32[1,32], index: 3, kind: input, shape index: {}]
  %s4 = inlined_call_operand.vmem [shape: bf16[2,288,32], index: 4, kind: input, shape index: {}]
  %s5 = inlined_call_operand.vmem [shape: f32[2,1,32], index: 5, kind: input, shape index: {}]
  %s6 = inlined_call_operand.vmem [shape: f32[2,1,32], index: 6, kind: input, shape index: {}, may-alias: {6,10}]
  %s7 = inlined_call_operand.vmem [shape: f32[2,1,32], index: 7, kind: input, shape index: {}, may-alias: {7,11}]
  %s8 = inlined_call_operand.vmem [shape: bf16[2,288,32], index: 8, kind: input, shape index: {}]
  %s9 = inlined_call_operand.vmem [shape: f32[2,1,32], index: 9, kind: input, shape index: {}]
  %s10 = inlined_call_operand.vmem [shape: f32[2,1,32], index: 10, kind: input, shape index: {}, may-alias: {6,10}]
  %s11 = inlined_call_operand.vmem [shape: f32[2,1,32], index: 11, kind: input, shape index: {}, may-alias: {7,11}]
  %s12 = inlined_call_operand.vmem [shape: bf16[288,128], index: 12, kind: input, shape index: {}]
  %s13 = inlined_call_operand.vmem [shape: f32[1,128], index: 13, kind: input, shape index: {}]
  %s14 = inlined_call_operand.vmem [shape: f32[128,128], index: 14, kind: output, shape index: {}]
  %s15 = sld [smem:[#allocation0]]
  $region97: #{_lambda_.1} parent=0
    _
  %s17 = ssub.s32 1, %s15
  %s18 = scalar_select 0, %s17, %s15
  loop: start=0, step=1, limit=4
  $region2: #{_lambda_.1} parent=0 // loop_pre_header
    _
  $region3: #{_lambda_.1} parent=0 // loop_header
    %s20 = sphi 0, %s24
    %p21 = scmp.ge.s32.totalorder %s20, 4
    %s28 = sphi 0, %s28
    %s30 = sphi 0, %s28
    %s31 = sphi 0, %s30
    %s45 = sphi 0, %s31
    %s49 = sphi 0, %s49
    %s51 = sphi 0, %s49
    %s52 = sphi 0, %s51
    %s66 = sphi 0, %s52
    %s70 = sphi 0, %s70
    %s72 = sphi 0, %s70
    %s73 = sphi 0, %s72
    %s87 = sphi 0, %s73
    %s91 = sphi 0, %s91
    %s93 = sphi 0, %s91
    %s94 = sphi 0, %s93
    %s108 = sphi 0, %s94
    %s114 = sphi 0, %s116
    %s117 = sphi 0, %s114
    %s118 = sphi 0, %s117
    %s134 = sphi 0, %s118
    %s140 = sphi 0, %s142
    %s143 = sphi 0, %s140
    %s144 = sphi 0, %s143
    %s160 = sphi 0, %s144
    %s166 = sphi 0, %s168
    %s169 = sphi 0, %s166
    %s170 = sphi 0, %s169
    %s186 = sphi 0, %s170
    %s192 = sphi 0, %s194
    %s195 = sphi 0, %s192
    %s196 = sphi 0, %s195
    %s212 = sphi 0, %s196
    %s218 = sphi 0, %s220
    %s221 = sphi 0, %s218
    %s222 = sphi 0, %s221
    %s238 = sphi 0, %s222
    %s244 = sphi 0, %s246
    %s247 = sphi 0, %s244
    %s248 = sphi 0, %s247
    %s264 = sphi 0, %s248
    %s270 = sphi 0, %s272
    %s273 = sphi 0, %s270
    %s274 = sphi 0, %s273
    %s290 = sphi 0, %s274
    %s296 = sphi 0, %s298
    %s299 = sphi 0, %s296
    %s300 = sphi 0, %s299
    %s316 = sphi 0, %s300
    %s320 = sphi 0, %s320
    %s322 = sphi 0, %s320
    %s323 = sphi 0, %s322
    %s337 = sphi 0, %s323
    %s341 = sphi 0, %s341
    %s343 = sphi 0, %s341
    %s344 = sphi 0, %s343
    %s358 = sphi 0, %s344
    %s362 = sphi 0, %s362
    %s364 = sphi 0, %s362
    %s365 = sphi 0, %s364
    %s379 = sphi 0, %s365
  $region4: #{_lambda_.1} parent=0 // loop_header_branch
    %23 = sbr.rel (%p21) target = $region8
  $region5: #{_lambda_.1} parent=0 // loop_body
    %s25 = ssub.s32 %s20, 1
    %s26 = ssub.s32 %s20, 2
    %s27 = sadd.s32 %s20, 1
    %s29 = sadd.s32 %s28, 1
    %p32 = scmp.eq.s32.totalorder %s20, 1
    %p33 = scmp.ne.s32.totalorder %s28, %s30
    %p34 = scmp.eq.s32.totalorder %s20, 0
    %p35 = por %p33, %p34
    %p36 = scmp.ne.s32.totalorder %s28, %s30
    %p37 = scmp.eq.s32.totalorder %s25, 1
    %p38 = por %p36, %p37
    %p39 = scmp.ne.s32.totalorder %s30, %s31
    %p40 = scmp.eq.s32.totalorder %s25, 0
    %p41 = por %p39, %p40
    %p42 = scmp.ne.s32.totalorder %s30, %s31
    %p43 = scmp.eq.s32.totalorder %s26, 1
    %p44 = por %p42, %p43
    %p46 = scmp.ne.s32.totalorder %s31, %s45
    %p47 = scmp.eq.s32.totalorder %s26, 0
    %p48 = por %p46, %p47
    %s50 = sadd.s32 %s49, 1
    %p53 = scmp.eq.s32.totalorder %s20, 1
    %p54 = scmp.ne.s32.totalorder %s49, %s51
    %p55 = scmp.eq.s32.totalorder %s20, 0
    %p56 = por %p54, %p55
    %p57 = scmp.ne.s32.totalorder %s49, %s51
    %p58 = scmp.eq.s32.totalorder %s25, 1
    %p59 = por %p57, %p58
    %p60 = scmp.ne.s32.totalorder %s51, %s52
    %p61 = scmp.eq.s32.totalorder %s25, 0
    %p62 = por %p60, %p61
    %p63 = scmp.ne.s32.totalorder %s51, %s52
    %p64 = scmp.eq.s32.totalorder %s26, 1
    %p65 = por %p63, %p64
    %p67 = scmp.ne.s32.totalorder %s52, %s66
    %p68 = scmp.eq.s32.totalorder %s26, 0
    %p69 = por %p67, %p68
    %s71 = sadd.s32 %s70, 1
    %p74 = scmp.eq.s32.totalorder %s20, 1
    %p75 = scmp.ne.s32.totalorder %s70, %s72
    %p76 = scmp.eq.s32.totalorder %s20, 0
    %p77 = por %p75, %p76
    %p78 = scmp.ne.s32.totalorder %s70, %s72
    %p79 = scmp.eq.s32.totalorder %s25, 1
    %p80 = por %p78, %p79
    %p81 = scmp.ne.s32.totalorder %s72, %s73
    %p82 = scmp.eq.s32.totalorder %s25, 0
    %p83 = por %p81, %p82
    %p84 = scmp.ne.s32.totalorder %s72, %s73
    %p85 = scmp.eq.s32.totalorder %s26, 1
    %p86 = por %p84, %p85
    %p88 = scmp.ne.s32.totalorder %s73, %s87
    %p89 = scmp.eq.s32.totalorder %s26, 0
    %p90 = por %p88, %p89
    %s92 = sadd.s32 %s91, 1
    %p95 = scmp.eq.s32.totalorder %s20, 1
    %p96 = scmp.ne.s32.totalorder %s91, %s93
    %p97 = scmp.eq.s32.totalorder %s20, 0
    %p98 = por %p96, %p97
    %p99 = scmp.ne.s32.totalorder %s91, %s93
    %p100 = scmp.eq.s32.totalorder %s25, 1
    %p101 = por %p99, %p100
    %p102 = scmp.ne.s32.totalorder %s93, %s94
    %p103 = scmp.eq.s32.totalorder %s25, 0
    %p104 = por %p102, %p103
    %p105 = scmp.ne.s32.totalorder %s93, %s94
    %p106 = scmp.eq.s32.totalorder %s26, 1
    %p107 = por %p105, %p106
    %p109 = scmp.ne.s32.totalorder %s94, %s108
    %p110 = scmp.eq.s32.totalorder %s26, 0
    %p111 = por %p109, %p110
    %s112 = ssub.s32 %s20, %s27
    %p113 = scmp.eq.s32.totalorder %s112, 0
    %s115 = sadd.s32 %s114, 1
    %s116 = scalar_select %p113, %s114, %s115
    %p119 = pneg %p113
    %p120 = scmp.eq.s32.totalorder %s20, 1
    %p121 = por %p119, %p120
    %p122 = scmp.ne.s32.totalorder %s114, %s117
    %p123 = scmp.eq.s32.totalorder %s20, 0
    %p124 = por %p122, %p123
    %p125 = scmp.ne.s32.totalorder %s114, %s117
    %p126 = scmp.eq.s32.totalorder %s25, 1
    %p127 = por %p125, %p126
    %p128 = scmp.ne.s32.totalorder %s117, %s118
    %p129 = scmp.eq.s32.totalorder %s25, 0
    %p130 = por %p128, %p129
    %p131 = scmp.ne.s32.totalorder %s117, %s118
    %p132 = scmp.eq.s32.totalorder %s26, 1
    %p133 = por %p131, %p132
    %p135 = scmp.ne.s32.totalorder %s118, %s134
    %p136 = scmp.eq.s32.totalorder %s26, 0
    %p137 = por %p135, %p136
    %s138 = ssub.s32 %s20, %s27
    %p139 = scmp.eq.s32.totalorder %s138, 0
    %s141 = sadd.s32 %s140, 1
    %s142 = scalar_select %p139, %s140, %s141
    %p145 = pneg %p139
    %p146 = scmp.eq.s32.totalorder %s20, 1
    %p147 = por %p145, %p146
    %p148 = scmp.ne.s32.totalorder %s140, %s143
    %p149 = scmp.eq.s32.totalorder %s20, 0
    %p150 = por %p148, %p149
    %p151 = scmp.ne.s32.totalorder %s140, %s143
    %p152 = scmp.eq.s32.totalorder %s25, 1
    %p153 = por %p151, %p152
    %p154 = scmp.ne.s32.totalorder %s143, %s144
    %p155 = scmp.eq.s32.totalorder %s25, 0
    %p156 = por %p154, %p155
    %p157 = scmp.ne.s32.totalorder %s143, %s144
    %p158 = scmp.eq.s32.totalorder %s26, 1
    %p159 = por %p157, %p158
    %p161 = scmp.ne.s32.totalorder %s144, %s160
    %p162 = scmp.eq.s32.totalorder %s26, 0
    %p163 = por %p161, %p162
    %s164 = ssub.s32 %s20, %s27
    %p165 = scmp.eq.s32.totalorder %s164, 0
    %s167 = sadd.s32 %s166, 1
    %s168 = scalar_select %p165, %s166, %s167
    %p171 = pneg %p165
    %p172 = scmp.eq.s32.totalorder %s20, 1
    %p173 = por %p171, %p172
    %p174 = scmp.ne.s32.totalorder %s166, %s169
    %p175 = scmp.eq.s32.totalorder %s20, 0
    %p176 = por %p174, %p175
    %p177 = scmp.ne.s32.totalorder %s166, %s169
    %p178 = scmp.eq.s32.totalorder %s25, 1
    %p179 = por %p177, %p178
    %p180 = scmp.ne.s32.totalorder %s169, %s170
    %p181 = scmp.eq.s32.totalorder %s25, 0
    %p182 = por %p180, %p181
    %p183 = scmp.ne.s32.totalorder %s169, %s170
    %p184 = scmp.eq.s32.totalorder %s26, 1
    %p185 = por %p183, %p184
    %p187 = scmp.ne.s32.totalorder %s170, %s186
    %p188 = scmp.eq.s32.totalorder %s26, 0
    %p189 = por %p187, %p188
    %s190 = ssub.s32 %s20, %s27
    %p191 = scmp.eq.s32.totalorder %s190, 0
    %s193 = sadd.s32 %s192, 1
    %s194 = scalar_select %p191, %s192, %s193
    %p197 = pneg %p191
    %p198 = scmp.eq.s32.totalorder %s20, 1
    %p199 = por %p197, %p198
    %p200 = scmp.ne.s32.totalorder %s192, %s195
    %p201 = scmp.eq.s32.totalorder %s20, 0
    %p202 = por %p200, %p201
    %p203 = scmp.ne.s32.totalorder %s192, %s195
    %p204 = scmp.eq.s32.totalorder %s25, 1
    %p205 = por %p203, %p204
    %p206 = scmp.ne.s32.totalorder %s195, %s196
    %p207 = scmp.eq.s32.totalorder %s25, 0
    %p208 = por %p206, %p207
    %p209 = scmp.ne.s32.totalorder %s195, %s196
    %p210 = scmp.eq.s32.totalorder %s26, 1
    %p211 = por %p209, %p210
    %p213 = scmp.ne.s32.totalorder %s196, %s212
    %p214 = scmp.eq.s32.totalorder %s26, 0
    %p215 = por %p213, %p214
    %s216 = ssub.s32 %s20, %s27
    %p217 = scmp.eq.s32.totalorder %s216, 0
    %s219 = sadd.s32 %s218, 1
    %s220 = scalar_select %p217, %s218, %s219
    %p223 = pneg %p217
    %p224 = scmp.eq.s32.totalorder %s20, 1
    %p225 = por %p223, %p224
    %p226 = scmp.ne.s32.totalorder %s218, %s221
    %p227 = scmp.eq.s32.totalorder %s20, 0
    %p228 = por %p226, %p227
    %p229 = scmp.ne.s32.totalorder %s218, %s221
    %p230 = scmp.eq.s32.totalorder %s25, 1
    %p231 = por %p229, %p230
    %p232 = scmp.ne.s32.totalorder %s221, %s222
    %p233 = scmp.eq.s32.totalorder %s25, 0
    %p234 = por %p232, %p233
    %p235 = scmp.ne.s32.totalorder %s221, %s222
    %p236 = scmp.eq.s32.totalorder %s26, 1
    %p237 = por %p235, %p236
    %p239 = scmp.ne.s32.totalorder %s222, %s238
    %p240 = scmp.eq.s32.totalorder %s26, 0
    %p241 = por %p239, %p240
    %s242 = ssub.s32 %s20, %s27
    %p243 = scmp.eq.s32.totalorder %s242, 0
    %s245 = sadd.s32 %s244, 1
    %s246 = scalar_select %p243, %s244, %s245
    %p249 = pneg %p243
    %p250 = scmp.eq.s32.totalorder %s20, 1
    %p251 = por %p249, %p250
    %p252 = scmp.ne.s32.totalorder %s244, %s247
    %p253 = scmp.eq.s32.totalorder %s20, 0
    %p254 = por %p252, %p253
    %p255 = scmp.ne.s32.totalorder %s244, %s247
    %p256 = scmp.eq.s32.totalorder %s25, 1
    %p257 = por %p255, %p256
    %p258 = scmp.ne.s32.totalorder %s247, %s248
    %p259 = scmp.eq.s32.totalorder %s25, 0
    %p260 = por %p258, %p259
    %p261 = scmp.ne.s32.totalorder %s247, %s248
    %p262 = scmp.eq.s32.totalorder %s26, 1
    %p263 = por %p261, %p262
    %p265 = scmp.ne.s32.totalorder %s248, %s264
    %p266 = scmp.eq.s32.totalorder %s26, 0
    %p267 = por %p265, %p266
    %s268 = ssub.s32 %s20, %s27
    %p269 = scmp.eq.s32.totalorder %s268, 0
    %s271 = sadd.s32 %s270, 1
    %s272 = scalar_select %p269, %s270, %s271
    %p275 = pneg %p269
    %p276 = scmp.eq.s32.totalorder %s20, 1
    %p277 = por %p275, %p276
    %p278 = scmp.ne.s32.totalorder %s270, %s273
    %p279 = scmp.eq.s32.totalorder %s20, 0
    %p280 = por %p278, %p279
    %p281 = scmp.ne.s32.totalorder %s270, %s273
    %p282 = scmp.eq.s32.totalorder %s25, 1
    %p283 = por %p281, %p282
    %p284 = scmp.ne.s32.totalorder %s273, %s274
    %p285 = scmp.eq.s32.totalorder %s25, 0
    %p286 = por %p284, %p285
    %p287 = scmp.ne.s32.totalorder %s273, %s274
    %p288 = scmp.eq.s32.totalorder %s26, 1
    %p289 = por %p287, %p288
    %p291 = scmp.ne.s32.totalorder %s274, %s290
    %p292 = scmp.eq.s32.totalorder %s26, 0
    %p293 = por %p291, %p292
    %s294 = ssub.s32 %s20, %s27
    %p295 = scmp.eq.s32.totalorder %s294, 0
    %s297 = sadd.s32 %s296, 1
    %s298 = scalar_select %p295, %s296, %s297
    %p301 = pneg %p295
    %p302 = scmp.eq.s32.totalorder %s20, 1
    %p303 = por %p301, %p302
    %p304 = scmp.ne.s32.totalorder %s296, %s299
    %p305 = scmp.eq.s32.totalorder %s20, 0
    %p306 = por %p304, %p305
    %p307 = scmp.ne.s32.totalorder %s296, %s299
    %p308 = scmp.eq.s32.totalorder %s25, 1
    %p309 = por %p307, %p308
    %p310 = scmp.ne.s32.totalorder %s299, %s300
    %p311 = scmp.eq.s32.totalorder %s25, 0
    %p312 = por %p310, %p311
    %p313 = scmp.ne.s32.totalorder %s299, %s300
    %p314 = scmp.eq.s32.totalorder %s26, 1
    %p315 = por %p313, %p314
    %p317 = scmp.ne.s32.totalorder %s300, %s316
    %p318 = scmp.eq.s32.totalorder %s26, 0
    %p319 = por %p317, %p318
    %s321 = sadd.s32 %s320, 1
    %p324 = scmp.eq.s32.totalorder %s20, 1
    %p325 = scmp.ne.s32.totalorder %s320, %s322
    %p326 = scmp.eq.s32.totalorder %s20, 0
    %p327 = por %p325, %p326
    %p328 = scmp.ne.s32.totalorder %s320, %s322
    %p329 = scmp.eq.s32.totalorder %s25, 1
    %p330 = por %p328, %p329
    %p331 = scmp.ne.s32.totalorder %s322, %s323
    %p332 = scmp.eq.s32.totalorder %s25, 0
    %p333 = por %p331, %p332
    %p334 = scmp.ne.s32.totalorder %s322, %s323
    %p335 = scmp.eq.s32.totalorder %s26, 1
    %p336 = por %p334, %p335
    %p338 = scmp.ne.s32.totalorder %s323, %s337
    %p339 = scmp.eq.s32.totalorder %s26, 0
    %p340 = por %p338, %p339
    %s342 = sadd.s32 %s341, 1
    %p345 = scmp.eq.s32.totalorder %s20, 1
    %p346 = scmp.ne.s32.totalorder %s341, %s343
    %p347 = scmp.eq.s32.totalorder %s20, 0
    %p348 = por %p346, %p347
    %p349 = scmp.ne.s32.totalorder %s341, %s343
    %p350 = scmp.eq.s32.totalorder %s25, 1
    %p351 = por %p349, %p350
    %p352 = scmp.ne.s32.totalorder %s343, %s344
    %p353 = scmp.eq.s32.totalorder %s25, 0
    %p354 = por %p352, %p353
    %p355 = scmp.ne.s32.totalorder %s343, %s344
    %p356 = scmp.eq.s32.totalorder %s26, 1
    %p357 = por %p355, %p356
    %p359 = scmp.ne.s32.totalorder %s344, %s358
    %p360 = scmp.eq.s32.totalorder %s26, 0
    %p361 = por %p359, %p360
    %s363 = sadd.s32 %s362, 1
    %p366 = scmp.eq.s32.totalorder %s20, 1
    %p367 = scmp.ne.s32.totalorder %s362, %s364
    %p368 = scmp.eq.s32.totalorder %s20, 0
    %p369 = por %p367, %p368
    %p370 = scmp.ne.s32.totalorder %s362, %s364
    %p371 = scmp.eq.s32.totalorder %s25, 1
    %p372 = por %p370, %p371
    %p373 = scmp.ne.s32.totalorder %s364, %s365
    %p374 = scmp.eq.s32.totalorder %s25, 0
    %p375 = por %p373, %p374
    %p376 = scmp.ne.s32.totalorder %s364, %s365
    %p377 = scmp.eq.s32.totalorder %s26, 1
    %p378 = por %p376, %p377
    %p380 = scmp.ne.s32.totalorder %s365, %s379
    %p381 = scmp.eq.s32.totalorder %s26, 0
    %p382 = por %p380, %p381
    %p383 = scmp.le.s32.totalorder 1, %s20
    %p384 = scmp.lt.s32.totalorder %s20, 3
    %p385 = pnand %p383, %p384
    %p386 = pneg %p385
    // Predicated region
    $region9: #{_lambda_.1} parent=5 // pred_check
      _
    $region10: #{_lambda_.1} parent=5 // pred_check_branch
      %388 = sbr.rel (%p385) target = $region12
    $region11: #{_lambda_.1} parent=5 // pred_region
      %s389 = ssub.s32 %s20, 1
      // Predicated region
      $region13: #{_lambda_.1} parent=11 // pred_check
        %p390 = pneg %p41
      $region14: #{_lambda_.1} parent=11 // pred_check_branch
        %392 = sbr.rel (%p390) target = $region16
      $region15: #{_lambda_.1} parent=11 // pred_region
        _
      $region16: #{_lambda_.1} parent=11 // pred_fallthru
        _
      // Predicated region
      $region17: #{_lambda_.1} parent=11 // pred_check
        %p393 = pneg %p62
      $region18: #{_lambda_.1} parent=11 // pred_check_branch
        %395 = sbr.rel (%p393) target = $region20
      $region19: #{_lambda_.1} parent=11 // pred_region
        _
      $region20: #{_lambda_.1} parent=11 // pred_fallthru
        _
      // Predicated region
      $region21: #{_lambda_.1} parent=11 // pred_check
        %p396 = pneg %p83
      $region22: #{_lambda_.1} parent=11 // pred_check_branch
        %398 = sbr.rel (%p396) target = $region24
      $region23: #{_lambda_.1} parent=11 // pred_region
        _
      $region24: #{_lambda_.1} parent=11 // pred_fallthru
        _
      // Predicated region
      $region25: #{_lambda_.1} parent=11 // pred_check
        %p399 = pneg %p104
      $region26: #{_lambda_.1} parent=11 // pred_check_branch
        %401 = sbr.rel (%p399) target = $region28
      $region27: #{_lambda_.1} parent=11 // pred_region
        _
      $region28: #{_lambda_.1} parent=11 // pred_fallthru
        _
      // Predicated region
      $region29: #{_lambda_.1} parent=11 // pred_check
        %p402 = pneg %p333
      $region30: #{_lambda_.1} parent=11 // pred_check_branch
        %404 = sbr.rel (%p402) target = $region32
      $region31: #{_lambda_.1} parent=11 // pred_region
        _
      $region32: #{_lambda_.1} parent=11 // pred_fallthru
        _
      // Predicated region
      $region33: #{_lambda_.1} parent=11 // pred_check
        %p405 = pneg %p354
      $region34: #{_lambda_.1} parent=11 // pred_check_branch
        %407 = sbr.rel (%p405) target = $region36
      $region35: #{_lambda_.1} parent=11 // pred_region
        _
      $region36: #{_lambda_.1} parent=11 // pred_fallthru
        _
    $region12: #{_lambda_.1} parent=5 // pred_fallthru
      _
    %p408 = scmp.lt.s32.totalorder %s20, 2
    // Predicated region
    $region37: #{_lambda_.1} parent=5 // pred_check
      %p409 = pneg %p408
    $region38: #{_lambda_.1} parent=5 // pred_check_branch
      %411 = sbr.rel (%p409) target = $region40
    $region39: #{_lambda_.1} parent=5 // pred_region
      // Predicated region
      $region41: #{_lambda_.1} parent=39 // pred_check
        %p412 = pneg %p124
      $region42: #{_lambda_.1} parent=39 // pred_check_branch
        %414 = sbr.rel (%p412) target = $region44
      $region43: #{_lambda_.1} parent=39 // pred_region
        %p415 = scmp.lt.s32.totalorder %s20, 1
        %s416 = scalar_select %p415, %s20, 1
        %s417 = smul.addr %s416, 36
        %s418 = smul.addr %s417, 4
        %s419 = scalar_lea.vmem %s4, %s418
      $region44: #{_lambda_.1} parent=39 // pred_fallthru
        _
      // Predicated region
      $region45: #{_lambda_.1} parent=39 // pred_check
        %p420 = pneg %p150
      $region46: #{_lambda_.1} parent=39 // pred_check_branch
        %422 = sbr.rel (%p420) target = $region48
      $region47: #{_lambda_.1} parent=39 // pred_region
        %p423 = scmp.lt.s32.totalorder %s20, 1
        %s424 = scalar_select %p423, %s20, 1
        %s425 = scalar_lea.vmem %s5, %s424
      $region48: #{_lambda_.1} parent=39 // pred_fallthru
        _
      // Predicated region
      $region49: #{_lambda_.1} parent=39 // pred_check
        %p426 = pneg %p176
      $region50: #{_lambda_.1} parent=39 // pred_check_branch
        %428 = sbr.rel (%p426) target = $region52
      $region51: #{_lambda_.1} parent=39 // pred_region
        %p429 = scmp.lt.s32.totalorder %s20, 1
        %s430 = scalar_select %p429, %s20, 1
        %s431 = scalar_lea.vmem %s6, %s430
      $region52: #{_lambda_.1} parent=39 // pred_fallthru
        _
      // Predicated region
      $region53: #{_lambda_.1} parent=39 // pred_check
        %p432 = pneg %p202
      $region54: #{_lambda_.1} parent=39 // pred_check_branch
        %434 = sbr.rel (%p432) target = $region56
      $region55: #{_lambda_.1} parent=39 // pred_region
        %p435 = scmp.lt.s32.totalorder %s20, 1
        %s436 = scalar_select %p435, %s20, 1
        %s437 = scalar_lea.vmem %s7, %s436
      $region56: #{_lambda_.1} parent=39 // pred_fallthru
        _
      // Predicated region
      $region57: #{_lambda_.1} parent=39 // pred_check
        %p438 = pneg %p228
      $region58: #{_lambda_.1} parent=39 // pred_check_branch
        %440 = sbr.rel (%p438) target = $region60
      $region59: #{_lambda_.1} parent=39 // pred_region
        %p441 = scmp.lt.s32.totalorder %s20, 1
        %s442 = scalar_select %p441, %s20, 1
        %s443 = smul.addr %s442, 36
        %s444 = smul.addr %s443, 4
        %s445 = scalar_lea.vmem %s8, %s444
      $region60: #{_lambda_.1} parent=39 // pred_fallthru
        _
      // Predicated region
      $region61: #{_lambda_.1} parent=39 // pred_check
        %p446 = pneg %p254
      $region62: #{_lambda_.1} parent=39 // pred_check_branch
        %448 = sbr.rel (%p446) target = $region64
      $region63: #{_lambda_.1} parent=39 // pred_region
        %p449 = scmp.lt.s32.totalorder %s20, 1
        %s450 = scalar_select %p449, %s20, 1
        %s451 = scalar_lea.vmem %s9, %s450
      $region64: #{_lambda_.1} parent=39 // pred_fallthru
        _
      // Predicated region
      $region65: #{_lambda_.1} parent=39 // pred_check
        %p452 = pneg %p280
      $region66: #{_lambda_.1} parent=39 // pred_check_branch
        %454 = sbr.rel (%p452) target = $region68
      $region67: #{_lambda_.1} parent=39 // pred_region
        %p455 = scmp.lt.s32.totalorder %s20, 1
        %s456 = scalar_select %p455, %s20, 1
        %s457 = scalar_lea.vmem %s10, %s456
      $region68: #{_lambda_.1} parent=39 // pred_fallthru
        _
      // Predicated region
      $region69: #{_lambda_.1} parent=39 // pred_check
        %p458 = pneg %p306
      $region70: #{_lambda_.1} parent=39 // pred_check_branch
        %460 = sbr.rel (%p458) target = $region72
      $region71: #{_lambda_.1} parent=39 // pred_region
        %p461 = scmp.lt.s32.totalorder %s20, 1
        %s462 = scalar_select %p461, %s20, 1
        %s463 = scalar_lea.vmem %s11, %s462
      $region72: #{_lambda_.1} parent=39 // pred_fallthru
        _
    $region40: #{_lambda_.1} parent=5 // pred_fallthru
      _
    %p464 = scmp.le.s32.totalorder 1, %s20
    %p465 = scmp.lt.s32.totalorder %s20, 3
    %p466 = pnand %p464, %p465
    %p467 = pneg %p466
    // Predicated region
    $region73: #{_lambda_.1} parent=5 // pred_check
      _
    $region74: #{_lambda_.1} parent=5 // pred_check_branch
      %469 = sbr.rel (%p466) target = $region76
    $region75: #{_lambda_.1} parent=5 // pred_region
      %s470 = ssub.s32 %s20, 1
      %p471 = pneg %p41
      %p472 = pneg %p38
      %p473 = pneg %p62
      %p474 = pneg %p59
      %p475 = pneg %p83
      %p476 = pneg %p80
      %p477 = pneg %p104
      %p478 = pneg %p101
      %p479 = scmp.lt.s32.totalorder %s25, 1
      %s480 = scalar_select %p479, %s25, 1
      %s481 = smul.addr %s480, 36
      %s482 = smul.addr %s481, 4
      %s483 = scalar_lea.vmem %s4, %s482
      %p484 = pneg %p130
      %p485 = pneg %p127
      %p486 = scmp.lt.s32.totalorder %s25, 1
      %s487 = scalar_select %p486, %s25, 1
      %s488 = scalar_lea.vmem %s5, %s487
      %p489 = pneg %p156
      %p490 = pneg %p153
      %p491 = scmp.lt.s32.totalorder %s25, 1
      %s492 = scalar_select %p491, %s25, 1
      %s493 = scalar_lea.vmem %s6, %s492
      %p494 = pneg %p182
      %p495 = pneg %p179
      %p496 = scmp.lt.s32.totalorder %s25, 1
      %s497 = scalar_select %p496, %s25, 1
      %s498 = scalar_lea.vmem %s7, %s497
      %p499 = pneg %p208
      %p500 = pneg %p205
      %p501 = scmp.lt.s32.totalorder %s25, 1
      %s502 = scalar_select %p501, %s25, 1
      %s503 = smul.addr %s502, 36
      %s504 = smul.addr %s503, 4
      %s505 = scalar_lea.vmem %s8, %s504
      %p506 = pneg %p234
      %p507 = pneg %p231
      %p508 = scmp.lt.s32.totalorder %s25, 1
      %s509 = scalar_select %p508, %s25, 1
      %s510 = scalar_lea.vmem %s9, %s509
      %p511 = pneg %p260
      %p512 = pneg %p257
      %p513 = scmp.lt.s32.totalorder %s25, 1
      %s514 = scalar_select %p513, %s25, 1
      %s515 = scalar_lea.vmem %s10, %s514
      %p516 = pneg %p286
      %p517 = pneg %p283
      %p518 = scmp.lt.s32.totalorder %s25, 1
      %s519 = scalar_select %p518, %s25, 1
      %s520 = scalar_lea.vmem %s11, %s519
      %p521 = pneg %p312
      %p522 = pneg %p309
      %p523 = pneg %p333
      %p524 = pneg %p330
      %p525 = pneg %p354
      %p526 = pneg %p351
      %p527 = pneg %p375
      %p528 = pneg %p372
      %p529 = scmp.lt.s32.totalorder %s25, 1
      %s530 = scalar_select %p529, %s25, 1
      %s531 = smul.addr %s530, 36
      %s532 = smul.addr %s531, 4
      %s533 = scalar_lea.vmem %s4, %s532
      %p534 = scmp.lt.s32.totalorder %s25, 1
      %s535 = scalar_select %p534, %s25, 1
      %s536 = scalar_lea.vmem %s5, %s535
      %p537 = scmp.lt.s32.totalorder %s25, 1
      %s538 = scalar_select %p537, %s25, 1
      %s539 = scalar_lea.vmem %s6, %s538
      %p540 = scmp.lt.s32.totalorder %s25, 1
      %s541 = scalar_select %p540, %s25, 1
      %s542 = scalar_lea.vmem %s7, %s541
      %p543 = scmp.lt.s32.totalorder %s25, 1
      %s544 = scalar_select %p543, %s25, 1
      %s545 = smul.addr %s544, 36
      %s546 = smul.addr %s545, 4
      %s547 = scalar_lea.vmem %s8, %s546
      %p548 = scmp.lt.s32.totalorder %s25, 1
      %s549 = scalar_select %p548, %s25, 1
      %s550 = scalar_lea.vmem %s9, %s549
      %p551 = scmp.lt.s32.totalorder %s25, 1
      %s552 = scalar_select %p551, %s25, 1
      %s553 = scalar_lea.vmem %s10, %s552
      %p554 = scmp.lt.s32.totalorder %s25, 1
      %s555 = scalar_select %p554, %s25, 1
      %s556 = scalar_lea.vmem %s11, %s555
      %v558 = vld [vmem:[%s0] sm:$0xff]
      %v559 = vld [vmem:[%s0 + $0x8] sm:$0xff]
      %v560 = vld [vmem:[%s0 + $0x10] sm:$0xff]
      %v561 = vld [vmem:[%s0 + $0x18] sm:$0xff]
      %v562 = vld [vmem:[%s0 + $0x20] sm:$0xff]
      %v563 = vld [vmem:[%s0 + $0x28] sm:$0xff]
      %v564 = vld [vmem:[%s0 + $0x30] sm:$0xff]
      %v565 = vld [vmem:[%s0 + $0x38] sm:$0xff]
      %v566 = vld [vmem:[%s0 + $0x40] sm:$0xff]
      %v567 = vld [vmem:[%s0 + $0x48] sm:$0xff]
      %v568 = vld [vmem:[%s0 + $0x50] sm:$0xff]
      %v569 = vld [vmem:[%s0 + $0x58] sm:$0xff]
      %v570 = vld [vmem:[%s0 + $0x60] sm:$0xff]
      %v571 = vld [vmem:[%s0 + $0x68] sm:$0xff]
      %v572 = vld [vmem:[%s0 + $0x70] sm:$0xff]
      %v573 = vld [vmem:[%s0 + $0x78] sm:$0xff]
      %p574 = scmp.eq.s32.totalorder %s25, 0
      // Predicated region
      $region77: #{_lambda_.1} parent=75 // pred_check
        %p575 = pneg %p574
      $region78: #{_lambda_.1} parent=75 // pred_check_branch
        %577 = sbr.rel (%p575) target = $region80
      $region79: #{_lambda_.1} parent=75 // pred_region
        %v578 = vld [vmem:[%s1] sm:$0xf]
        %v579 = vld [vmem:[%s1 + $0x4] sm:$0xf]
        %v580 = vld [vmem:[%s1 + $0x8] sm:$0xf]
        %v581 = vld [vmem:[%s1 + $0xc] sm:$0xf]
        %v582 = vld [vmem:[%s1 + $0x10] sm:$0xf]
        %v583 = vld [vmem:[%s1 + $0x14] sm:$0xf]
        %v584 = vld [vmem:[%s1 + $0x18] sm:$0xf]
        %v585 = vld [vmem:[%s1 + $0x1c] sm:$0xf]
        %v586 = vld [vmem:[%s1 + $0x20] sm:$0xf]
        %v587 = vld [vmem:[%s1 + $0x24] sm:$0xf]
        %v588 = vld [vmem:[%s1 + $0x28] sm:$0xf]
        %v589 = vld [vmem:[%s1 + $0x2c] sm:$0xf]
        %v590 = vld [vmem:[%s1 + $0x30] sm:$0xf]
        %v591 = vld [vmem:[%s1 + $0x34] sm:$0xf]
        %v592 = vld [vmem:[%s1 + $0x38] sm:$0xf]
        %v593 = vld [vmem:[%s1 + $0x3c] sm:$0xf]
        %v594 = vld [vmem:[%s2] sm:$0xf]
        %v595 = vld [vmem:[%s2 + $0x4] sm:$0xf]
        %v596 = vld [vmem:[%s2 + $0x8] sm:$0xf]
        %v597 = vld [vmem:[%s2 + $0xc] sm:$0xf]
        %v598 = vld [vmem:[%s2 + $0x10] sm:$0xf]
        %v599 = vld [vmem:[%s2 + $0x14] sm:$0xf]
        %v600 = vld [vmem:[%s2 + $0x18] sm:$0x7]
        %v601 = vld [vmem:[%s3] sm:$0x1]
        %v603 = vperm.slane %v601, 0
        %v621 = vunpack.c.l.b16 %v578
        %v622 = vunpack.c.l.b16 %v579
        %v623 = vunpack.c.l.b16 %v580
        %v624 = vunpack.c.l.b16 %v581
        %v625 = vunpack.c.l.b16 %v582
        %v626 = vunpack.c.l.b16 %v583
        %v627 = vunpack.c.l.b16 %v584
        %v628 = vunpack.c.l.b16 %v585
        %v629 = vunpack.c.l.b16 %v586
        %v630 = vunpack.c.l.b16 %v587
        %v631 = vunpack.c.l.b16 %v588
        %v632 = vunpack.c.l.b16 %v589
        %v633 = vunpack.c.l.b16 %v590
        %v634 = vunpack.c.l.b16 %v591
        %v635 = vunpack.c.l.b16 %v592
        %v636 = vunpack.c.l.b16 %v593
        %v637 = vpack.c.b16 %v622, %v621
        %v638 = vpack.c.b16 %v624, %v623
        %v639 = vpack.c.b16 %v626, %v625
        %v640 = vpack.c.b16 %v628, %v627
        %v641 = vpack.c.b16 %v630, %v629
        %v642 = vpack.c.b16 %v632, %v631
        %v643 = vpack.c.b16 %v634, %v633
        %v644 = vpack.c.b16 %v636, %v635
        %v652 = vunpack.c.l.b16 %v594
        %v653 = vunpack.c.l.b16 %v595
        %v654 = vunpack.c.l.b16 %v596
        %v655 = vunpack.c.l.b16 %v597
        %v656 = vunpack.c.l.b16 %v598
        %v657 = vunpack.c.l.b16 %v599
        %v658 = vunpack.c.l.b16 %v600
        %v659 = vpack.c.b16 %v653, %v652
        %v660 = vpack.c.b16 %v655, %v654
        %v661 = vpack.c.b16 %v657, %v656
        %v662 = vpack.c.b16 %v658, %v658
        %vm666 = vcmask 441344
        %v668 = vsel %vm666, %v637, 0
        %v671 = vsel %vm666, %v638, 0
        %v674 = vsel %vm666, %v639, 0
        %v677 = vsel %vm666, %v640, 0
        %v680 = vsel %vm666, %v641, 0
        %v683 = vsel %vm666, %v642, 0
        %v686 = vsel %vm666, %v643, 0
        %v689 = vsel %vm666, %v644, 0
        %vm691 = vcmask 1042432
        %v693 = vsel %vm691, %v662, 0
        %695 = vmatpush.bf16.msra.mxu0 0
        %696 = vmatpush.bf16.msra.mxu0 0
        %697 = vmatpush.bf16.msra.mxu0 0
        %698 = vmatpush.bf16.msra.mxu0 0
        %699 = vmatpush.bf16.msra.mxu0 %v693
        %700 = vmatpush.bf16.msra.mxu0 %v661
        %701 = vmatpush.bf16.msra.mxu0 %v660
        %702 = vmatpush.bf16.msra.mxu0 %v659
        %703 = vmatmul.bf16.gmra.mxu0 %v668
        %v704 = vpop.f32.mrf.mxu0
        %v705 = vadd.f32 %v603, %v704
        %v706 = vpop.f32.mrf.mxu0
        %v707 = vadd.f32 %v603, %v706
        %708 = vmatmul.bf16.gmra.mxu0 %v671
        %v709 = vpop.f32.mrf.mxu0
        %v710 = vadd.f32 %v603, %v709
        %v711 = vpop.f32.mrf.mxu0
        %v712 = vadd.f32 %v603, %v711
        %713 = vmatmul.bf16.gmra.mxu0 %v674
        %v714 = vpop.f32.mrf.mxu0
        %v715 = vadd.f32 %v603, %v714
        %v716 = vpop.f32.mrf.mxu0
        %v717 = vadd.f32 %v603, %v716
        %718 = vmatmul.bf16.gmra.mxu0 %v677
        %v719 = vpop.f32.mrf.mxu0
        %v720 = vadd.f32 %v603, %v719
        %v721 = vpop.f32.mrf.mxu0
        %v722 = vadd.f32 %v603, %v721
        %723 = vmatmul.bf16.gmra.mxu0 %v680
        %v724 = vpop.f32.mrf.mxu0
        %v725 = vadd.f32 %v603, %v724
        %v726 = vpop.f32.mrf.mxu0
        %v727 = vadd.f32 %v603, %v726
        %728 = vmatmul.bf16.gmra.mxu0 %v683
        %v729 = vpop.f32.mrf.mxu0
        %v730 = vadd.f32 %v603, %v729
        %v731 = vpop.f32.mrf.mxu0
        %v732 = vadd.f32 %v603, %v731
        %733 = vmatmul.bf16.gmra.mxu0 %v686
        %v734 = vpop.f32.mrf.mxu0
        %v735 = vadd.f32 %v603, %v734
        %v736 = vpop.f32.mrf.mxu0
        %v737 = vadd.f32 %v603, %v736
        %738 = vmatmul.bf16.gmra.mxu0 %v689
        %v739 = vpop.f32.mrf.mxu0
        %v740 = vadd.f32 %v603, %v739
        %v741 = vpop.f32.mrf.mxu0
        %v742 = vadd.f32 %v603, %v741
        %743 = vdwg.mxu0
        %v744 = vmax.f32 %v705, 0.0
        %v745 = vmax.f32 %v707, 0.0
        %v746 = vmax.f32 %v710, 0.0
        %v747 = vmax.f32 %v712, 0.0
        %v748 = vmax.f32 %v715, 0.0
        %v749 = vmax.f32 %v717, 0.0
        %v750 = vmax.f32 %v720, 0.0
        %v751 = vmax.f32 %v722, 0.0
        %v752 = vmax.f32 %v725, 0.0
        %v753 = vmax.f32 %v727, 0.0
        %v754 = vmax.f32 %v730, 0.0
        %v755 = vmax.f32 %v732, 0.0
        %v756 = vmax.f32 %v735, 0.0
        %v757 = vmax.f32 %v737, 0.0
        %v758 = vmax.f32 %v740, 0.0
        %v759 = vmax.f32 %v742, 0.0
        %vm760 = vcmask 261120
        %761 = vst.msk [vmem:[#allocation2] sm:$0xff] %vm760, %v744
        %762 = vst.msk [vmem:[#allocation2 + $0x8] sm:$0xff] %vm760, %v745
        %763 = vst.msk [vmem:[#allocation2 + $0x10] sm:$0xff] %vm760, %v746
        %764 = vst.msk [vmem:[#allocation2 + $0x18] sm:$0xff] %vm760, %v747
        %765 = vst.msk [vmem:[#allocation2 + $0x20] sm:$0xff] %vm760, %v748
        %766 = vst.msk [vmem:[#allocation2 + $0x28] sm:$0xff] %vm760, %v749
        %767 = vst.msk [vmem:[#allocation2 + $0x30] sm:$0xff] %vm760, %v750
        %768 = vst.msk [vmem:[#allocation2 + $0x38] sm:$0xff] %vm760, %v751
        %769 = vst.msk [vmem:[#allocation2 + $0x40] sm:$0xff] %vm760, %v752
        %770 = vst.msk [vmem:[#allocation2 + $0x48] sm:$0xff] %vm760, %v753
        %771 = vst.msk [vmem:[#allocation2 + $0x50] sm:$0xff] %vm760, %v754
        %772 = vst.msk [vmem:[#allocation2 + $0x58] sm:$0xff] %vm760, %v755
        %773 = vst.msk [vmem:[#allocation2 + $0x60] sm:$0xff] %vm760, %v756
        %774 = vst.msk [vmem:[#allocation2 + $0x68] sm:$0xff] %vm760, %v757
        %775 = vst.msk [vmem:[#allocation2 + $0x70] sm:$0xff] %vm760, %v758
        %776 = vst.msk [vmem:[#allocation2 + $0x78] sm:$0xff] %vm760, %v759
      $region80: #{_lambda_.1} parent=75 // pred_fallthru
        _
      %v777 = vld [vmem:[#allocation2] sm:$0xff]
      %v778 = vld [vmem:[#allocation2 + $0x8] sm:$0xff]
      %v779 = vld [vmem:[#allocation2 + $0x10] sm:$0xff]
      %v780 = vld [vmem:[#allocation2 + $0x18] sm:$0xff]
      %v781 = vld [vmem:[#allocation2 + $0x20] sm:$0xff]
      %v782 = vld [vmem:[#allocation2 + $0x28] sm:$0xff]
      %v783 = vld [vmem:[#allocation2 + $0x30] sm:$0xff]
      %v784 = vld [vmem:[#allocation2 + $0x38] sm:$0xff]
      %v785 = vld [vmem:[#allocation2 + $0x40] sm:$0xff]
      %v786 = vld [vmem:[#allocation2 + $0x48] sm:$0xff]
      %v787 = vld [vmem:[#allocation2 + $0x50] sm:$0xff]
      %v788 = vld [vmem:[#allocation2 + $0x58] sm:$0xff]
      %v789 = vld [vmem:[#allocation2 + $0x60] sm:$0xff]
      %v790 = vld [vmem:[#allocation2 + $0x68] sm:$0xff]
      %v791 = vld [vmem:[#allocation2 + $0x70] sm:$0xff]
      %v792 = vld [vmem:[#allocation2 + $0x78] sm:$0xff]
      %v793 = vld [vmem:[%s533] sm:$0xf]
      %v794 = vld [vmem:[%s533 + $0x4] sm:$0xf]
      %v795 = vld [vmem:[%s533 + $0x8] sm:$0xf]
      %v796 = vld [vmem:[%s533 + $0xc] sm:$0xf]
      %v797 = vld [vmem:[%s533 + $0x10] sm:$0xf]
      %v798 = vld [vmem:[%s533 + $0x14] sm:$0xf]
      %v799 = vld [vmem:[%s533 + $0x18] sm:$0xf]
      %v800 = vld [vmem:[%s533 + $0x1c] sm:$0xf]
      %v801 = vld [vmem:[%s533 + $0x20] sm:$0xf]
      %v802 = vld [vmem:[%s533 + $0x24] sm:$0xf]
      %v803 = vld [vmem:[%s533 + $0x28] sm:$0xf]
      %v804 = vld [vmem:[%s533 + $0x2c] sm:$0xf]
      %v805 = vld [vmem:[%s533 + $0x30] sm:$0xf]
      %v806 = vld [vmem:[%s533 + $0x34] sm:$0xf]
      %v807 = vld [vmem:[%s533 + $0x38] sm:$0xf]
      %v808 = vld [vmem:[%s533 + $0x3c] sm:$0xf]
      %v809 = vld [vmem:[%s533 + $0x40] sm:$0xf]
      %v810 = vld [vmem:[%s533 + $0x44] sm:$0xf]
      %v811 = vld [vmem:[%s533 + $0x48] sm:$0xf]
      %v812 = vld [vmem:[%s533 + $0x4c] sm:$0xf]
      %v813 = vld [vmem:[%s533 + $0x50] sm:$0xf]
      %v814 = vld [vmem:[%s533 + $0x54] sm:$0xf]
      %v815 = vld [vmem:[%s533 + $0x58] sm:$0xf]
      %v816 = vld [vmem:[%s533 + $0x5c] sm:$0xf]
      %v817 = vld [vmem:[%s533 + $0x60] sm:$0xf]
      %v818 = vld [vmem:[%s533 + $0x64] sm:$0xf]
      %v819 = vld [vmem:[%s533 + $0x68] sm:$0xf]
      %v820 = vld [vmem:[%s533 + $0x6c] sm:$0xf]
      %v821 = vld [vmem:[%s533 + $0x70] sm:$0xf]
      %v822 = vld [vmem:[%s533 + $0x74] sm:$0xf]
      %v823 = vld [vmem:[%s533 + $0x78] sm:$0xf]
      %v824 = vld [vmem:[%s533 + $0x7c] sm:$0xf]
      %v825 = vld [vmem:[%s533 + $0x80] sm:$0xf]
      %v826 = vld [vmem:[%s533 + $0x84] sm:$0xf]
      %v827 = vld [vmem:[%s533 + $0x88] sm:$0xf]
      %v828 = vld [vmem:[%s533 + $0x8c] sm:$0xf]
      %v829 = vld [vmem:[%s536] sm:$0x1]
      %vm832 = vcmask 1040384
      %v833 = vrot.slane %v791, 7
      %v834 = vrot.slane %v792, 7
      %v835 = vsel %vm832, %v833, %v834
      %v852 = vrot.slane %v777, 7
      %v853 = vrot.slane %v778, 7
      %v854 = vsel %vm832, %v852, %v853
      %v855 = vrot.slane %v779, 7
      %v856 = vsel %vm832, %v853, %v855
      %v857 = vrot.slane %v780, 7
      %v858 = vsel %vm832, %v855, %v857
      %v859 = vrot.slane %v781, 7
      %v860 = vsel %vm832, %v857, %v859
      %v861 = vrot.slane %v782, 7
      %v862 = vsel %vm832, %v859, %v861
      %v863 = vrot.slane %v783, 7
      %v864 = vsel %vm832, %v861, %v863
      %v865 = vrot.slane %v784, 7
      %v866 = vsel %vm832, %v863, %v865
      %v867 = vrot.slane %v785, 7
      %v868 = vsel %vm832, %v865, %v867
      %v869 = vrot.slane %v786, 7
      %v870 = vsel %vm832, %v867, %v869
      %v871 = vrot.slane %v787, 7
      %v872 = vsel %vm832, %v869, %v871
      %v873 = vrot.slane %v788, 7
      %v874 = vsel %vm832, %v871, %v873
      %v875 = vrot.slane %v789, 7
      %v876 = vsel %vm832, %v873, %v875
      %v877 = vrot.slane %v790, 7
      %v878 = vsel %vm832, %v875, %v877
      %v879 = vsel %vm832, %v877, %v833
      %v895 = vsel %vm832, %v834, %v852
      %897 = vset.pattern.permute.xlu0 0
      %898 = vperm.xlu0 %897, %v558
      %v899 = vpop.permute.xlu0 %898
      %902 = vset.pattern.permute.xlu0 0
      %903 = vperm.xlu0 %902, %v559
      %v904 = vpop.permute.xlu0 %903
      %907 = vset.pattern.permute.xlu0 0
      %908 = vperm.xlu0 %907, %v560
      %v909 = vpop.permute.xlu0 %908
      %912 = vset.pattern.permute.xlu0 0
      %913 = vperm.xlu0 %912, %v561
      %v914 = vpop.permute.xlu0 %913
      %917 = vset.pattern.permute.xlu0 0
      %918 = vperm.xlu0 %917, %v562
      %v919 = vpop.permute.xlu0 %918
      %922 = vset.pattern.permute.xlu0 0
      %923 = vperm.xlu0 %922, %v563
      %v924 = vpop.permute.xlu0 %923
      %927 = vset.pattern.permute.xlu0 0
      %928 = vperm.xlu0 %927, %v564
      %v929 = vpop.permute.xlu0 %928
      %932 = vset.pattern.permute.xlu0 0
      %933 = vperm.xlu0 %932, %v565
      %v934 = vpop.permute.xlu0 %933
      %937 = vset.pattern.permute.xlu0 0
      %938 = vperm.xlu0 %937, %v566
      %v939 = vpop.permute.xlu0 %938
      %942 = vset.pattern.permute.xlu0 0
      %943 = vperm.xlu0 %942, %v567
      %v944 = vpop.permute.xlu0 %943
      %947 = vset.pattern.permute.xlu0 0
      %948 = vperm.xlu0 %947, %v568
      %v949 = vpop.permute.xlu0 %948
      %952 = vset.pattern.permute.xlu0 0
      %953 = vperm.xlu0 %952, %v569
      %v954 = vpop.permute.xlu0 %953
      %957 = vset.pattern.permute.xlu0 0
      %958 = vperm.xlu0 %957, %v570
      %v959 = vpop.permute.xlu0 %958
      %962 = vset.pattern.permute.xlu0 0
      %963 = vperm.xlu0 %962, %v571
      %v964 = vpop.permute.xlu0 %963
      %967 = vset.pattern.permute.xlu0 0
      %968 = vperm.xlu0 %967, %v572
      %v969 = vpop.permute.xlu0 %968
      %972 = vset.pattern.permute.xlu0 0
      %973 = vperm.xlu0 %972, %v573
      %v974 = vpop.permute.xlu0 %973
      %v976 = vmul.f32 %v835, %v899
      %v977 = vmul.f32 %v895, %v904
      %v978 = vmul.f32 %v854, %v909
      %v979 = vmul.f32 %v856, %v914
      %v980 = vmul.f32 %v858, %v919
      %v981 = vmul.f32 %v860, %v924
      %v982 = vmul.f32 %v862, %v929
      %v983 = vmul.f32 %v864, %v934
      %v984 = vmul.f32 %v866, %v939
      %v985 = vmul.f32 %v868, %v944
      %v986 = vmul.f32 %v870, %v949
      %v987 = vmul.f32 %v872, %v954
      %v988 = vmul.f32 %v874, %v959
      %v989 = vmul.f32 %v876, %v964
      %v990 = vmul.f32 %v878, %v969
      %v991 = vmul.f32 %v879, %v974
      %992 = vset.pattern.permute.xlu0 1
      %993 = vperm.xlu0 %992, %v558
      %v994 = vpop.permute.xlu0 %993
      %996 = vset.pattern.permute.xlu0 1
      %997 = vperm.xlu0 %996, %v559
      %v998 = vpop.permute.xlu0 %997
      %1000 = vset.pattern.permute.xlu0 1
      %1001 = vperm.xlu0 %1000, %v560
      %v1002 = vpop.permute.xlu0 %1001
      %1004 = vset.pattern.permute.xlu0 1
      %1005 = vperm.xlu0 %1004, %v561
      %v1006 = vpop.permute.xlu0 %1005
      %1008 = vset.pattern.permute.xlu0 1
      %1009 = vperm.xlu0 %1008, %v562
      %v1010 = vpop.permute.xlu0 %1009
      %1012 = vset.pattern.permute.xlu0 1
      %1013 = vperm.xlu0 %1012, %v563
      %v1014 = vpop.permute.xlu0 %1013
      %1016 = vset.pattern.permute.xlu0 1
      %1017 = vperm.xlu0 %1016, %v564
      %v1018 = vpop.permute.xlu0 %1017
      %1020 = vset.pattern.permute.xlu0 1
      %1021 = vperm.xlu0 %1020, %v565
      %v1022 = vpop.permute.xlu0 %1021
      %1024 = vset.pattern.permute.xlu0 1
      %1025 = vperm.xlu0 %1024, %v566
      %v1026 = vpop.permute.xlu0 %1025
      %1028 = vset.pattern.permute.xlu0 1
      %1029 = vperm.xlu0 %1028, %v567
      %v1030 = vpop.permute.xlu0 %1029
      %1032 = vset.pattern.permute.xlu0 1
      %1033 = vperm.xlu0 %1032, %v568
      %v1034 = vpop.permute.xlu0 %1033
      %1036 = vset.pattern.permute.xlu0 1
      %1037 = vperm.xlu0 %1036, %v569
      %v1038 = vpop.permute.xlu0 %1037
      %1040 = vset.pattern.permute.xlu0 1
      %1041 = vperm.xlu0 %1040, %v570
      %v1042 = vpop.permute.xlu0 %1041
      %1044 = vset.pattern.permute.xlu0 1
      %1045 = vperm.xlu0 %1044, %v571
      %v1046 = vpop.permute.xlu0 %1045
      %1048 = vset.pattern.permute.xlu0 1
      %1049 = vperm.xlu0 %1048, %v572
      %v1050 = vpop.permute.xlu0 %1049
      %1052 = vset.pattern.permute.xlu0 1
      %1053 = vperm.xlu0 %1052, %v573
      %v1054 = vpop.permute.xlu0 %1053
      %v1056 = vmul.f32 %v792, %v994
      %v1057 = vmul.f32 %v777, %v998
      %v1058 = vmul.f32 %v778, %v1002
      %v1059 = vmul.f32 %v779, %v1006
      %v1060 = vmul.f32 %v780, %v1010
      %v1061 = vmul.f32 %v781, %v1014
      %v1062 = vmul.f32 %v782, %v1018
      %v1063 = vmul.f32 %v783, %v1022
      %v1064 = vmul.f32 %v784, %v1026
      %v1065 = vmul.f32 %v785, %v1030
      %v1066 = vmul.f32 %v786, %v1034
      %v1067 = vmul.f32 %v787, %v1038
      %v1068 = vmul.f32 %v788, %v1042
      %v1069 = vmul.f32 %v789, %v1046
      %v1070 = vmul.f32 %v790, %v1050
      %v1071 = vmul.f32 %v791, %v1054
      %v1072 = vrot.slane %v792, 1
      %vm1074 = vcmask 1046528
      %v1075 = vrot.slane %v777, 1
      %v1076 = vrot.slane %v778, 1
      %v1077 = vsel %vm1074, %v1075, %v1076
      %v1078 = vrot.slane %v779, 1
      %v1079 = vsel %vm1074, %v1076, %v1078
      %v1080 = vrot.slane %v780, 1
      %v1081 = vsel %vm1074, %v1078, %v1080
      %v1082 = vrot.slane %v781, 1
      %v1083 = vsel %vm1074, %v1080, %v1082
      %v1084 = vrot.slane %v782, 1
      %v1085 = vsel %vm1074, %v1082, %v1084
      %v1086 = vrot.slane %v783, 1
      %v1087 = vsel %vm1074, %v1084, %v1086
      %v1088 = vrot.slane %v784, 1
      %v1089 = vsel %vm1074, %v1086, %v1088
      %v1090 = vrot.slane %v785, 1
      %v1091 = vsel %vm1074, %v1088, %v1090
      %v1092 = vrot.slane %v786, 1
      %v1093 = vsel %vm1074, %v1090, %v1092
      %v1094 = vrot.slane %v787, 1
      %v1095 = vsel %vm1074, %v1092, %v1094
      %v1096 = vrot.slane %v788, 1
      %v1097 = vsel %vm1074, %v1094, %v1096
      %v1098 = vrot.slane %v789, 1
      %v1099 = vsel %vm1074, %v1096, %v1098
      %v1100 = vrot.slane %v790, 1
      %v1101 = vsel %vm1074, %v1098, %v1100
      %v1102 = vrot.slane %v791, 1
      %v1103 = vsel %vm1074, %v1100, %v1102
      %v1104 = vsel %vm1074, %v1102, %v1072
      %v1121 = vsel %vm1074, %v1072, %v1075
      %1122 = vset.pattern.permute.xlu0 2
      %1123 = vperm.xlu0 %1122, %v558
      %v1124 = vpop.permute.xlu0 %1123
      %1126 = vset.pattern.permute.xlu0 2
      %1127 = vperm.xlu0 %1126, %v559
      %v1128 = vpop.permute.xlu0 %1127
      %1130 = vset.pattern.permute.xlu0 2
      %1131 = vperm.xlu0 %1130, %v560
      %v1132 = vpop.permute.xlu0 %1131
      %1134 = vset.pattern.permute.xlu0 2
      %1135 = vperm.xlu0 %1134, %v561
      %v1136 = vpop.permute.xlu0 %1135
      %1138 = vset.pattern.permute.xlu0 2
      %1139 = vperm.xlu0 %1138, %v562
      %v1140 = vpop.permute.xlu0 %1139
      %1142 = vset.pattern.permute.xlu0 2
      %1143 = vperm.xlu0 %1142, %v563
      %v1144 = vpop.permute.xlu0 %1143
      %1146 = vset.pattern.permute.xlu0 2
      %1147 = vperm.xlu0 %1146, %v564
      %v1148 = vpop.permute.xlu0 %1147
      %1150 = vset.pattern.permute.xlu0 2
      %1151 = vperm.xlu0 %1150, %v565
      %v1152 = vpop.permute.xlu0 %1151
      %1154 = vset.pattern.permute.xlu0 2
      %1155 = vperm.xlu0 %1154, %v566
      %v1156 = vpop.permute.xlu0 %1155
      %1158 = vset.pattern.permute.xlu0 2
      %1159 = vperm.xlu0 %1158, %v567
      %v1160 = vpop.permute.xlu0 %1159
      %1162 = vset.pattern.permute.xlu0 2
      %1163 = vperm.xlu0 %1162, %v568
      %v1164 = vpop.permute.xlu0 %1163
      %1166 = vset.pattern.permute.xlu0 2
      %1167 = vperm.xlu0 %1166, %v569
      %v1168 = vpop.permute.xlu0 %1167
      %1170 = vset.pattern.permute.xlu0 2
      %1171 = vperm.xlu0 %1170, %v570
      %v1172 = vpop.permute.xlu0 %1171
      %1174 = vset.pattern.permute.xlu0 2
      %1175 = vperm.xlu0 %1174, %v571
      %v1176 = vpop.permute.xlu0 %1175
      %1178 = vset.pattern.permute.xlu0 2
      %1179 = vperm.xlu0 %1178, %v572
      %v1180 = vpop.permute.xlu0 %1179
      %1182 = vset.pattern.permute.xlu0 2
      %1183 = vperm.xlu0 %1182, %v573
      %v1184 = vpop.permute.xlu0 %1183
      %v1186 = vmul.f32 %v1121, %v1124
      %v1187 = vmul.f32 %v1077, %v1128
      %v1188 = vmul.f32 %v1079, %v1132
      %v1189 = vmul.f32 %v1081, %v1136
      %v1190 = vmul.f32 %v1083, %v1140
      %v1191 = vmul.f32 %v1085, %v1144
      %v1192 = vmul.f32 %v1087, %v1148
      %v1193 = vmul.f32 %v1089, %v1152
      %v1194 = vmul.f32 %v1091, %v1156
      %v1195 = vmul.f32 %v1093, %v1160
      %v1196 = vmul.f32 %v1095, %v1164
      %v1197 = vmul.f32 %v1097, %v1168
      %v1198 = vmul.f32 %v1099, %v1172
      %v1199 = vmul.f32 %v1101, %v1176
      %v1200 = vmul.f32 %v1103, %v1180
      %v1201 = vmul.f32 %v1104, %v1184
      %1202 = vset.pattern.permute.xlu0 3
      %1203 = vperm.xlu0 %1202, %v558
      %v1204 = vpop.permute.xlu0 %1203
      %1206 = vset.pattern.permute.xlu0 3
      %1207 = vperm.xlu0 %1206, %v559
      %v1208 = vpop.permute.xlu0 %1207
      %1210 = vset.pattern.permute.xlu0 3
      %1211 = vperm.xlu0 %1210, %v560
      %v1212 = vpop.permute.xlu0 %1211
      %1214 = vset.pattern.permute.xlu0 3
      %1215 = vperm.xlu0 %1214, %v561
      %v1216 = vpop.permute.xlu0 %1215
      %1218 = vset.pattern.permute.xlu0 3
      %1219 = vperm.xlu0 %1218, %v562
      %v1220 = vpop.permute.xlu0 %1219
      %1222 = vset.pattern.permute.xlu0 3
      %1223 = vperm.xlu0 %1222, %v563
      %v1224 = vpop.permute.xlu0 %1223
      %1226 = vset.pattern.permute.xlu0 3
      %1227 = vperm.xlu0 %1226, %v564
      %v1228 = vpop.permute.xlu0 %1227
      %1230 = vset.pattern.permute.xlu0 3
      %1231 = vperm.xlu0 %1230, %v565
      %v1232 = vpop.permute.xlu0 %1231
      %1234 = vset.pattern.permute.xlu0 3
      %1235 = vperm.xlu0 %1234, %v566
      %v1236 = vpop.permute.xlu0 %1235
      %1238 = vset.pattern.permute.xlu0 3
      %1239 = vperm.xlu0 %1238, %v567
      %v1240 = vpop.permute.xlu0 %1239
      %1242 = vset.pattern.permute.xlu0 3
      %1243 = vperm.xlu0 %1242, %v568
      %v1244 = vpop.permute.xlu0 %1243
      %1246 = vset.pattern.permute.xlu0 3
      %1247 = vperm.xlu0 %1246, %v569
      %v1248 = vpop.permute.xlu0 %1247
      %1250 = vset.pattern.permute.xlu0 3
      %1251 = vperm.xlu0 %1250, %v570
      %v1252 = vpop.permute.xlu0 %1251
      %1254 = vset.pattern.permute.xlu0 3
      %1255 = vperm.xlu0 %1254, %v571
      %v1256 = vpop.permute.xlu0 %1255
      %1258 = vset.pattern.permute.xlu0 3
      %1259 = vperm.xlu0 %1258, %v572
      %v1260 = vpop.permute.xlu0 %1259
      %1262 = vset.pattern.permute.xlu0 3
      %1263 = vperm.xlu0 %1262, %v573
      %v1264 = vpop.permute.xlu0 %1263
      %v1266 = vmul.f32 %v895, %v1204
      %v1267 = vmul.f32 %v854, %v1208
      %v1268 = vmul.f32 %v856, %v1212
      %v1269 = vmul.f32 %v858, %v1216
      %v1270 = vmul.f32 %v860, %v1220
      %v1271 = vmul.f32 %v862, %v1224
      %v1272 = vmul.f32 %v864, %v1228
      %v1273 = vmul.f32 %v866, %v1232
      %v1274 = vmul.f32 %v868, %v1236
      %v1275 = vmul.f32 %v870, %v1240
      %v1276 = vmul.f32 %v872, %v1244
      %v1277 = vmul.f32 %v874, %v1248
      %v1278 = vmul.f32 %v876, %v1252
      %v1279 = vmul.f32 %v878, %v1256
      %v1280 = vmul.f32 %v879, %v1260
      %v1281 = vmul.f32 %v835, %v1264
      %1282 = vset.pattern.permute.xlu0 4
      %1283 = vperm.xlu0 %1282, %v558
      %v1284 = vpop.permute.xlu0 %1283
      %1286 = vset.pattern.permute.xlu0 4
      %1287 = vperm.xlu0 %1286, %v559
      %v1288 = vpop.permute.xlu0 %1287
      %1290 = vset.pattern.permute.xlu0 4
      %1291 = vperm.xlu0 %1290, %v560
      %v1292 = vpop.permute.xlu0 %1291
      %1294 = vset.pattern.permute.xlu0 4
      %1295 = vperm.xlu0 %1294, %v561
      %v1296 = vpop.permute.xlu0 %1295
      %1298 = vset.pattern.permute.xlu0 4
      %1299 = vperm.xlu0 %1298, %v562
      %v1300 = vpop.permute.xlu0 %1299
      %1302 = vset.pattern.permute.xlu0 4
      %1303 = vperm.xlu0 %1302, %v563
      %v1304 = vpop.permute.xlu0 %1303
      %1306 = vset.pattern.permute.xlu0 4
      %1307 = vperm.xlu0 %1306, %v564
      %v1308 = vpop.permute.xlu0 %1307
      %1310 = vset.pattern.permute.xlu0 4
      %1311 = vperm.xlu0 %1310, %v565
      %v1312 = vpop.permute.xlu0 %1311
      %1314 = vset.pattern.permute.xlu0 4
      %1315 = vperm.xlu0 %1314, %v566
      %v1316 = vpop.permute.xlu0 %1315
      %1318 = vset.pattern.permute.xlu0 4
      %1319 = vperm.xlu0 %1318, %v567
      %v1320 = vpop.permute.xlu0 %1319
      %1322 = vset.pattern.permute.xlu0 4
      %1323 = vperm.xlu0 %1322, %v568
      %v1324 = vpop.permute.xlu0 %1323
      %1326 = vset.pattern.permute.xlu0 4
      %1327 = vperm.xlu0 %1326, %v569
      %v1328 = vpop.permute.xlu0 %1327
      %1330 = vset.pattern.permute.xlu0 4
      %1331 = vperm.xlu0 %1330, %v570
      %v1332 = vpop.permute.xlu0 %1331
      %1334 = vset.pattern.permute.xlu0 4
      %1335 = vperm.xlu0 %1334, %v571
      %v1336 = vpop.permute.xlu0 %1335
      %1338 = vset.pattern.permute.xlu0 4
      %1339 = vperm.xlu0 %1338, %v572
      %v1340 = vpop.permute.xlu0 %1339
      %1342 = vset.pattern.permute.xlu0 4
      %1343 = vperm.xlu0 %1342, %v573
      %v1344 = vpop.permute.xlu0 %1343
      %v1346 = vmul.f32 %v777, %v1284
      %v1347 = vmul.f32 %v778, %v1288
      %v1348 = vmul.f32 %v779, %v1292
      %v1349 = vmul.f32 %v780, %v1296
      %v1350 = vmul.f32 %v781, %v1300
      %v1351 = vmul.f32 %v782, %v1304
      %v1352 = vmul.f32 %v783, %v1308
      %v1353 = vmul.f32 %v784, %v1312
      %v1354 = vmul.f32 %v785, %v1316
      %v1355 = vmul.f32 %v786, %v1320
      %v1356 = vmul.f32 %v787, %v1324
      %v1357 = vmul.f32 %v788, %v1328
      %v1358 = vmul.f32 %v789, %v1332
      %v1359 = vmul.f32 %v790, %v1336
      %v1360 = vmul.f32 %v791, %v1340
      %v1361 = vmul.f32 %v792, %v1344
      %1362 = vset.pattern.permute.xlu0 5
      %1363 = vperm.xlu0 %1362, %v558
      %v1364 = vpop.permute.xlu0 %1363
      %1366 = vset.pattern.permute.xlu0 5
      %1367 = vperm.xlu0 %1366, %v559
      %v1368 = vpop.permute.xlu0 %1367
      %1370 = vset.pattern.permute.xlu0 5
      %1371 = vperm.xlu0 %1370, %v560
      %v1372 = vpop.permute.xlu0 %1371
      %1374 = vset.pattern.permute.xlu0 5
      %1375 = vperm.xlu0 %1374, %v561
      %v1376 = vpop.permute.xlu0 %1375
      %1378 = vset.pattern.permute.xlu0 5
      %1379 = vperm.xlu0 %1378, %v562
      %v1380 = vpop.permute.xlu0 %1379
      %1382 = vset.pattern.permute.xlu0 5
      %1383 = vperm.xlu0 %1382, %v563
      %v1384 = vpop.permute.xlu0 %1383
      %1386 = vset.pattern.permute.xlu0 5
      %1387 = vperm.xlu0 %1386, %v564
      %v1388 = vpop.permute.xlu0 %1387
      %1390 = vset.pattern.permute.xlu0 5
      %1391 = vperm.xlu0 %1390, %v565
      %v1392 = vpop.permute.xlu0 %1391
      %1394 = vset.pattern.permute.xlu0 5
      %1395 = vperm.xlu0 %1394, %v566
      %v1396 = vpop.permute.xlu0 %1395
      %1398 = vset.pattern.permute.xlu0 5
      %1399 = vperm.xlu0 %1398, %v567
      %v1400 = vpop.permute.xlu0 %1399
      %1402 = vset.pattern.permute.xlu0 5
      %1403 = vperm.xlu0 %1402, %v568
      %v1404 = vpop.permute.xlu0 %1403
      %1406 = vset.pattern.permute.xlu0 5
      %1407 = vperm.xlu0 %1406, %v569
      %v1408 = vpop.permute.xlu0 %1407
      %1410 = vset.pattern.permute.xlu0 5
      %1411 = vperm.xlu0 %1410, %v570
      %v1412 = vpop.permute.xlu0 %1411
      %1414 = vset.pattern.permute.xlu0 5
      %1415 = vperm.xlu0 %1414, %v571
      %v1416 = vpop.permute.xlu0 %1415
      %1418 = vset.pattern.permute.xlu0 5
      %1419 = vperm.xlu0 %1418, %v572
      %v1420 = vpop.permute.xlu0 %1419
      %1422 = vset.pattern.permute.xlu0 5
      %1423 = vperm.xlu0 %1422, %v573
      %v1424 = vpop.permute.xlu0 %1423
      %v1426 = vmul.f32 %v1077, %v1364
      %v1427 = vmul.f32 %v1079, %v1368
      %v1428 = vmul.f32 %v1081, %v1372
      %v1429 = vmul.f32 %v1083, %v1376
      %v1430 = vmul.f32 %v1085, %v1380
      %v1431 = vmul.f32 %v1087, %v1384
      %v1432 = vmul.f32 %v1089, %v1388
      %v1433 = vmul.f32 %v1091, %v1392
      %v1434 = vmul.f32 %v1093, %v1396
      %v1435 = vmul.f32 %v1095, %v1400
      %v1436 = vmul.f32 %v1097, %v1404
      %v1437 = vmul.f32 %v1099, %v1408
      %v1438 = vmul.f32 %v1101, %v1412
      %v1439 = vmul.f32 %v1103, %v1416
      %v1440 = vmul.f32 %v1104, %v1420
      %v1441 = vmul.f32 %v1121, %v1424
      %1442 = vset.pattern.permute.xlu0 6
      %1443 = vperm.xlu0 %1442, %v558
      %v1444 = vpop.permute.xlu0 %1443
      %1446 = vset.pattern.permute.xlu0 6
      %1447 = vperm.xlu0 %1446, %v559
      %v1448 = vpop.permute.xlu0 %1447
      %1450 = vset.pattern.permute.xlu0 6
      %1451 = vperm.xlu0 %1450, %v560
      %v1452 = vpop.permute.xlu0 %1451
      %1454 = vset.pattern.permute.xlu0 6
      %1455 = vperm.xlu0 %1454, %v561
      %v1456 = vpop.permute.xlu0 %1455
      %1458 = vset.pattern.permute.xlu0 6
      %1459 = vperm.xlu0 %1458, %v562
      %v1460 = vpop.permute.xlu0 %1459
      %1462 = vset.pattern.permute.xlu0 6
      %1463 = vperm.xlu0 %1462, %v563
      %v1464 = vpop.permute.xlu0 %1463
      %1466 = vset.pattern.permute.xlu0 6
      %1467 = vperm.xlu0 %1466, %v564
      %v1468 = vpop.permute.xlu0 %1467
      %1470 = vset.pattern.permute.xlu0 6
      %1471 = vperm.xlu0 %1470, %v565
      %v1472 = vpop.permute.xlu0 %1471
      %1474 = vset.pattern.permute.xlu0 6
      %1475 = vperm.xlu0 %1474, %v566
      %v1476 = vpop.permute.xlu0 %1475
      %1478 = vset.pattern.permute.xlu0 6
      %1479 = vperm.xlu0 %1478, %v567
      %v1480 = vpop.permute.xlu0 %1479
      %1482 = vset.pattern.permute.xlu0 6
      %1483 = vperm.xlu0 %1482, %v568
      %v1484 = vpop.permute.xlu0 %1483
      %1486 = vset.pattern.permute.xlu0 6
      %1487 = vperm.xlu0 %1486, %v569
      %v1488 = vpop.permute.xlu0 %1487
      %1490 = vset.pattern.permute.xlu0 6
      %1491 = vperm.xlu0 %1490, %v570
      %v1492 = vpop.permute.xlu0 %1491
      %1494 = vset.pattern.permute.xlu0 6
      %1495 = vperm.xlu0 %1494, %v571
      %v1496 = vpop.permute.xlu0 %1495
      %1498 = vset.pattern.permute.xlu0 6
      %1499 = vperm.xlu0 %1498, %v572
      %v1500 = vpop.permute.xlu0 %1499
      %1502 = vset.pattern.permute.xlu0 6
      %1503 = vperm.xlu0 %1502, %v573
      %v1504 = vpop.permute.xlu0 %1503
      %v1506 = vmul.f32 %v854, %v1444
      %v1507 = vmul.f32 %v856, %v1448
      %v1508 = vmul.f32 %v858, %v1452
      %v1509 = vmul.f32 %v860, %v1456
      %v1510 = vmul.f32 %v862, %v1460
      %v1511 = vmul.f32 %v864, %v1464
      %v1512 = vmul.f32 %v866, %v1468
      %v1513 = vmul.f32 %v868, %v1472
      %v1514 = vmul.f32 %v870, %v1476
      %v1515 = vmul.f32 %v872, %v1480
      %v1516 = vmul.f32 %v874, %v1484
      %v1517 = vmul.f32 %v876, %v1488
      %v1518 = vmul.f32 %v878, %v1492
      %v1519 = vmul.f32 %v879, %v1496
      %v1520 = vmul.f32 %v835, %v1500
      %v1521 = vmul.f32 %v895, %v1504
      %1522 = vset.pattern.permute.xlu0 7
      %1523 = vperm.xlu0 %1522, %v558
      %v1524 = vpop.permute.xlu0 %1523
      %1526 = vset.pattern.permute.xlu0 7
      %1527 = vperm.xlu0 %1526, %v559
      %v1528 = vpop.permute.xlu0 %1527
      %1530 = vset.pattern.permute.xlu0 7
      %1531 = vperm.xlu0 %1530, %v560
      %v1532 = vpop.permute.xlu0 %1531
      %1534 = vset.pattern.permute.xlu0 7
      %1535 = vperm.xlu0 %1534, %v561
      %v1536 = vpop.permute.xlu0 %1535
      %1538 = vset.pattern.permute.xlu0 7
      %1539 = vperm.xlu0 %1538, %v562
      %v1540 = vpop.permute.xlu0 %1539
      %1542 = vset.pattern.permute.xlu0 7
      %1543 = vperm.xlu0 %1542, %v563
      %v1544 = vpop.permute.xlu0 %1543
      %1546 = vset.pattern.permute.xlu0 7
      %1547 = vperm.xlu0 %1546, %v564
      %v1548 = vpop.permute.xlu0 %1547
      %1550 = vset.pattern.permute.xlu0 7
      %1551 = vperm.xlu0 %1550, %v565
      %v1552 = vpop.permute.xlu0 %1551
      %1554 = vset.pattern.permute.xlu0 7
      %1555 = vperm.xlu0 %1554, %v566
      %v1556 = vpop.permute.xlu0 %1555
      %1558 = vset.pattern.permute.xlu0 7
      %1559 = vperm.xlu0 %1558, %v567
      %v1560 = vpop.permute.xlu0 %1559
      %1562 = vset.pattern.permute.xlu0 7
      %1563 = vperm.xlu0 %1562, %v568
      %v1564 = vpop.permute.xlu0 %1563
      %1566 = vset.pattern.permute.xlu0 7
      %1567 = vperm.xlu0 %1566, %v569
      %v1568 = vpop.permute.xlu0 %1567
      %1570 = vset.pattern.permute.xlu0 7
      %1571 = vperm.xlu0 %1570, %v570
      %v1572 = vpop.permute.xlu0 %1571
      %1574 = vset.pattern.permute.xlu0 7
      %1575 = vperm.xlu0 %1574, %v571
      %v1576 = vpop.permute.xlu0 %1575
      %1578 = vset.pattern.permute.xlu0 7
      %1579 = vperm.xlu0 %1578, %v572
      %v1580 = vpop.permute.xlu0 %1579
      %1582 = vset.pattern.permute.xlu0 7
      %1583 = vperm.xlu0 %1582, %v573
      %v1584 = vpop.permute.xlu0 %1583
      %v1586 = vmul.f32 %v778, %v1524
      %v1587 = vmul.f32 %v779, %v1528
      %v1588 = vmul.f32 %v780, %v1532
      %v1589 = vmul.f32 %v781, %v1536
      %v1590 = vmul.f32 %v782, %v1540
      %v1591 = vmul.f32 %v783, %v1544
      %v1592 = vmul.f32 %v784, %v1548
      %v1593 = vmul.f32 %v785, %v1552
      %v1594 = vmul.f32 %v786, %v1556
      %v1595 = vmul.f32 %v787, %v1560
      %v1596 = vmul.f32 %v788, %v1564
      %v1597 = vmul.f32 %v789, %v1568
      %v1598 = vmul.f32 %v790, %v1572
      %v1599 = vmul.f32 %v791, %v1576
      %v1600 = vmul.f32 %v792, %v1580
      %v1601 = vmul.f32 %v777, %v1584
      %1602 = vset.pattern.permute.xlu0 8
      %1603 = vperm.xlu0 %1602, %v558
      %v1604 = vpop.permute.xlu0 %1603
      %1606 = vset.pattern.permute.xlu0 8
      %1607 = vperm.xlu0 %1606, %v559
      %v1608 = vpop.permute.xlu0 %1607
      %1610 = vset.pattern.permute.xlu0 8
      %1611 = vperm.xlu0 %1610, %v560
      %v1612 = vpop.permute.xlu0 %1611
      %1614 = vset.pattern.permute.xlu0 8
      %1615 = vperm.xlu0 %1614, %v561
      %v1616 = vpop.permute.xlu0 %1615
      %1618 = vset.pattern.permute.xlu0 8
      %1619 = vperm.xlu0 %1618, %v562
      %v1620 = vpop.permute.xlu0 %1619
      %1622 = vset.pattern.permute.xlu0 8
      %1623 = vperm.xlu0 %1622, %v563
      %v1624 = vpop.permute.xlu0 %1623
      %1626 = vset.pattern.permute.xlu0 8
      %1627 = vperm.xlu0 %1626, %v564
      %v1628 = vpop.permute.xlu0 %1627
      %1630 = vset.pattern.permute.xlu0 8
      %1631 = vperm.xlu0 %1630, %v565
      %v1632 = vpop.permute.xlu0 %1631
      %1634 = vset.pattern.permute.xlu0 8
      %1635 = vperm.xlu0 %1634, %v566
      %v1636 = vpop.permute.xlu0 %1635
      %1638 = vset.pattern.permute.xlu0 8
      %1639 = vperm.xlu0 %1638, %v567
      %v1640 = vpop.permute.xlu0 %1639
      %1642 = vset.pattern.permute.xlu0 8
      %1643 = vperm.xlu0 %1642, %v568
      %v1644 = vpop.permute.xlu0 %1643
      %1646 = vset.pattern.permute.xlu0 8
      %1647 = vperm.xlu0 %1646, %v569
      %v1648 = vpop.permute.xlu0 %1647
      %1650 = vset.pattern.permute.xlu0 8
      %1651 = vperm.xlu0 %1650, %v570
      %v1652 = vpop.permute.xlu0 %1651
      %1654 = vset.pattern.permute.xlu0 8
      %1655 = vperm.xlu0 %1654, %v571
      %v1656 = vpop.permute.xlu0 %1655
      %1658 = vset.pattern.permute.xlu0 8
      %1659 = vperm.xlu0 %1658, %v572
      %v1660 = vpop.permute.xlu0 %1659
      %1662 = vset.pattern.permute.xlu0 8
      %1663 = vperm.xlu0 %1662, %v573
      %v1664 = vpop.permute.xlu0 %1663
      %v1666 = vmul.f32 %v1079, %v1604
      %v1667 = vmul.f32 %v1081, %v1608
      %v1668 = vmul.f32 %v1083, %v1612
      %v1669 = vmul.f32 %v1085, %v1616
      %v1670 = vmul.f32 %v1087, %v1620
      %v1671 = vmul.f32 %v1089, %v1624
      %v1672 = vmul.f32 %v1091, %v1628
      %v1673 = vmul.f32 %v1093, %v1632
      %v1674 = vmul.f32 %v1095, %v1636
      %v1675 = vmul.f32 %v1097, %v1640
      %v1676 = vmul.f32 %v1099, %v1644
      %v1677 = vmul.f32 %v1101, %v1648
      %v1678 = vmul.f32 %v1103, %v1652
      %v1679 = vmul.f32 %v1104, %v1656
      %v1680 = vmul.f32 %v1121, %v1660
      %v1681 = vmul.f32 %v1077, %v1664
      %1698 = vrot.lane.b32.xlu0 %v1056, 32
      %v1699 = vpop.permute.xlu0 %1698
      %1700 = vrot.lane.b32.xlu0 %v1057, 32
      %v1701 = vpop.permute.xlu0 %1700
      %1702 = vrot.lane.b32.xlu0 %v1058, 32
      %v1703 = vpop.permute.xlu0 %1702
      %1704 = vrot.lane.b32.xlu0 %v1059, 32
      %v1705 = vpop.permute.xlu0 %1704
      %1706 = vrot.lane.b32.xlu0 %v1060, 32
      %v1707 = vpop.permute.xlu0 %1706
      %1708 = vrot.lane.b32.xlu0 %v1061, 32
      %v1709 = vpop.permute.xlu0 %1708
      %1710 = vrot.lane.b32.xlu0 %v1062, 32
      %v1711 = vpop.permute.xlu0 %1710
      %1712 = vrot.lane.b32.xlu0 %v1063, 32
      %v1713 = vpop.permute.xlu0 %1712
      %1714 = vrot.lane.b32.xlu0 %v1064, 32
      %v1715 = vpop.permute.xlu0 %1714
      %1716 = vrot.lane.b32.xlu0 %v1065, 32
      %v1717 = vpop.permute.xlu0 %1716
      %1718 = vrot.lane.b32.xlu0 %v1066, 32
      %v1719 = vpop.permute.xlu0 %1718
      %1720 = vrot.lane.b32.xlu0 %v1067, 32
      %v1721 = vpop.permute.xlu0 %1720
      %1722 = vrot.lane.b32.xlu0 %v1068, 32
      %v1723 = vpop.permute.xlu0 %1722
      %1724 = vrot.lane.b32.xlu0 %v1069, 32
      %v1725 = vpop.permute.xlu0 %1724
      %1726 = vrot.lane.b32.xlu0 %v1070, 32
      %v1727 = vpop.permute.xlu0 %1726
      %1728 = vrot.lane.b32.xlu0 %v1071, 32
      %v1729 = vpop.permute.xlu0 %1728
      %1762 = vrot.lane.b32.xlu0 %v1186, 64
      %v1763 = vpop.permute.xlu0 %1762
      %1764 = vrot.lane.b32.xlu0 %v1187, 64
      %v1765 = vpop.permute.xlu0 %1764
      %1766 = vrot.lane.b32.xlu0 %v1188, 64
      %v1767 = vpop.permute.xlu0 %1766
      %1768 = vrot.lane.b32.xlu0 %v1189, 64
      %v1769 = vpop.permute.xlu0 %1768
      %1770 = vrot.lane.b32.xlu0 %v1190, 64
      %v1771 = vpop.permute.xlu0 %1770
      %1772 = vrot.lane.b32.xlu0 %v1191, 64
      %v1773 = vpop.permute.xlu0 %1772
      %1774 = vrot.lane.b32.xlu0 %v1192, 64
      %v1775 = vpop.permute.xlu0 %1774
      %1776 = vrot.lane.b32.xlu0 %v1193, 64
      %v1777 = vpop.permute.xlu0 %1776
      %1778 = vrot.lane.b32.xlu0 %v1194, 64
      %v1779 = vpop.permute.xlu0 %1778
      %1780 = vrot.lane.b32.xlu0 %v1195, 64
      %v1781 = vpop.permute.xlu0 %1780
      %1782 = vrot.lane.b32.xlu0 %v1196, 64
      %v1783 = vpop.permute.xlu0 %1782
      %1784 = vrot.lane.b32.xlu0 %v1197, 64
      %v1785 = vpop.permute.xlu0 %1784
      %1786 = vrot.lane.b32.xlu0 %v1198, 64
      %v1787 = vpop.permute.xlu0 %1786
      %1788 = vrot.lane.b32.xlu0 %v1199, 64
      %v1789 = vpop.permute.xlu0 %1788
      %1790 = vrot.lane.b32.xlu0 %v1200, 64
      %v1791 = vpop.permute.xlu0 %1790
      %1792 = vrot.lane.b32.xlu0 %v1201, 64
      %v1793 = vpop.permute.xlu0 %1792
      %1826 = vrot.lane.b32.xlu0 %v1266, 96
      %v1827 = vpop.permute.xlu0 %1826
      %1828 = vrot.lane.b32.xlu0 %v1267, 96
      %v1829 = vpop.permute.xlu0 %1828
      %1830 = vrot.lane.b32.xlu0 %v1268, 96
      %v1831 = vpop.permute.xlu0 %1830
      %1832 = vrot.lane.b32.xlu0 %v1269, 96
      %v1833 = vpop.permute.xlu0 %1832
      %1834 = vrot.lane.b32.xlu0 %v1270, 96
      %v1835 = vpop.permute.xlu0 %1834
      %1836 = vrot.lane.b32.xlu0 %v1271, 96
      %v1837 = vpop.permute.xlu0 %1836
      %1838 = vrot.lane.b32.xlu0 %v1272, 96
      %v1839 = vpop.permute.xlu0 %1838
      %1840 = vrot.lane.b32.xlu0 %v1273, 96
      %v1841 = vpop.permute.xlu0 %1840
      %1842 = vrot.lane.b32.xlu0 %v1274, 96
      %v1843 = vpop.permute.xlu0 %1842
      %1844 = vrot.lane.b32.xlu0 %v1275, 96
      %v1845 = vpop.permute.xlu0 %1844
      %1846 = vrot.lane.b32.xlu0 %v1276, 96
      %v1847 = vpop.permute.xlu0 %1846
      %1848 = vrot.lane.b32.xlu0 %v1277, 96
      %v1849 = vpop.permute.xlu0 %1848
      %1850 = vrot.lane.b32.xlu0 %v1278, 96
      %v1851 = vpop.permute.xlu0 %1850
      %1852 = vrot.lane.b32.xlu0 %v1279, 96
      %v1853 = vpop.permute.xlu0 %1852
      %1854 = vrot.lane.b32.xlu0 %v1280, 96
      %v1855 = vpop.permute.xlu0 %1854
      %1856 = vrot.lane.b32.xlu0 %v1281, 96
      %v1857 = vpop.permute.xlu0 %1856
      %1890 = vrot.lane.b32.xlu0 %v1426, 32
      %v1891 = vpop.permute.xlu0 %1890
      %1892 = vrot.lane.b32.xlu0 %v1427, 32
      %v1893 = vpop.permute.xlu0 %1892
      %1894 = vrot.lane.b32.xlu0 %v1428, 32
      %v1895 = vpop.permute.xlu0 %1894
      %1896 = vrot.lane.b32.xlu0 %v1429, 32
      %v1897 = vpop.permute.xlu0 %1896
      %1898 = vrot.lane.b32.xlu0 %v1430, 32
      %v1899 = vpop.permute.xlu0 %1898
      %1900 = vrot.lane.b32.xlu0 %v1431, 32
      %v1901 = vpop.permute.xlu0 %1900
      %1902 = vrot.lane.b32.xlu0 %v1432, 32
      %v1903 = vpop.permute.xlu0 %1902
      %1904 = vrot.lane.b32.xlu0 %v1433, 32
      %v1905 = vpop.permute.xlu0 %1904
      %1906 = vrot.lane.b32.xlu0 %v1434, 32
      %v1907 = vpop.permute.xlu0 %1906
      %1908 = vrot.lane.b32.xlu0 %v1435, 32
      %v1909 = vpop.permute.xlu0 %1908
      %1910 = vrot.lane.b32.xlu0 %v1436, 32
      %v1911 = vpop.permute.xlu0 %1910
      %1912 = vrot.lane.b32.xlu0 %v1437, 32
      %v1913 = vpop.permute.xlu0 %1912
      %1914 = vrot.lane.b32.xlu0 %v1438, 32
      %v1915 = vpop.permute.xlu0 %1914
      %1916 = vrot.lane.b32.xlu0 %v1439, 32
      %v1917 = vpop.permute.xlu0 %1916
      %1918 = vrot.lane.b32.xlu0 %v1440, 32
      %v1919 = vpop.permute.xlu0 %1918
      %1920 = vrot.lane.b32.xlu0 %v1441, 32
      %v1921 = vpop.permute.xlu0 %1920
      %1954 = vrot.lane.b32.xlu0 %v1506, 64
      %v1955 = vpop.permute.xlu0 %1954
      %1956 = vrot.lane.b32.xlu0 %v1507, 64
      %v1957 = vpop.permute.xlu0 %1956
      %1958 = vrot.lane.b32.xlu0 %v1508, 64
      %v1959 = vpop.permute.xlu0 %1958
      %1960 = vrot.lane.b32.xlu0 %v1509, 64
      %v1961 = vpop.permute.xlu0 %1960
      %1962 = vrot.lane.b32.xlu0 %v1510, 64
      %v1963 = vpop.permute.xlu0 %1962
      %1964 = vrot.lane.b32.xlu0 %v1511, 64
      %v1965 = vpop.permute.xlu0 %1964
      %1966 = vrot.lane.b32.xlu0 %v1512, 64
      %v1967 = vpop.permute.xlu0 %1966
      %1968 = vrot.lane.b32.xlu0 %v1513, 64
      %v1969 = vpop.permute.xlu0 %1968
      %1970 = vrot.lane.b32.xlu0 %v1514, 64
      %v1971 = vpop.permute.xlu0 %1970
      %1972 = vrot.lane.b32.xlu0 %v1515, 64
      %v1973 = vpop.permute.xlu0 %1972
      %1974 = vrot.lane.b32.xlu0 %v1516, 64
      %v1975 = vpop.permute.xlu0 %1974
      %1976 = vrot.lane.b32.xlu0 %v1517, 64
      %v1977 = vpop.permute.xlu0 %1976
      %1978 = vrot.lane.b32.xlu0 %v1518, 64
      %v1979 = vpop.permute.xlu0 %1978
      %1980 = vrot.lane.b32.xlu0 %v1519, 64
      %v1981 = vpop.permute.xlu0 %1980
      %1982 = vrot.lane.b32.xlu0 %v1520, 64
      %v1983 = vpop.permute.xlu0 %1982
      %1984 = vrot.lane.b32.xlu0 %v1521, 64
      %v1985 = vpop.permute.xlu0 %1984
      %2018 = vrot.lane.b32.xlu0 %v1586, 96
      %v2019 = vpop.permute.xlu0 %2018
      %2020 = vrot.lane.b32.xlu0 %v1587, 96
      %v2021 = vpop.permute.xlu0 %2020
      %2022 = vrot.lane.b32.xlu0 %v1588, 96
      %v2023 = vpop.permute.xlu0 %2022
      %2024 = vrot.lane.b32.xlu0 %v1589, 96
      %v2025 = vpop.permute.xlu0 %2024
      %2026 = vrot.lane.b32.xlu0 %v1590, 96
      %v2027 = vpop.permute.xlu0 %2026
      %2028 = vrot.lane.b32.xlu0 %v1591, 96
      %v2029 = vpop.permute.xlu0 %2028
      %2030 = vrot.lane.b32.xlu0 %v1592, 96
      %v2031 = vpop.permute.xlu0 %2030
      %2032 = vrot.lane.b32.xlu0 %v1593, 96
      %v2033 = vpop.permute.xlu0 %2032
      %2034 = vrot.lane.b32.xlu0 %v1594, 96
      %v2035 = vpop.permute.xlu0 %2034
      %2036 = vrot.lane.b32.xlu0 %v1595, 96
      %v2037 = vpop.permute.xlu0 %2036
      %2038 = vrot.lane.b32.xlu0 %v1596, 96
      %v2039 = vpop.permute.xlu0 %2038
      %2040 = vrot.lane.b32.xlu0 %v1597, 96
      %v2041 = vpop.permute.xlu0 %2040
      %2042 = vrot.lane.b32.xlu0 %v1598, 96
      %v2043 = vpop.permute.xlu0 %2042
      %2044 = vrot.lane.b32.xlu0 %v1599, 96
      %v2045 = vpop.permute.xlu0 %2044
      %2046 = vrot.lane.b32.xlu0 %v1600, 96
      %v2047 = vpop.permute.xlu0 %2046
      %2048 = vrot.lane.b32.xlu0 %v1601, 96
      %v2049 = vpop.permute.xlu0 %2048
      %vm2066 = vcmask 261120
      %v2067 = vsel %vm2066, %v976, %v1699
      %v2068 = vsel %vm2066, %v977, %v1701
      %v2069 = vsel %vm2066, %v978, %v1703
      %v2070 = vsel %vm2066, %v979, %v1705
      %v2071 = vsel %vm2066, %v980, %v1707
      %v2072 = vsel %vm2066, %v981, %v1709
      %v2073 = vsel %vm2066, %v982, %v1711
      %v2074 = vsel %vm2066, %v983, %v1713
      %v2075 = vsel %vm2066, %v984, %v1715
      %v2076 = vsel %vm2066, %v985, %v1717
      %v2077 = vsel %vm2066, %v986, %v1719
      %v2078 = vsel %vm2066, %v987, %v1721
      %v2079 = vsel %vm2066, %v988, %v1723
      %v2080 = vsel %vm2066, %v989, %v1725
      %v2081 = vsel %vm2066, %v990, %v1727
      %v2082 = vsel %vm2066, %v991, %v1729
      %vm2083 = vcmask 523264
      %v2084 = vsel %vm2083, %v2067, %v1763
      %v2085 = vsel %vm2083, %v2068, %v1765
      %v2086 = vsel %vm2083, %v2069, %v1767
      %v2087 = vsel %vm2083, %v2070, %v1769
      %v2088 = vsel %vm2083, %v2071, %v1771
      %v2089 = vsel %vm2083, %v2072, %v1773
      %v2090 = vsel %vm2083, %v2073, %v1775
      %v2091 = vsel %vm2083, %v2074, %v1777
      %v2092 = vsel %vm2083, %v2075, %v1779
      %v2093 = vsel %vm2083, %v2076, %v1781
      %v2094 = vsel %vm2083, %v2077, %v1783
      %v2095 = vsel %vm2083, %v2078, %v1785
      %v2096 = vsel %vm2083, %v2079, %v1787
      %v2097 = vsel %vm2083, %v2080, %v1789
      %v2098 = vsel %vm2083, %v2081, %v1791
      %v2099 = vsel %vm2083, %v2082, %v1793
      %vm2100 = vcmask 785408
      %v2101 = vsel %vm2100, %v2084, %v1827
      %v2102 = vsel %vm2100, %v2085, %v1829
      %v2103 = vsel %vm2100, %v2086, %v1831
      %v2104 = vsel %vm2100, %v2087, %v1833
      %v2105 = vsel %vm2100, %v2088, %v1835
      %v2106 = vsel %vm2100, %v2089, %v1837
      %v2107 = vsel %vm2100, %v2090, %v1839
      %v2108 = vsel %vm2100, %v2091, %v1841
      %v2109 = vsel %vm2100, %v2092, %v1843
      %v2110 = vsel %vm2100, %v2093, %v1845
      %v2111 = vsel %vm2100, %v2094, %v1847
      %v2112 = vsel %vm2100, %v2095, %v1849
      %v2113 = vsel %vm2100, %v2096, %v1851
      %v2114 = vsel %vm2100, %v2097, %v1853
      %v2115 = vsel %vm2100, %v2098, %v1855
      %v2116 = vsel %vm2100, %v2099, %v1857
      %v2117 = vsel %vm2066, %v1346, %v1891
      %v2118 = vsel %vm2066, %v1347, %v1893
      %v2119 = vsel %vm2066, %v1348, %v1895
      %v2120 = vsel %vm2066, %v1349, %v1897
      %v2121 = vsel %vm2066, %v1350, %v1899
      %v2122 = vsel %vm2066, %v1351, %v1901
      %v2123 = vsel %vm2066, %v1352, %v1903
      %v2124 = vsel %vm2066, %v1353, %v1905
      %v2125 = vsel %vm2066, %v1354, %v1907
      %v2126 = vsel %vm2066, %v1355, %v1909
      %v2127 = vsel %vm2066, %v1356, %v1911
      %v2128 = vsel %vm2066, %v1357, %v1913
      %v2129 = vsel %vm2066, %v1358, %v1915
      %v2130 = vsel %vm2066, %v1359, %v1917
      %v2131 = vsel %vm2066, %v1360, %v1919
      %v2132 = vsel %vm2066, %v1361, %v1921
      %v2133 = vsel %vm2083, %v2117, %v1955
      %v2134 = vsel %vm2083, %v2118, %v1957
      %v2135 = vsel %vm2083, %v2119, %v1959
      %v2136 = vsel %vm2083, %v2120, %v1961
      %v2137 = vsel %vm2083, %v2121, %v1963
      %v2138 = vsel %vm2083, %v2122, %v1965
      %v2139 = vsel %vm2083, %v2123, %v1967
      %v2140 = vsel %vm2083, %v2124, %v1969
      %v2141 = vsel %vm2083, %v2125, %v1971
      %v2142 = vsel %vm2083, %v2126, %v1973
      %v2143 = vsel %vm2083, %v2127, %v1975
      %v2144 = vsel %vm2083, %v2128, %v1977
      %v2145 = vsel %vm2083, %v2129, %v1979
      %v2146 = vsel %vm2083, %v2130, %v1981
      %v2147 = vsel %vm2083, %v2131, %v1983
      %v2148 = vsel %vm2083, %v2132, %v1985
      %v2149 = vsel %vm2100, %v2133, %v2019
      %v2150 = vsel %vm2100, %v2134, %v2021
      %v2151 = vsel %vm2100, %v2135, %v2023
      %v2152 = vsel %vm2100, %v2136, %v2025
      %v2153 = vsel %vm2100, %v2137, %v2027
      %v2154 = vsel %vm2100, %v2138, %v2029
      %v2155 = vsel %vm2100, %v2139, %v2031
      %v2156 = vsel %vm2100, %v2140, %v2033
      %v2157 = vsel %vm2100, %v2141, %v2035
      %v2158 = vsel %vm2100, %v2142, %v2037
      %v2159 = vsel %vm2100, %v2143, %v2039
      %v2160 = vsel %vm2100, %v2144, %v2041
      %v2161 = vsel %vm2100, %v2145, %v2043
      %v2162 = vsel %vm2100, %v2146, %v2045
      %v2163 = vsel %vm2100, %v2147, %v2047
      %v2164 = vsel %vm2100, %v2148, %v2049
      %v2165 = vpack.c.bf16 %v2102, %v2101
      %v2166 = vpack.c.bf16 %v2150, %v2149
      %v2167 = vpack.c.bf16 %v1667, %v1666
      %v2168 = vpack.c.bf16 %v2104, %v2103
      %v2169 = vpack.c.bf16 %v2152, %v2151
      %v2170 = vpack.c.bf16 %v1669, %v1668
      %v2171 = vpack.c.bf16 %v2106, %v2105
      %v2172 = vpack.c.bf16 %v2154, %v2153
      %v2173 = vpack.c.bf16 %v1671, %v1670
      %v2174 = vpack.c.bf16 %v2108, %v2107
      %v2175 = vpack.c.bf16 %v2156, %v2155
      %v2176 = vpack.c.bf16 %v1673, %v1672
      %v2177 = vpack.c.bf16 %v2110, %v2109
      %v2178 = vpack.c.bf16 %v2158, %v2157
      %v2179 = vpack.c.bf16 %v1675, %v1674
      %v2180 = vpack.c.bf16 %v2112, %v2111
      %v2181 = vpack.c.bf16 %v2160, %v2159
      %v2182 = vpack.c.bf16 %v1677, %v1676
      %v2183 = vpack.c.bf16 %v2114, %v2113
      %v2184 = vpack.c.bf16 %v2162, %v2161
      %v2185 = vpack.c.bf16 %v1679, %v1678
      %v2186 = vpack.c.bf16 %v2116, %v2115
      %v2187 = vpack.c.bf16 %v2164, %v2163
      %v2188 = vpack.c.bf16 %v1681, %v1680
      %v2190 = vperm.slane %v829, 0
      %v2228 = vunpack.c.l.b16 %v793
      %v2229 = vunpack.c.l.b16 %v794
      %v2230 = vunpack.c.l.b16 %v795
      %v2231 = vunpack.c.l.b16 %v796
      %v2232 = vunpack.c.l.b16 %v797
      %v2233 = vunpack.c.l.b16 %v798
      %v2234 = vunpack.c.l.b16 %v799
      %v2235 = vunpack.c.l.b16 %v800
      %v2236 = vunpack.c.l.b16 %v801
      %v2237 = vunpack.c.l.b16 %v802
      %v2238 = vunpack.c.l.b16 %v803
      %v2239 = vunpack.c.l.b16 %v804
      %v2240 = vunpack.c.l.b16 %v805
      %v2241 = vunpack.c.l.b16 %v806
      %v2242 = vunpack.c.l.b16 %v807
      %v2243 = vunpack.c.l.b16 %v808
      %v2244 = vunpack.c.l.b16 %v809
      %v2245 = vunpack.c.l.b16 %v810
      %v2246 = vunpack.c.l.b16 %v811
      %v2247 = vunpack.c.l.b16 %v812
      %v2248 = vunpack.c.l.b16 %v813
      %v2249 = vunpack.c.l.b16 %v814
      %v2250 = vunpack.c.l.b16 %v815
      %v2251 = vunpack.c.l.b16 %v816
      %v2252 = vunpack.c.l.b16 %v817
      %v2253 = vunpack.c.l.b16 %v818
      %v2254 = vunpack.c.l.b16 %v819
      %v2255 = vunpack.c.l.b16 %v820
      %v2256 = vunpack.c.l.b16 %v821
      %v2257 = vunpack.c.l.b16 %v822
      %v2258 = vunpack.c.l.b16 %v823
      %v2259 = vunpack.c.l.b16 %v824
      %v2260 = vunpack.c.l.b16 %v825
      %v2261 = vunpack.c.l.b16 %v826
      %v2262 = vunpack.c.l.b16 %v827
      %v2263 = vunpack.c.l.b16 %v828
      %v2264 = vpack.c.b16 %v2229, %v2228
      %v2265 = vpack.c.b16 %v2231, %v2230
      %v2266 = vpack.c.b16 %v2233, %v2232
      %v2267 = vpack.c.b16 %v2235, %v2234
      %v2268 = vpack.c.b16 %v2237, %v2236
      %v2269 = vpack.c.b16 %v2239, %v2238
      %v2270 = vpack.c.b16 %v2241, %v2240
      %v2271 = vpack.c.b16 %v2243, %v2242
      %v2272 = vpack.c.b16 %v2245, %v2244
      %v2273 = vpack.c.b16 %v2247, %v2246
      %v2274 = vpack.c.b16 %v2249, %v2248
      %v2275 = vpack.c.b16 %v2251, %v2250
      %v2276 = vpack.c.b16 %v2253, %v2252
      %v2277 = vpack.c.b16 %v2255, %v2254
      %v2278 = vpack.c.b16 %v2257, %v2256
      %v2279 = vpack.c.b16 %v2259, %v2258
      %v2280 = vpack.c.b16 %v2261, %v2260
      %v2281 = vpack.c.b16 %v2263, %v2262
      %v2301 = vsel %vm2066, %v2167, 0
      %v2304 = vsel %vm2066, %v2170, 0
      %v2307 = vsel %vm2066, %v2173, 0
      %v2310 = vsel %vm2066, %v2176, 0
      %v2313 = vsel %vm2066, %v2179, 0
      %v2316 = vsel %vm2066, %v2182, 0
      %v2319 = vsel %vm2066, %v2185, 0
      %v2322 = vsel %vm2066, %v2188, 0
      %2324 = vmatpush.bf16.msra.mxu0 %v2271
      %2325 = vmatpush.bf16.msra.mxu0 %v2270
      %2326 = vmatpush.bf16.msra.mxu0 %v2269
      %2327 = vmatpush.bf16.msra.mxu0 %v2268
      %2328 = vmatpush.bf16.msra.mxu0 %v2267
      %2329 = vmatpush.bf16.msra.mxu0 %v2266
      %2330 = vmatpush.bf16.msra.mxu0 %v2265
      %2331 = vmatpush.bf16.msra.mxu0 %v2264
      %2332 = vmatmul.bf16.gmra.mxu0 %v2165
      %v2333 = vpop.f32.mrf.mxu0
      %v2334 = vadd.f32 %v2190, %v2333
      %v2335 = vpop.f32.mrf.mxu0
      %v2336 = vadd.f32 %v2190, %v2335
      %2337 = vmatmul.bf16.gmra.mxu0 %v2168
      %v2338 = vpop.f32.mrf.mxu0
      %v2339 = vadd.f32 %v2190, %v2338
      %v2340 = vpop.f32.mrf.mxu0
      %v2341 = vadd.f32 %v2190, %v2340
      %2342 = vmatmul.bf16.gmra.mxu0 %v2171
      %v2343 = vpop.f32.mrf.mxu0
      %v2344 = vadd.f32 %v2190, %v2343
      %v2345 = vpop.f32.mrf.mxu0
      %v2346 = vadd.f32 %v2190, %v2345
      %2347 = vmatmul.bf16.gmra.mxu0 %v2174
      %v2348 = vpop.f32.mrf.mxu0
      %v2349 = vadd.f32 %v2190, %v2348
      %v2350 = vpop.f32.mrf.mxu0
      %v2351 = vadd.f32 %v2190, %v2350
      %2352 = vmatmul.bf16.gmra.mxu0 %v2177
      %v2353 = vpop.f32.mrf.mxu0
      %v2354 = vadd.f32 %v2190, %v2353
      %v2355 = vpop.f32.mrf.mxu0
      %v2356 = vadd.f32 %v2190, %v2355
      %2357 = vmatmul.bf16.gmra.mxu0 %v2180
      %v2358 = vpop.f32.mrf.mxu0
      %v2359 = vadd.f32 %v2190, %v2358
      %v2360 = vpop.f32.mrf.mxu0
      %v2361 = vadd.f32 %v2190, %v2360
      %2362 = vmatmul.bf16.gmra.mxu0 %v2183
      %v2363 = vpop.f32.mrf.mxu0
      %v2364 = vadd.f32 %v2190, %v2363
      %v2365 = vpop.f32.mrf.mxu0
      %v2366 = vadd.f32 %v2190, %v2365
      %2367 = vmatmul.bf16.gmra.mxu0 %v2186
      %v2368 = vpop.f32.mrf.mxu0
      %v2369 = vadd.f32 %v2190, %v2368
      %v2370 = vpop.f32.mrf.mxu0
      %v2371 = vadd.f32 %v2190, %v2370
      %2372 = vdwg.mxu0
      %2373 = vmatpush.bf16.msra.mxu0 %v2279
      %2374 = vmatpush.bf16.msra.mxu0 %v2278
      %2375 = vmatpush.bf16.msra.mxu0 %v2277
      %2376 = vmatpush.bf16.msra.mxu0 %v2276
      %2377 = vmatpush.bf16.msra.mxu0 %v2275
      %2378 = vmatpush.bf16.msra.mxu0 %v2274
      %2379 = vmatpush.bf16.msra.mxu0 %v2273
      %2380 = vmatpush.bf16.msra.mxu0 %v2272
      %2381 = vmatmul.bf16.gmra.mxu0 %v2166
      %v2382 = vpop.f32.mrf.mxu0
      %v2383 = vadd.f32 %v2334, %v2382
      %v2384 = vpop.f32.mrf.mxu0
      %v2385 = vadd.f32 %v2336, %v2384
      %2386 = vmatmul.bf16.gmra.mxu0 %v2169
      %v2387 = vpop.f32.mrf.mxu0
      %v2388 = vadd.f32 %v2339, %v2387
      %v2389 = vpop.f32.mrf.mxu0
      %v2390 = vadd.f32 %v2341, %v2389
      %2391 = vmatmul.bf16.gmra.mxu0 %v2172
      %v2392 = vpop.f32.mrf.mxu0
      %v2393 = vadd.f32 %v2344, %v2392
      %v2394 = vpop.f32.mrf.mxu0
      %v2395 = vadd.f32 %v2346, %v2394
      %2396 = vmatmul.bf16.gmra.mxu0 %v2175
      %v2397 = vpop.f32.mrf.mxu0
      %v2398 = vadd.f32 %v2349, %v2397
      %v2399 = vpop.f32.mrf.mxu0
      %v2400 = vadd.f32 %v2351, %v2399
      %2401 = vmatmul.bf16.gmra.mxu0 %v2178
      %v2402 = vpop.f32.mrf.mxu0
      %v2403 = vadd.f32 %v2354, %v2402
      %v2404 = vpop.f32.mrf.mxu0
      %v2405 = vadd.f32 %v2356, %v2404
      %2406 = vmatmul.bf16.gmra.mxu0 %v2181
      %v2407 = vpop.f32.mrf.mxu0
      %v2408 = vadd.f32 %v2359, %v2407
      %v2409 = vpop.f32.mrf.mxu0
      %v2410 = vadd.f32 %v2361, %v2409
      %2411 = vmatmul.bf16.gmra.mxu0 %v2184
      %v2412 = vpop.f32.mrf.mxu0
      %v2413 = vadd.f32 %v2364, %v2412
      %v2414 = vpop.f32.mrf.mxu0
      %v2415 = vadd.f32 %v2366, %v2414
      %2416 = vmatmul.bf16.gmra.mxu0 %v2187
      %v2417 = vpop.f32.mrf.mxu0
      %v2418 = vadd.f32 %v2369, %v2417
      %v2419 = vpop.f32.mrf.mxu0
      %v2420 = vadd.f32 %v2371, %v2419
      %2421 = vdwg.mxu0
      %2422 = vmatpush.bf16.msra.mxu0 0
      %2423 = vmatpush.bf16.msra.mxu0 0
      %2424 = vmatpush.bf16.msra.mxu0 0
      %2425 = vmatpush.bf16.msra.mxu0 0
      %2426 = vmatpush.bf16.msra.mxu0 0
      %2427 = vmatpush.bf16.msra.mxu0 0
      %2428 = vmatpush.bf16.msra.mxu0 %v2281
      %2429 = vmatpush.bf16.msra.mxu0 %v2280
      %2430 = vmatmul.bf16.gmra.mxu0 %v2301
      %v2431 = vpop.f32.mrf.mxu0
      %v2432 = vadd.f32 %v2383, %v2431
      %v2433 = vpop.f32.mrf.mxu0
      %v2434 = vadd.f32 %v2385, %v2433
      %2435 = vmatmul.bf16.gmra.mxu0 %v2304
      %v2436 = vpop.f32.mrf.mxu0
      %v2437 = vadd.f32 %v2388, %v2436
      %v2438 = vpop.f32.mrf.mxu0
      %v2439 = vadd.f32 %v2390, %v2438
      %2440 = vmatmul.bf16.gmra.mxu0 %v2307
      %v2441 = vpop.f32.mrf.mxu0
      %v2442 = vadd.f32 %v2393, %v2441
      %v2443 = vpop.f32.mrf.mxu0
      %v2444 = vadd.f32 %v2395, %v2443
      %2445 = vmatmul.bf16.gmra.mxu0 %v2310
      %v2446 = vpop.f32.mrf.mxu0
      %v2447 = vadd.f32 %v2398, %v2446
      %v2448 = vpop.f32.mrf.mxu0
      %v2449 = vadd.f32 %v2400, %v2448
      %2450 = vmatmul.bf16.gmra.mxu0 %v2313
      %v2451 = vpop.f32.mrf.mxu0
      %v2452 = vadd.f32 %v2403, %v2451
      %v2453 = vpop.f32.mrf.mxu0
      %v2454 = vadd.f32 %v2405, %v2453
      %2455 = vmatmul.bf16.gmra.mxu0 %v2316
      %v2456 = vpop.f32.mrf.mxu0
      %v2457 = vadd.f32 %v2408, %v2456
      %v2458 = vpop.f32.mrf.mxu0
      %v2459 = vadd.f32 %v2410, %v2458
      %2460 = vmatmul.bf16.gmra.mxu0 %v2319
      %v2461 = vpop.f32.mrf.mxu0
      %v2462 = vadd.f32 %v2413, %v2461
      %v2463 = vpop.f32.mrf.mxu0
      %v2464 = vadd.f32 %v2415, %v2463
      %2465 = vmatmul.bf16.gmra.mxu0 %v2322
      %v2466 = vpop.f32.mrf.mxu0
      %v2467 = vadd.f32 %v2418, %v2466
      %v2468 = vpop.f32.mrf.mxu0
      %v2469 = vadd.f32 %v2420, %v2468
      %2470 = vdwg.mxu0
      %v2471 = vld [vmem:[%s539] sm:$0x1]
      %v2472 = vld [vmem:[%s542] sm:$0x1]
      %v2473 = vsel %vm2066, %v2432, 0.0
      %v2474 = vsel %vm2066, %v2434, 0.0
      %v2475 = vadd.f32 %v2473, %v2474
      %v2476 = vsel %vm2066, %v2437, 0.0
      %v2477 = vadd.f32 %v2475, %v2476
      %v2478 = vsel %vm2066, %v2439, 0.0
      %v2479 = vadd.f32 %v2477, %v2478
      %v2480 = vsel %vm2066, %v2442, 0.0
      %v2481 = vadd.f32 %v2479, %v2480
      %v2482 = vsel %vm2066, %v2444, 0.0
      %v2483 = vadd.f32 %v2481, %v2482
      %v2484 = vsel %vm2066, %v2447, 0.0
      %v2485 = vadd.f32 %v2483, %v2484
      %v2486 = vsel %vm2066, %v2449, 0.0
      %v2487 = vadd.f32 %v2485, %v2486
      %v2488 = vsel %vm2066, %v2452, 0.0
      %v2489 = vadd.f32 %v2487, %v2488
      %v2490 = vsel %vm2066, %v2454, 0.0
      %v2491 = vadd.f32 %v2489, %v2490
      %v2492 = vsel %vm2066, %v2457, 0.0
      %v2493 = vadd.f32 %v2491, %v2492
      %v2494 = vsel %vm2066, %v2459, 0.0
      %v2495 = vadd.f32 %v2493, %v2494
      %v2496 = vsel %vm2066, %v2462, 0.0
      %v2497 = vadd.f32 %v2495, %v2496
      %v2498 = vsel %vm2066, %v2464, 0.0
      %v2499 = vadd.f32 %v2497, %v2498
      %v2500 = vsel %vm2066, %v2467, 0.0
      %v2501 = vadd.f32 %v2499, %v2500
      %v2502 = vsel %vm2066, %v2469, 0.0
      %v2503 = vadd.f32 %v2501, %v2502
      %v2504 = vrot.slane %v2503, 4
      %v2505 = vadd.f32 %v2503, %v2504
      %v2506 = vrot.slane %v2505, 2
      %v2507 = vadd.f32 %v2505, %v2506
      %v2508 = vrot.slane %v2507, 1
      %v2509 = vadd.f32 %v2507, %v2508
      %v2510 = vrcp.pop 128.0
      %v2511 = vmul.f32 128.0, %v2510
      %v2512 = vsub.f32 1.0, %v2511
      %v2513 = vmul.f32 %v2510, %v2512
      %v2514 = vadd.f32 %v2510, %v2513
      %vm2515 = vweird.f32 %v2510
      %v2516 = vsel %vm2515, %v2510, %v2514
      %v2517 = vmul.f32 %v2509, %v2516
      %v2518 = vsub.f32 %v2432, %v2517
      %v2519 = vsub.f32 %v2434, %v2517
      %v2520 = vsub.f32 %v2437, %v2517
      %v2521 = vsub.f32 %v2439, %v2517
      %v2522 = vsub.f32 %v2442, %v2517
      %v2523 = vsub.f32 %v2444, %v2517
      %v2524 = vsub.f32 %v2447, %v2517
      %v2525 = vsub.f32 %v2449, %v2517
      %v2526 = vsub.f32 %v2452, %v2517
      %v2527 = vsub.f32 %v2454, %v2517
      %v2528 = vsub.f32 %v2457, %v2517
      %v2529 = vsub.f32 %v2459, %v2517
      %v2530 = vsub.f32 %v2462, %v2517
      %v2531 = vsub.f32 %v2464, %v2517
      %v2532 = vsub.f32 %v2467, %v2517
      %v2533 = vsub.f32 %v2469, %v2517
      %v2534 = vmul.f32 %v2518, %v2518
      %v2535 = vmul.f32 %v2519, %v2519
      %v2536 = vmul.f32 %v2520, %v2520
      %v2537 = vmul.f32 %v2521, %v2521
      %v2538 = vmul.f32 %v2522, %v2522
      %v2539 = vmul.f32 %v2523, %v2523
      %v2540 = vmul.f32 %v2524, %v2524
      %v2541 = vmul.f32 %v2525, %v2525
      %v2542 = vmul.f32 %v2526, %v2526
      %v2543 = vmul.f32 %v2527, %v2527
      %v2544 = vmul.f32 %v2528, %v2528
      %v2545 = vmul.f32 %v2529, %v2529
      %v2546 = vmul.f32 %v2530, %v2530
      %v2547 = vmul.f32 %v2531, %v2531
      %v2548 = vmul.f32 %v2532, %v2532
      %v2549 = vmul.f32 %v2533, %v2533
      %v2550 = vsel %vm2066, %v2534, 0.0
      %v2551 = vsel %vm2066, %v2535, 0.0
      %v2552 = vadd.f32 %v2550, %v2551
      %v2553 = vsel %vm2066, %v2536, 0.0
      %v2554 = vadd.f32 %v2552, %v2553
      %v2555 = vsel %vm2066, %v2537, 0.0
      %v2556 = vadd.f32 %v2554, %v2555
      %v2557 = vsel %vm2066, %v2538, 0.0
      %v2558 = vadd.f32 %v2556, %v2557
      %v2559 = vsel %vm2066, %v2539, 0.0
      %v2560 = vadd.f32 %v2558, %v2559
      %v2561 = vsel %vm2066, %v2540, 0.0
      %v2562 = vadd.f32 %v2560, %v2561
      %v2563 = vsel %vm2066, %v2541, 0.0
      %v2564 = vadd.f32 %v2562, %v2563
      %v2565 = vsel %vm2066, %v2542, 0.0
      %v2566 = vadd.f32 %v2564, %v2565
      %v2567 = vsel %vm2066, %v2543, 0.0
      %v2568 = vadd.f32 %v2566, %v2567
      %v2569 = vsel %vm2066, %v2544, 0.0
      %v2570 = vadd.f32 %v2568, %v2569
      %v2571 = vsel %vm2066, %v2545, 0.0
      %v2572 = vadd.f32 %v2570, %v2571
      %v2573 = vsel %vm2066, %v2546, 0.0
      %v2574 = vadd.f32 %v2572, %v2573
      %v2575 = vsel %vm2066, %v2547, 0.0
      %v2576 = vadd.f32 %v2574, %v2575
      %v2577 = vsel %vm2066, %v2548, 0.0
      %v2578 = vadd.f32 %v2576, %v2577
      %v2579 = vsel %vm2066, %v2549, 0.0
      %v2580 = vadd.f32 %v2578, %v2579
      %v2581 = vrot.slane %v2580, 4
      %v2582 = vadd.f32 %v2580, %v2581
      %v2583 = vrot.slane %v2582, 2
      %v2584 = vadd.f32 %v2582, %v2583
      %v2585 = vrot.slane %v2584, 1
      %v2586 = vadd.f32 %v2584, %v2585
      %v2587 = vmul.f32 %v2586, %v2516
      %v2588 = vadd.f32 %v2587, 1e-05
      %v2589 = vrsqrt.pop %v2588
      %v2590 = vmul.f32 %v2589, %v2588
      %v2591 = vmul.f32 %v2590, %v2589
      %v2592 = vmul.f32 0.5, %v2591
      %v2593 = vsub.f32 1.5, %v2592
      %v2594 = vmul.f32 %v2589, %v2593
      %vm2595 = vweird.f32 %v2588
      %vm2596 = vweird.f32 %v2589
      %vm2597 = vmor %vm2595, %vm2596
      %v2598 = vsel %vm2597, %v2589, %v2594
      %v2599 = vmul.f32 %v2518, %v2598
      %v2600 = vmul.f32 %v2519, %v2598
      %v2601 = vmul.f32 %v2520, %v2598
      %v2602 = vmul.f32 %v2521, %v2598
      %v2603 = vmul.f32 %v2522, %v2598
      %v2604 = vmul.f32 %v2523, %v2598
      %v2605 = vmul.f32 %v2524, %v2598
      %v2606 = vmul.f32 %v2525, %v2598
      %v2607 = vmul.f32 %v2526, %v2598
      %v2608 = vmul.f32 %v2527, %v2598
      %v2609 = vmul.f32 %v2528, %v2598
      %v2610 = vmul.f32 %v2529, %v2598
      %v2611 = vmul.f32 %v2530, %v2598
      %v2612 = vmul.f32 %v2531, %v2598
      %v2613 = vmul.f32 %v2532, %v2598
      %v2614 = vmul.f32 %v2533, %v2598
      %v2616 = vperm.slane %v2471, 0
      %v2618 = vmul.f32 %v2599, %v2616
      %v2619 = vmul.f32 %v2600, %v2616
      %v2620 = vmul.f32 %v2601, %v2616
      %v2621 = vmul.f32 %v2602, %v2616
      %v2622 = vmul.f32 %v2603, %v2616
      %v2623 = vmul.f32 %v2604, %v2616
      %v2624 = vmul.f32 %v2605, %v2616
      %v2625 = vmul.f32 %v2606, %v2616
      %v2626 = vmul.f32 %v2607, %v2616
      %v2627 = vmul.f32 %v2608, %v2616
      %v2628 = vmul.f32 %v2609, %v2616
      %v2629 = vmul.f32 %v2610, %v2616
      %v2630 = vmul.f32 %v2611, %v2616
      %v2631 = vmul.f32 %v2612, %v2616
      %v2632 = vmul.f32 %v2613, %v2616
      %v2633 = vmul.f32 %v2614, %v2616
      %v2635 = vperm.slane %v2472, 0
      %v2637 = vadd.f32 %v2618, %v2635
      %v2638 = vadd.f32 %v2619, %v2635
      %v2639 = vadd.f32 %v2620, %v2635
      %v2640 = vadd.f32 %v2621, %v2635
      %v2641 = vadd.f32 %v2622, %v2635
      %v2642 = vadd.f32 %v2623, %v2635
      %v2643 = vadd.f32 %v2624, %v2635
      %v2644 = vadd.f32 %v2625, %v2635
      %v2645 = vadd.f32 %v2626, %v2635
      %v2646 = vadd.f32 %v2627, %v2635
      %v2647 = vadd.f32 %v2628, %v2635
      %v2648 = vadd.f32 %v2629, %v2635
      %v2649 = vadd.f32 %v2630, %v2635
      %v2650 = vadd.f32 %v2631, %v2635
      %v2651 = vadd.f32 %v2632, %v2635
      %v2652 = vadd.f32 %v2633, %v2635
      %vm2653 = vcmp.gt.f32.partialorder %v2637, 0.0
      %vm2654 = vcmp.gt.f32.partialorder %v2638, 0.0
      %vm2655 = vcmp.gt.f32.partialorder %v2639, 0.0
      %vm2656 = vcmp.gt.f32.partialorder %v2640, 0.0
      %vm2657 = vcmp.gt.f32.partialorder %v2641, 0.0
      %vm2658 = vcmp.gt.f32.partialorder %v2642, 0.0
      %vm2659 = vcmp.gt.f32.partialorder %v2643, 0.0
      %vm2660 = vcmp.gt.f32.partialorder %v2644, 0.0
      %vm2661 = vcmp.gt.f32.partialorder %v2645, 0.0
      %vm2662 = vcmp.gt.f32.partialorder %v2646, 0.0
      %vm2663 = vcmp.gt.f32.partialorder %v2647, 0.0
      %vm2664 = vcmp.gt.f32.partialorder %v2648, 0.0
      %vm2665 = vcmp.gt.f32.partialorder %v2649, 0.0
      %vm2666 = vcmp.gt.f32.partialorder %v2650, 0.0
      %vm2667 = vcmp.gt.f32.partialorder %v2651, 0.0
      %vm2668 = vcmp.gt.f32.partialorder %v2652, 0.0
      %v2669 = vmul.f32 %v2637, 1.442695
      %v2670 = vpow.pop %v2669
      %v2671 = vmul.f32 %v2638, 1.442695
      %v2672 = vpow.pop %v2671
      %v2673 = vmul.f32 %v2639, 1.442695
      %v2674 = vpow.pop %v2673
      %v2675 = vmul.f32 %v2640, 1.442695
      %v2676 = vpow.pop %v2675
      %v2677 = vmul.f32 %v2641, 1.442695
      %v2678 = vpow.pop %v2677
      %v2679 = vmul.f32 %v2642, 1.442695
      %v2680 = vpow.pop %v2679
      %v2681 = vmul.f32 %v2643, 1.442695
      %v2682 = vpow.pop %v2681
      %v2683 = vmul.f32 %v2644, 1.442695
      %v2684 = vpow.pop %v2683
      %v2685 = vmul.f32 %v2645, 1.442695
      %v2686 = vpow.pop %v2685
      %v2687 = vmul.f32 %v2646, 1.442695
      %v2688 = vpow.pop %v2687
      %v2689 = vmul.f32 %v2647, 1.442695
      %v2690 = vpow.pop %v2689
      %v2691 = vmul.f32 %v2648, 1.442695
      %v2692 = vpow.pop %v2691
      %v2693 = vmul.f32 %v2649, 1.442695
      %v2694 = vpow.pop %v2693
      %v2695 = vmul.f32 %v2650, 1.442695
      %v2696 = vpow.pop %v2695
      %v2697 = vmul.f32 %v2651, 1.442695
      %v2698 = vpow.pop %v2697
      %v2699 = vmul.f32 %v2652, 1.442695
      %v2700 = vpow.pop %v2699
      %v2701 = vsub.f32 %v2670, 1.0
      %v2702 = vsub.f32 %v2672, 1.0
      %v2703 = vsub.f32 %v2674, 1.0
      %v2704 = vsub.f32 %v2676, 1.0
      %v2705 = vsub.f32 %v2678, 1.0
      %v2706 = vsub.f32 %v2680, 1.0
      %v2707 = vsub.f32 %v2682, 1.0
      %v2708 = vsub.f32 %v2684, 1.0
      %v2709 = vsub.f32 %v2686, 1.0
      %v2710 = vsub.f32 %v2688, 1.0
      %v2711 = vsub.f32 %v2690, 1.0
      %v2712 = vsub.f32 %v2692, 1.0
      %v2713 = vsub.f32 %v2694, 1.0
      %v2714 = vsub.f32 %v2696, 1.0
      %v2715 = vsub.f32 %v2698, 1.0
      %v2716 = vsub.f32 %v2700, 1.0
      %v2717 = vmul.f32 %v2701, 1.6732632
      %v2718 = vmul.f32 %v2702, 1.6732632
      %v2719 = vmul.f32 %v2703, 1.6732632
      %v2720 = vmul.f32 %v2704, 1.6732632
      %v2721 = vmul.f32 %v2705, 1.6732632
      %v2722 = vmul.f32 %v2706, 1.6732632
      %v2723 = vmul.f32 %v2707, 1.6732632
      %v2724 = vmul.f32 %v2708, 1.6732632
      %v2725 = vmul.f32 %v2709, 1.6732632
      %v2726 = vmul.f32 %v2710, 1.6732632
      %v2727 = vmul.f32 %v2711, 1.6732632
      %v2728 = vmul.f32 %v2712, 1.6732632
      %v2729 = vmul.f32 %v2713, 1.6732632
      %v2730 = vmul.f32 %v2714, 1.6732632
      %v2731 = vmul.f32 %v2715, 1.6732632
      %v2732 = vmul.f32 %v2716, 1.6732632
      %v2733 = vsel %vm2653, %v2637, %v2717
      %v2734 = vsel %vm2654, %v2638, %v2718
      %v2735 = vsel %vm2655, %v2639, %v2719
      %v2736 = vsel %vm2656, %v2640, %v2720
      %v2737 = vsel %vm2657, %v2641, %v2721
      %v2738 = vsel %vm2658, %v2642, %v2722
      %v2739 = vsel %vm2659, %v2643, %v2723
      %v2740 = vsel %vm2660, %v2644, %v2724
      %v2741 = vsel %vm2661, %v2645, %v2725
      %v2742 = vsel %vm2662, %v2646, %v2726
      %v2743 = vsel %vm2663, %v2647, %v2727
      %v2744 = vsel %vm2664, %v2648, %v2728
      %v2745 = vsel %vm2665, %v2649, %v2729
      %v2746 = vsel %vm2666, %v2650, %v2730
      %v2747 = vsel %vm2667, %v2651, %v2731
      %v2748 = vsel %vm2668, %v2652, %v2732
      %v2749 = vmul.f32 %v2733, 1.050701
      %v2750 = vmul.f32 %v2734, 1.050701
      %v2751 = vmul.f32 %v2735, 1.050701
      %v2752 = vmul.f32 %v2736, 1.050701
      %v2753 = vmul.f32 %v2737, 1.050701
      %v2754 = vmul.f32 %v2738, 1.050701
      %v2755 = vmul.f32 %v2739, 1.050701
      %v2756 = vmul.f32 %v2740, 1.050701
      %v2757 = vmul.f32 %v2741, 1.050701
      %v2758 = vmul.f32 %v2742, 1.050701
      %v2759 = vmul.f32 %v2743, 1.050701
      %v2760 = vmul.f32 %v2744, 1.050701
      %v2761 = vmul.f32 %v2745, 1.050701
      %v2762 = vmul.f32 %v2746, 1.050701
      %v2763 = vmul.f32 %v2747, 1.050701
      %v2764 = vmul.f32 %v2748, 1.050701
      %v2765 = vld [vmem:[%s547] sm:$0xf]
      %v2766 = vld [vmem:[%s547 + $0x4] sm:$0xf]
      %v2767 = vld [vmem:[%s547 + $0x8] sm:$0xf]
      %v2768 = vld [vmem:[%s547 + $0xc] sm:$0xf]
      %v2769 = vld [vmem:[%s547 + $0x10] sm:$0xf]
      %v2770 = vld [vmem:[%s547 + $0x14] sm:$0xf]
      %v2771 = vld [vmem:[%s547 + $0x18] sm:$0xf]
      %v2772 = vld [vmem:[%s547 + $0x1c] sm:$0xf]
      %v2773 = vld [vmem:[%s547 + $0x20] sm:$0xf]
      %v2774 = vld [vmem:[%s547 + $0x24] sm:$0xf]
      %v2775 = vld [vmem:[%s547 + $0x28] sm:$0xf]
      %v2776 = vld [vmem:[%s547 + $0x2c] sm:$0xf]
      %v2777 = vld [vmem:[%s547 + $0x30] sm:$0xf]
      %v2778 = vld [vmem:[%s547 + $0x34] sm:$0xf]
      %v2779 = vld [vmem:[%s547 + $0x38] sm:$0xf]
      %v2780 = vld [vmem:[%s547 + $0x3c] sm:$0xf]
      %v2781 = vld [vmem:[%s547 + $0x40] sm:$0xf]
      %v2782 = vld [vmem:[%s547 + $0x44] sm:$0xf]
      %v2783 = vld [vmem:[%s547 + $0x48] sm:$0xf]
      %v2784 = vld [vmem:[%s547 + $0x4c] sm:$0xf]
      %v2785 = vld [vmem:[%s547 + $0x50] sm:$0xf]
      %v2786 = vld [vmem:[%s547 + $0x54] sm:$0xf]
      %v2787 = vld [vmem:[%s547 + $0x58] sm:$0xf]
      %v2788 = vld [vmem:[%s547 + $0x5c] sm:$0xf]
      %v2789 = vld [vmem:[%s547 + $0x60] sm:$0xf]
      %v2790 = vld [vmem:[%s547 + $0x64] sm:$0xf]
      %v2791 = vld [vmem:[%s547 + $0x68] sm:$0xf]
      %v2792 = vld [vmem:[%s547 + $0x6c] sm:$0xf]
      %v2793 = vld [vmem:[%s547 + $0x70] sm:$0xf]
      %v2794 = vld [vmem:[%s547 + $0x74] sm:$0xf]
      %v2795 = vld [vmem:[%s547 + $0x78] sm:$0xf]
      %v2796 = vld [vmem:[%s547 + $0x7c] sm:$0xf]
      %v2797 = vld [vmem:[%s547 + $0x80] sm:$0xf]
      %v2798 = vld [vmem:[%s547 + $0x84] sm:$0xf]
      %v2799 = vld [vmem:[%s547 + $0x88] sm:$0xf]
      %v2800 = vld [vmem:[%s547 + $0x8c] sm:$0xf]
      %v2801 = vld [vmem:[%s550] sm:$0x1]
      %v2804 = vrot.slane %v2763, 7
      %v2805 = vrot.slane %v2764, 7
      %v2806 = vsel %vm832, %v2804, %v2805
      %v2823 = vrot.slane %v2749, 7
      %v2824 = vrot.slane %v2750, 7
      %v2825 = vsel %vm832, %v2823, %v2824
      %v2826 = vrot.slane %v2751, 7
      %v2827 = vsel %vm832, %v2824, %v2826
      %v2828 = vrot.slane %v2752, 7
      %v2829 = vsel %vm832, %v2826, %v2828
      %v2830 = vrot.slane %v2753, 7
      %v2831 = vsel %vm832, %v2828, %v2830
      %v2832 = vrot.slane %v2754, 7
      %v2833 = vsel %vm832, %v2830, %v2832
      %v2834 = vrot.slane %v2755, 7
      %v2835 = vsel %vm832, %v2832, %v2834
      %v2836 = vrot.slane %v2756, 7
      %v2837 = vsel %vm832, %v2834, %v2836
      %v2838 = vrot.slane %v2757, 7
      %v2839 = vsel %vm832, %v2836, %v2838
      %v2840 = vrot.slane %v2758, 7
      %v2841 = vsel %vm832, %v2838, %v2840
      %v2842 = vrot.slane %v2759, 7
      %v2843 = vsel %vm832, %v2840, %v2842
      %v2844 = vrot.slane %v2760, 7
      %v2845 = vsel %vm832, %v2842, %v2844
      %v2846 = vrot.slane %v2761, 7
      %v2847 = vsel %vm832, %v2844, %v2846
      %v2848 = vrot.slane %v2762, 7
      %v2849 = vsel %vm832, %v2846, %v2848
      %v2850 = vsel %vm832, %v2848, %v2804
      %v2866 = vsel %vm832, %v2805, %v2823
      %v2867 = vmul.f32 %v2806, %v899
      %v2868 = vmul.f32 %v2866, %v904
      %v2869 = vmul.f32 %v2825, %v909
      %v2870 = vmul.f32 %v2827, %v914
      %v2871 = vmul.f32 %v2829, %v919
      %v2872 = vmul.f32 %v2831, %v924
      %v2873 = vmul.f32 %v2833, %v929
      %v2874 = vmul.f32 %v2835, %v934
      %v2875 = vmul.f32 %v2837, %v939
      %v2876 = vmul.f32 %v2839, %v944
      %v2877 = vmul.f32 %v2841, %v949
      %v2878 = vmul.f32 %v2843, %v954
      %v2879 = vmul.f32 %v2845, %v959
      %v2880 = vmul.f32 %v2847, %v964
      %v2881 = vmul.f32 %v2849, %v969
      %v2882 = vmul.f32 %v2850, %v974
      %v2883 = vmul.f32 %v2764, %v994
      %v2884 = vmul.f32 %v2749, %v998
      %v2885 = vmul.f32 %v2750, %v1002
      %v2886 = vmul.f32 %v2751, %v1006
      %v2887 = vmul.f32 %v2752, %v1010
      %v2888 = vmul.f32 %v2753, %v1014
      %v2889 = vmul.f32 %v2754, %v1018
      %v2890 = vmul.f32 %v2755, %v1022
      %v2891 = vmul.f32 %v2756, %v1026
      %v2892 = vmul.f32 %v2757, %v1030
      %v2893 = vmul.f32 %v2758, %v1034
      %v2894 = vmul.f32 %v2759, %v1038
      %v2895 = vmul.f32 %v2760, %v1042
      %v2896 = vmul.f32 %v2761, %v1046
      %v2897 = vmul.f32 %v2762, %v1050
      %v2898 = vmul.f32 %v2763, %v1054
      %v2899 = vrot.slane %v2764, 1
      %v2901 = vrot.slane %v2749, 1
      %v2902 = vrot.slane %v2750, 1
      %v2903 = vsel %vm1074, %v2901, %v2902
      %v2904 = vrot.slane %v2751, 1
      %v2905 = vsel %vm1074, %v2902, %v2904
      %v2906 = vrot.slane %v2752, 1
      %v2907 = vsel %vm1074, %v2904, %v2906
      %v2908 = vrot.slane %v2753, 1
      %v2909 = vsel %vm1074, %v2906, %v2908
      %v2910 = vrot.slane %v2754, 1
      %v2911 = vsel %vm1074, %v2908, %v2910
      %v2912 = vrot.slane %v2755, 1
      %v2913 = vsel %vm1074, %v2910, %v2912
      %v2914 = vrot.slane %v2756, 1
      %v2915 = vsel %vm1074, %v2912, %v2914
      %v2916 = vrot.slane %v2757, 1
      %v2917 = vsel %vm1074, %v2914, %v2916
      %v2918 = vrot.slane %v2758, 1
      %v2919 = vsel %vm1074, %v2916, %v2918
      %v2920 = vrot.slane %v2759, 1
      %v2921 = vsel %vm1074, %v2918, %v2920
      %v2922 = vrot.slane %v2760, 1
      %v2923 = vsel %vm1074, %v2920, %v2922
      %v2924 = vrot.slane %v2761, 1
      %v2925 = vsel %vm1074, %v2922, %v2924
      %v2926 = vrot.slane %v2762, 1
      %v2927 = vsel %vm1074, %v2924, %v2926
      %v2928 = vrot.slane %v2763, 1
      %v2929 = vsel %vm1074, %v2926, %v2928
      %v2930 = vsel %vm1074, %v2928, %v2899
      %v2947 = vsel %vm1074, %v2899, %v2901
      %v2948 = vmul.f32 %v2947, %v1124
      %v2949 = vmul.f32 %v2903, %v1128
      %v2950 = vmul.f32 %v2905, %v1132
      %v2951 = vmul.f32 %v2907, %v1136
      %v2952 = vmul.f32 %v2909, %v1140
      %v2953 = vmul.f32 %v2911, %v1144
      %v2954 = vmul.f32 %v2913, %v1148
      %v2955 = vmul.f32 %v2915, %v1152
      %v2956 = vmul.f32 %v2917, %v1156
      %v2957 = vmul.f32 %v2919, %v1160
      %v2958 = vmul.f32 %v2921, %v1164
      %v2959 = vmul.f32 %v2923, %v1168
      %v2960 = vmul.f32 %v2925, %v1172
      %v2961 = vmul.f32 %v2927, %v1176
      %v2962 = vmul.f32 %v2929, %v1180
      %v2963 = vmul.f32 %v2930, %v1184
      %v2964 = vmul.f32 %v2866, %v1204
      %v2965 = vmul.f32 %v2825, %v1208
      %v2966 = vmul.f32 %v2827, %v1212
      %v2967 = vmul.f32 %v2829, %v1216
      %v2968 = vmul.f32 %v2831, %v1220
      %v2969 = vmul.f32 %v2833, %v1224
      %v2970 = vmul.f32 %v2835, %v1228
      %v2971 = vmul.f32 %v2837, %v1232
      %v2972 = vmul.f32 %v2839, %v1236
      %v2973 = vmul.f32 %v2841, %v1240
      %v2974 = vmul.f32 %v2843, %v1244
      %v2975 = vmul.f32 %v2845, %v1248
      %v2976 = vmul.f32 %v2847, %v1252
      %v2977 = vmul.f32 %v2849, %v1256
      %v2978 = vmul.f32 %v2850, %v1260
      %v2979 = vmul.f32 %v2806, %v1264
      %v2980 = vmul.f32 %v2749, %v1284
      %v2981 = vmul.f32 %v2750, %v1288
      %v2982 = vmul.f32 %v2751, %v1292
      %v2983 = vmul.f32 %v2752, %v1296
      %v2984 = vmul.f32 %v2753, %v1300
      %v2985 = vmul.f32 %v2754, %v1304
      %v2986 = vmul.f32 %v2755, %v1308
      %v2987 = vmul.f32 %v2756, %v1312
      %v2988 = vmul.f32 %v2757, %v1316
      %v2989 = vmul.f32 %v2758, %v1320
      %v2990 = vmul.f32 %v2759, %v1324
      %v2991 = vmul.f32 %v2760, %v1328
      %v2992 = vmul.f32 %v2761, %v1332
      %v2993 = vmul.f32 %v2762, %v1336
      %v2994 = vmul.f32 %v2763, %v1340
      %v2995 = vmul.f32 %v2764, %v1344
      %v2996 = vmul.f32 %v2903, %v1364
      %v2997 = vmul.f32 %v2905, %v1368
      %v2998 = vmul.f32 %v2907, %v1372
      %v2999 = vmul.f32 %v2909, %v1376
      %v3000 = vmul.f32 %v2911, %v1380
      %v3001 = vmul.f32 %v2913, %v1384
      %v3002 = vmul.f32 %v2915, %v1388
      %v3003 = vmul.f32 %v2917, %v1392
      %v3004 = vmul.f32 %v2919, %v1396
      %v3005 = vmul.f32 %v2921, %v1400
      %v3006 = vmul.f32 %v2923, %v1404
      %v3007 = vmul.f32 %v2925, %v1408
      %v3008 = vmul.f32 %v2927, %v1412
      %v3009 = vmul.f32 %v2929, %v1416
      %v3010 = vmul.f32 %v2930, %v1420
      %v3011 = vmul.f32 %v2947, %v1424
      %v3012 = vmul.f32 %v2825, %v1444
      %v3013 = vmul.f32 %v2827, %v1448
      %v3014 = vmul.f32 %v2829, %v1452
      %v3015 = vmul.f32 %v2831, %v1456
      %v3016 = vmul.f32 %v2833, %v1460
      %v3017 = vmul.f32 %v2835, %v1464
      %v3018 = vmul.f32 %v2837, %v1468
      %v3019 = vmul.f32 %v2839, %v1472
      %v3020 = vmul.f32 %v2841, %v1476
      %v3021 = vmul.f32 %v2843, %v1480
      %v3022 = vmul.f32 %v2845, %v1484
      %v3023 = vmul.f32 %v2847, %v1488
      %v3024 = vmul.f32 %v2849, %v1492
      %v3025 = vmul.f32 %v2850, %v1496
      %v3026 = vmul.f32 %v2806, %v1500
      %v3027 = vmul.f32 %v2866, %v1504
      %v3028 = vmul.f32 %v2750, %v1524
      %v3029 = vmul.f32 %v2751, %v1528
      %v3030 = vmul.f32 %v2752, %v1532
      %v3031 = vmul.f32 %v2753, %v1536
      %v3032 = vmul.f32 %v2754, %v1540
      %v3033 = vmul.f32 %v2755, %v1544
      %v3034 = vmul.f32 %v2756, %v1548
      %v3035 = vmul.f32 %v2757, %v1552
      %v3036 = vmul.f32 %v2758, %v1556
      %v3037 = vmul.f32 %v2759, %v1560
      %v3038 = vmul.f32 %v2760, %v1564
      %v3039 = vmul.f32 %v2761, %v1568
      %v3040 = vmul.f32 %v2762, %v1572
      %v3041 = vmul.f32 %v2763, %v1576
      %v3042 = vmul.f32 %v2764, %v1580
      %v3043 = vmul.f32 %v2749, %v1584
      %v3044 = vmul.f32 %v2905, %v1604
      %v3045 = vmul.f32 %v2907, %v1608
      %v3046 = vmul.f32 %v2909, %v1612
      %v3047 = vmul.f32 %v2911, %v1616
      %v3048 = vmul.f32 %v2913, %v1620
      %v3049 = vmul.f32 %v2915, %v1624
      %v3050 = vmul.f32 %v2917, %v1628
      %v3051 = vmul.f32 %v2919, %v1632
      %v3052 = vmul.f32 %v2921, %v1636
      %v3053 = vmul.f32 %v2923, %v1640
      %v3054 = vmul.f32 %v2925, %v1644
      %v3055 = vmul.f32 %v2927, %v1648
      %v3056 = vmul.f32 %v2929, %v1652
      %v3057 = vmul.f32 %v2930, %v1656
      %v3058 = vmul.f32 %v2947, %v1660
      %v3059 = vmul.f32 %v2903, %v1664
      %3076 = vrot.lane.b32.xlu0 %v2883, 32
      %v3077 = vpop.permute.xlu0 %3076
      %3078 = vrot.lane.b32.xlu0 %v2884, 32
      %v3079 = vpop.permute.xlu0 %3078
      %3080 = vrot.lane.b32.xlu0 %v2885, 32
      %v3081 = vpop.permute.xlu0 %3080
      %3082 = vrot.lane.b32.xlu0 %v2886, 32
      %v3083 = vpop.permute.xlu0 %3082
      %3084 = vrot.lane.b32.xlu0 %v2887, 32
      %v3085 = vpop.permute.xlu0 %3084
      %3086 = vrot.lane.b32.xlu0 %v2888, 32
      %v3087 = vpop.permute.xlu0 %3086
      %3088 = vrot.lane.b32.xlu0 %v2889, 32
      %v3089 = vpop.permute.xlu0 %3088
      %3090 = vrot.lane.b32.xlu0 %v2890, 32
      %v3091 = vpop.permute.xlu0 %3090
      %3092 = vrot.lane.b32.xlu0 %v2891, 32
      %v3093 = vpop.permute.xlu0 %3092
      %3094 = vrot.lane.b32.xlu0 %v2892, 32
      %v3095 = vpop.permute.xlu0 %3094
      %3096 = vrot.lane.b32.xlu0 %v2893, 32
      %v3097 = vpop.permute.xlu0 %3096
      %3098 = vrot.lane.b32.xlu0 %v2894, 32
      %v3099 = vpop.permute.xlu0 %3098
      %3100 = vrot.lane.b32.xlu0 %v2895, 32
      %v3101 = vpop.permute.xlu0 %3100
      %3102 = vrot.lane.b32.xlu0 %v2896, 32
      %v3103 = vpop.permute.xlu0 %3102
      %3104 = vrot.lane.b32.xlu0 %v2897, 32
      %v3105 = vpop.permute.xlu0 %3104
      %3106 = vrot.lane.b32.xlu0 %v2898, 32
      %v3107 = vpop.permute.xlu0 %3106
      %3140 = vrot.lane.b32.xlu0 %v2948, 64
      %v3141 = vpop.permute.xlu0 %3140
      %3142 = vrot.lane.b32.xlu0 %v2949, 64
      %v3143 = vpop.permute.xlu0 %3142
      %3144 = vrot.lane.b32.xlu0 %v2950, 64
      %v3145 = vpop.permute.xlu0 %3144
      %3146 = vrot.lane.b32.xlu0 %v2951, 64
      %v3147 = vpop.permute.xlu0 %3146
      %3148 = vrot.lane.b32.xlu0 %v2952, 64
      %v3149 = vpop.permute.xlu0 %3148
      %3150 = vrot.lane.b32.xlu0 %v2953, 64
      %v3151 = vpop.permute.xlu0 %3150
      %3152 = vrot.lane.b32.xlu0 %v2954, 64
      %v3153 = vpop.permute.xlu0 %3152
      %3154 = vrot.lane.b32.xlu0 %v2955, 64
      %v3155 = vpop.permute.xlu0 %3154
      %3156 = vrot.lane.b32.xlu0 %v2956, 64
      %v3157 = vpop.permute.xlu0 %3156
      %3158 = vrot.lane.b32.xlu0 %v2957, 64
      %v3159 = vpop.permute.xlu0 %3158
      %3160 = vrot.lane.b32.xlu0 %v2958, 64
      %v3161 = vpop.permute.xlu0 %3160
      %3162 = vrot.lane.b32.xlu0 %v2959, 64
      %v3163 = vpop.permute.xlu0 %3162
      %3164 = vrot.lane.b32.xlu0 %v2960, 64
      %v3165 = vpop.permute.xlu0 %3164
      %3166 = vrot.lane.b32.xlu0 %v2961, 64
      %v3167 = vpop.permute.xlu0 %3166
      %3168 = vrot.lane.b32.xlu0 %v2962, 64
      %v3169 = vpop.permute.xlu0 %3168
      %3170 = vrot.lane.b32.xlu0 %v2963, 64
      %v3171 = vpop.permute.xlu0 %3170
      %3204 = vrot.lane.b32.xlu0 %v2964, 96
      %v3205 = vpop.permute.xlu0 %3204
      %3206 = vrot.lane.b32.xlu0 %v2965, 96
      %v3207 = vpop.permute.xlu0 %3206
      %3208 = vrot.lane.b32.xlu0 %v2966, 96
      %v3209 = vpop.permute.xlu0 %3208
      %3210 = vrot.lane.b32.xlu0 %v2967, 96
      %v3211 = vpop.permute.xlu0 %3210
      %3212 = vrot.lane.b32.xlu0 %v2968, 96
      %v3213 = vpop.permute.xlu0 %3212
      %3214 = vrot.lane.b32.xlu0 %v2969, 96
      %v3215 = vpop.permute.xlu0 %3214
      %3216 = vrot.lane.b32.xlu0 %v2970, 96
      %v3217 = vpop.permute.xlu0 %3216
      %3218 = vrot.lane.b32.xlu0 %v2971, 96
      %v3219 = vpop.permute.xlu0 %3218
      %3220 = vrot.lane.b32.xlu0 %v2972, 96
      %v3221 = vpop.permute.xlu0 %3220
      %3222 = vrot.lane.b32.xlu0 %v2973, 96
      %v3223 = vpop.permute.xlu0 %3222
      %3224 = vrot.lane.b32.xlu0 %v2974, 96
      %v3225 = vpop.permute.xlu0 %3224
      %3226 = vrot.lane.b32.xlu0 %v2975, 96
      %v3227 = vpop.permute.xlu0 %3226
      %3228 = vrot.lane.b32.xlu0 %v2976, 96
      %v3229 = vpop.permute.xlu0 %3228
      %3230 = vrot.lane.b32.xlu0 %v2977, 96
      %v3231 = vpop.permute.xlu0 %3230
      %3232 = vrot.lane.b32.xlu0 %v2978, 96
      %v3233 = vpop.permute.xlu0 %3232
      %3234 = vrot.lane.b32.xlu0 %v2979, 96
      %v3235 = vpop.permute.xlu0 %3234
      %3268 = vrot.lane.b32.xlu0 %v2996, 32
      %v3269 = vpop.permute.xlu0 %3268
      %3270 = vrot.lane.b32.xlu0 %v2997, 32
      %v3271 = vpop.permute.xlu0 %3270
      %3272 = vrot.lane.b32.xlu0 %v2998, 32
      %v3273 = vpop.permute.xlu0 %3272
      %3274 = vrot.lane.b32.xlu0 %v2999, 32
      %v3275 = vpop.permute.xlu0 %3274
      %3276 = vrot.lane.b32.xlu0 %v3000, 32
      %v3277 = vpop.permute.xlu0 %3276
      %3278 = vrot.lane.b32.xlu0 %v3001, 32
      %v3279 = vpop.permute.xlu0 %3278
      %3280 = vrot.lane.b32.xlu0 %v3002, 32
      %v3281 = vpop.permute.xlu0 %3280
      %3282 = vrot.lane.b32.xlu0 %v3003, 32
      %v3283 = vpop.permute.xlu0 %3282
      %3284 = vrot.lane.b32.xlu0 %v3004, 32
      %v3285 = vpop.permute.xlu0 %3284
      %3286 = vrot.lane.b32.xlu0 %v3005, 32
      %v3287 = vpop.permute.xlu0 %3286
      %3288 = vrot.lane.b32.xlu0 %v3006, 32
      %v3289 = vpop.permute.xlu0 %3288
      %3290 = vrot.lane.b32.xlu0 %v3007, 32
      %v3291 = vpop.permute.xlu0 %3290
      %3292 = vrot.lane.b32.xlu0 %v3008, 32
      %v3293 = vpop.permute.xlu0 %3292
      %3294 = vrot.lane.b32.xlu0 %v3009, 32
      %v3295 = vpop.permute.xlu0 %3294
      %3296 = vrot.lane.b32.xlu0 %v3010, 32
      %v3297 = vpop.permute.xlu0 %3296
      %3298 = vrot.lane.b32.xlu0 %v3011, 32
      %v3299 = vpop.permute.xlu0 %3298
      %3332 = vrot.lane.b32.xlu0 %v3012, 64
      %v3333 = vpop.permute.xlu0 %3332
      %3334 = vrot.lane.b32.xlu0 %v3013, 64
      %v3335 = vpop.permute.xlu0 %3334
      %3336 = vrot.lane.b32.xlu0 %v3014, 64
      %v3337 = vpop.permute.xlu0 %3336
      %3338 = vrot.lane.b32.xlu0 %v3015, 64
      %v3339 = vpop.permute.xlu0 %3338
      %3340 = vrot.lane.b32.xlu0 %v3016, 64
      %v3341 = vpop.permute.xlu0 %3340
      %3342 = vrot.lane.b32.xlu0 %v3017, 64
      %v3343 = vpop.permute.xlu0 %3342
      %3344 = vrot.lane.b32.xlu0 %v3018, 64
      %v3345 = vpop.permute.xlu0 %3344
      %3346 = vrot.lane.b32.xlu0 %v3019, 64
      %v3347 = vpop.permute.xlu0 %3346
      %3348 = vrot.lane.b32.xlu0 %v3020, 64
      %v3349 = vpop.permute.xlu0 %3348
      %3350 = vrot.lane.b32.xlu0 %v3021, 64
      %v3351 = vpop.permute.xlu0 %3350
      %3352 = vrot.lane.b32.xlu0 %v3022, 64
      %v3353 = vpop.permute.xlu0 %3352
      %3354 = vrot.lane.b32.xlu0 %v3023, 64
      %v3355 = vpop.permute.xlu0 %3354
      %3356 = vrot.lane.b32.xlu0 %v3024, 64
      %v3357 = vpop.permute.xlu0 %3356
      %3358 = vrot.lane.b32.xlu0 %v3025, 64
      %v3359 = vpop.permute.xlu0 %3358
      %3360 = vrot.lane.b32.xlu0 %v3026, 64
      %v3361 = vpop.permute.xlu0 %3360
      %3362 = vrot.lane.b32.xlu0 %v3027, 64
      %v3363 = vpop.permute.xlu0 %3362
      %3396 = vrot.lane.b32.xlu0 %v3028, 96
      %v3397 = vpop.permute.xlu0 %3396
      %3398 = vrot.lane.b32.xlu0 %v3029, 96
      %v3399 = vpop.permute.xlu0 %3398
      %3400 = vrot.lane.b32.xlu0 %v3030, 96
      %v3401 = vpop.permute.xlu0 %3400
      %3402 = vrot.lane.b32.xlu0 %v3031, 96
      %v3403 = vpop.permute.xlu0 %3402
      %3404 = vrot.lane.b32.xlu0 %v3032, 96
      %v3405 = vpop.permute.xlu0 %3404
      %3406 = vrot.lane.b32.xlu0 %v3033, 96
      %v3407 = vpop.permute.xlu0 %3406
      %3408 = vrot.lane.b32.xlu0 %v3034, 96
      %v3409 = vpop.permute.xlu0 %3408
      %3410 = vrot.lane.b32.xlu0 %v3035, 96
      %v3411 = vpop.permute.xlu0 %3410
      %3412 = vrot.lane.b32.xlu0 %v3036, 96
      %v3413 = vpop.permute.xlu0 %3412
      %3414 = vrot.lane.b32.xlu0 %v3037, 96
      %v3415 = vpop.permute.xlu0 %3414
      %3416 = vrot.lane.b32.xlu0 %v3038, 96
      %v3417 = vpop.permute.xlu0 %3416
      %3418 = vrot.lane.b32.xlu0 %v3039, 96
      %v3419 = vpop.permute.xlu0 %3418
      %3420 = vrot.lane.b32.xlu0 %v3040, 96
      %v3421 = vpop.permute.xlu0 %3420
      %3422 = vrot.lane.b32.xlu0 %v3041, 96
      %v3423 = vpop.permute.xlu0 %3422
      %3424 = vrot.lane.b32.xlu0 %v3042, 96
      %v3425 = vpop.permute.xlu0 %3424
      %3426 = vrot.lane.b32.xlu0 %v3043, 96
      %v3427 = vpop.permute.xlu0 %3426
      %v3444 = vsel %vm2066, %v2867, %v3077
      %v3445 = vsel %vm2066, %v2868, %v3079
      %v3446 = vsel %vm2066, %v2869, %v3081
      %v3447 = vsel %vm2066, %v2870, %v3083
      %v3448 = vsel %vm2066, %v2871, %v3085
      %v3449 = vsel %vm2066, %v2872, %v3087
      %v3450 = vsel %vm2066, %v2873, %v3089
      %v3451 = vsel %vm2066, %v2874, %v3091
      %v3452 = vsel %vm2066, %v2875, %v3093
      %v3453 = vsel %vm2066, %v2876, %v3095
      %v3454 = vsel %vm2066, %v2877, %v3097
      %v3455 = vsel %vm2066, %v2878, %v3099
      %v3456 = vsel %vm2066, %v2879, %v3101
      %v3457 = vsel %vm2066, %v2880, %v3103
      %v3458 = vsel %vm2066, %v2881, %v3105
      %v3459 = vsel %vm2066, %v2882, %v3107
      %v3460 = vsel %vm2083, %v3444, %v3141
      %v3461 = vsel %vm2083, %v3445, %v3143
      %v3462 = vsel %vm2083, %v3446, %v3145
      %v3463 = vsel %vm2083, %v3447, %v3147
      %v3464 = vsel %vm2083, %v3448, %v3149
      %v3465 = vsel %vm2083, %v3449, %v3151
      %v3466 = vsel %vm2083, %v3450, %v3153
      %v3467 = vsel %vm2083, %v3451, %v3155
      %v3468 = vsel %vm2083, %v3452, %v3157
      %v3469 = vsel %vm2083, %v3453, %v3159
      %v3470 = vsel %vm2083, %v3454, %v3161
      %v3471 = vsel %vm2083, %v3455, %v3163
      %v3472 = vsel %vm2083, %v3456, %v3165
      %v3473 = vsel %vm2083, %v3457, %v3167
      %v3474 = vsel %vm2083, %v3458, %v3169
      %v3475 = vsel %vm2083, %v3459, %v3171
      %v3476 = vsel %vm2100, %v3460, %v3205
      %v3477 = vsel %vm2100, %v3461, %v3207
      %v3478 = vsel %vm2100, %v3462, %v3209
      %v3479 = vsel %vm2100, %v3463, %v3211
      %v3480 = vsel %vm2100, %v3464, %v3213
      %v3481 = vsel %vm2100, %v3465, %v3215
      %v3482 = vsel %vm2100, %v3466, %v3217
      %v3483 = vsel %vm2100, %v3467, %v3219
      %v3484 = vsel %vm2100, %v3468, %v3221
      %v3485 = vsel %vm2100, %v3469, %v3223
      %v3486 = vsel %vm2100, %v3470, %v3225
      %v3487 = vsel %vm2100, %v3471, %v3227
      %v3488 = vsel %vm2100, %v3472, %v3229
      %v3489 = vsel %vm2100, %v3473, %v3231
      %v3490 = vsel %vm2100, %v3474, %v3233
      %v3491 = vsel %vm2100, %v3475, %v3235
      %v3492 = vsel %vm2066, %v2980, %v3269
      %v3493 = vsel %vm2066, %v2981, %v3271
      %v3494 = vsel %vm2066, %v2982, %v3273
      %v3495 = vsel %vm2066, %v2983, %v3275
      %v3496 = vsel %vm2066, %v2984, %v3277
      %v3497 = vsel %vm2066, %v2985, %v3279
      %v3498 = vsel %vm2066, %v2986, %v3281
      %v3499 = vsel %vm2066, %v2987, %v3283
      %v3500 = vsel %vm2066, %v2988, %v3285
      %v3501 = vsel %vm2066, %v2989, %v3287
      %v3502 = vsel %vm2066, %v2990, %v3289
      %v3503 = vsel %vm2066, %v2991, %v3291
      %v3504 = vsel %vm2066, %v2992, %v3293
      %v3505 = vsel %vm2066, %v2993, %v3295
      %v3506 = vsel %vm2066, %v2994, %v3297
      %v3507 = vsel %vm2066, %v2995, %v3299
      %v3508 = vsel %vm2083, %v3492, %v3333
      %v3509 = vsel %vm2083, %v3493, %v3335
      %v3510 = vsel %vm2083, %v3494, %v3337
      %v3511 = vsel %vm2083, %v3495, %v3339
      %v3512 = vsel %vm2083, %v3496, %v3341
      %v3513 = vsel %vm2083, %v3497, %v3343
      %v3514 = vsel %vm2083, %v3498, %v3345
      %v3515 = vsel %vm2083, %v3499, %v3347
      %v3516 = vsel %vm2083, %v3500, %v3349
      %v3517 = vsel %vm2083, %v3501, %v3351
      %v3518 = vsel %vm2083, %v3502, %v3353
      %v3519 = vsel %vm2083, %v3503, %v3355
      %v3520 = vsel %vm2083, %v3504, %v3357
      %v3521 = vsel %vm2083, %v3505, %v3359
      %v3522 = vsel %vm2083, %v3506, %v3361
      %v3523 = vsel %vm2083, %v3507, %v3363
      %v3524 = vsel %vm2100, %v3508, %v3397
      %v3525 = vsel %vm2100, %v3509, %v3399
      %v3526 = vsel %vm2100, %v3510, %v3401
      %v3527 = vsel %vm2100, %v3511, %v3403
      %v3528 = vsel %vm2100, %v3512, %v3405
      %v3529 = vsel %vm2100, %v3513, %v3407
      %v3530 = vsel %vm2100, %v3514, %v3409
      %v3531 = vsel %vm2100, %v3515, %v3411
      %v3532 = vsel %vm2100, %v3516, %v3413
      %v3533 = vsel %vm2100, %v3517, %v3415
      %v3534 = vsel %vm2100, %v3518, %v3417
      %v3535 = vsel %vm2100, %v3519, %v3419
      %v3536 = vsel %vm2100, %v3520, %v3421
      %v3537 = vsel %vm2100, %v3521, %v3423
      %v3538 = vsel %vm2100, %v3522, %v3425
      %v3539 = vsel %vm2100, %v3523, %v3427
      %v3540 = vpack.c.bf16 %v3477, %v3476
      %v3541 = vpack.c.bf16 %v3525, %v3524
      %v3542 = vpack.c.bf16 %v3045, %v3044
      %v3543 = vpack.c.bf16 %v3479, %v3478
      %v3544 = vpack.c.bf16 %v3527, %v3526
      %v3545 = vpack.c.bf16 %v3047, %v3046
      %v3546 = vpack.c.bf16 %v3481, %v3480
      %v3547 = vpack.c.bf16 %v3529, %v3528
      %v3548 = vpack.c.bf16 %v3049, %v3048
      %v3549 = vpack.c.bf16 %v3483, %v3482
      %v3550 = vpack.c.bf16 %v3531, %v3530
      %v3551 = vpack.c.bf16 %v3051, %v3050
      %v3552 = vpack.c.bf16 %v3485, %v3484
      %v3553 = vpack.c.bf16 %v3533, %v3532
      %v3554 = vpack.c.bf16 %v3053, %v3052
      %v3555 = vpack.c.bf16 %v3487, %v3486
      %v3556 = vpack.c.bf16 %v3535, %v3534
      %v3557 = vpack.c.bf16 %v3055, %v3054
      %v3558 = vpack.c.bf16 %v3489, %v3488
      %v3559 = vpack.c.bf16 %v3537, %v3536
      %v3560 = vpack.c.bf16 %v3057, %v3056
      %v3561 = vpack.c.bf16 %v3491, %v3490
      %v3562 = vpack.c.bf16 %v3539, %v3538
      %v3563 = vpack.c.bf16 %v3059, %v3058
      %v3565 = vperm.slane %v2801, 0
      %v3603 = vunpack.c.l.b16 %v2765
      %v3604 = vunpack.c.l.b16 %v2766
      %v3605 = vunpack.c.l.b16 %v2767
      %v3606 = vunpack.c.l.b16 %v2768
      %v3607 = vunpack.c.l.b16 %v2769
      %v3608 = vunpack.c.l.b16 %v2770
      %v3609 = vunpack.c.l.b16 %v2771
      %v3610 = vunpack.c.l.b16 %v2772
      %v3611 = vunpack.c.l.b16 %v2773
      %v3612 = vunpack.c.l.b16 %v2774
      %v3613 = vunpack.c.l.b16 %v2775
      %v3614 = vunpack.c.l.b16 %v2776
      %v3615 = vunpack.c.l.b16 %v2777
      %v3616 = vunpack.c.l.b16 %v2778
      %v3617 = vunpack.c.l.b16 %v2779
      %v3618 = vunpack.c.l.b16 %v2780
      %v3619 = vunpack.c.l.b16 %v2781
      %v3620 = vunpack.c.l.b16 %v2782
      %v3621 = vunpack.c.l.b16 %v2783
      %v3622 = vunpack.c.l.b16 %v2784
      %v3623 = vunpack.c.l.b16 %v2785
      %v3624 = vunpack.c.l.b16 %v2786
      %v3625 = vunpack.c.l.b16 %v2787
      %v3626 = vunpack.c.l.b16 %v2788
      %v3627 = vunpack.c.l.b16 %v2789
      %v3628 = vunpack.c.l.b16 %v2790
      %v3629 = vunpack.c.l.b16 %v2791
      %v3630 = vunpack.c.l.b16 %v2792
      %v3631 = vunpack.c.l.b16 %v2793
      %v3632 = vunpack.c.l.b16 %v2794
      %v3633 = vunpack.c.l.b16 %v2795
      %v3634 = vunpack.c.l.b16 %v2796
      %v3635 = vunpack.c.l.b16 %v2797
      %v3636 = vunpack.c.l.b16 %v2798
      %v3637 = vunpack.c.l.b16 %v2799
      %v3638 = vunpack.c.l.b16 %v2800
      %v3639 = vpack.c.b16 %v3604, %v3603
      %v3640 = vpack.c.b16 %v3606, %v3605
      %v3641 = vpack.c.b16 %v3608, %v3607
      %v3642 = vpack.c.b16 %v3610, %v3609
      %v3643 = vpack.c.b16 %v3612, %v3611
      %v3644 = vpack.c.b16 %v3614, %v3613
      %v3645 = vpack.c.b16 %v3616, %v3615
      %v3646 = vpack.c.b16 %v3618, %v3617
      %v3647 = vpack.c.b16 %v3620, %v3619
      %v3648 = vpack.c.b16 %v3622, %v3621
      %v3649 = vpack.c.b16 %v3624, %v3623
      %v3650 = vpack.c.b16 %v3626, %v3625
      %v3651 = vpack.c.b16 %v3628, %v3627
      %v3652 = vpack.c.b16 %v3630, %v3629
      %v3653 = vpack.c.b16 %v3632, %v3631
      %v3654 = vpack.c.b16 %v3634, %v3633
      %v3655 = vpack.c.b16 %v3636, %v3635
      %v3656 = vpack.c.b16 %v3638, %v3637
      %v3676 = vsel %vm2066, %v3542, 0
      %v3679 = vsel %vm2066, %v3545, 0
      %v3682 = vsel %vm2066, %v3548, 0
      %v3685 = vsel %vm2066, %v3551, 0
      %v3688 = vsel %vm2066, %v3554, 0
      %v3691 = vsel %vm2066, %v3557, 0
      %v3694 = vsel %vm2066, %v3560, 0
      %v3697 = vsel %vm2066, %v3563, 0
      %3699 = vmatpush.bf16.msra.mxu0 %v3646
      %3700 = vmatpush.bf16.msra.mxu0 %v3645
      %3701 = vmatpush.bf16.msra.mxu0 %v3644
      %3702 = vmatpush.bf16.msra.mxu0 %v3643
      %3703 = vmatpush.bf16.msra.mxu0 %v3642
      %3704 = vmatpush.bf16.msra.mxu0 %v3641
      %3705 = vmatpush.bf16.msra.mxu0 %v3640
      %3706 = vmatpush.bf16.msra.mxu0 %v3639
      %3707 = vmatmul.bf16.gmra.mxu0 %v3540
      %v3708 = vpop.f32.mrf.mxu0
      %v3709 = vadd.f32 %v3565, %v3708
      %v3710 = vpop.f32.mrf.mxu0
      %v3711 = vadd.f32 %v3565, %v3710
      %3712 = vmatmul.bf16.gmra.mxu0 %v3543
      %v3713 = vpop.f32.mrf.mxu0
      %v3714 = vadd.f32 %v3565, %v3713
      %v3715 = vpop.f32.mrf.mxu0
      %v3716 = vadd.f32 %v3565, %v3715
      %3717 = vmatmul.bf16.gmra.mxu0 %v3546
      %v3718 = vpop.f32.mrf.mxu0
      %v3719 = vadd.f32 %v3565, %v3718
      %v3720 = vpop.f32.mrf.mxu0
      %v3721 = vadd.f32 %v3565, %v3720
      %3722 = vmatmul.bf16.gmra.mxu0 %v3549
      %v3723 = vpop.f32.mrf.mxu0
      %v3724 = vadd.f32 %v3565, %v3723
      %v3725 = vpop.f32.mrf.mxu0
      %v3726 = vadd.f32 %v3565, %v3725
      %3727 = vmatmul.bf16.gmra.mxu0 %v3552
      %v3728 = vpop.f32.mrf.mxu0
      %v3729 = vadd.f32 %v3565, %v3728
      %v3730 = vpop.f32.mrf.mxu0
      %v3731 = vadd.f32 %v3565, %v3730
      %3732 = vmatmul.bf16.gmra.mxu0 %v3555
      %v3733 = vpop.f32.mrf.mxu0
      %v3734 = vadd.f32 %v3565, %v3733
      %v3735 = vpop.f32.mrf.mxu0
      %v3736 = vadd.f32 %v3565, %v3735
      %3737 = vmatmul.bf16.gmra.mxu0 %v3558
      %v3738 = vpop.f32.mrf.mxu0
      %v3739 = vadd.f32 %v3565, %v3738
      %v3740 = vpop.f32.mrf.mxu0
      %v3741 = vadd.f32 %v3565, %v3740
      %3742 = vmatmul.bf16.gmra.mxu0 %v3561
      %v3743 = vpop.f32.mrf.mxu0
      %v3744 = vadd.f32 %v3565, %v3743
      %v3745 = vpop.f32.mrf.mxu0
      %v3746 = vadd.f32 %v3565, %v3745
      %3747 = vdwg.mxu0
      %3748 = vmatpush.bf16.msra.mxu0 %v3654
      %3749 = vmatpush.bf16.msra.mxu0 %v3653
      %3750 = vmatpush.bf16.msra.mxu0 %v3652
      %3751 = vmatpush.bf16.msra.mxu0 %v3651
      %3752 = vmatpush.bf16.msra.mxu0 %v3650
      %3753 = vmatpush.bf16.msra.mxu0 %v3649
      %3754 = vmatpush.bf16.msra.mxu0 %v3648
      %3755 = vmatpush.bf16.msra.mxu0 %v3647
      %3756 = vmatmul.bf16.gmra.mxu0 %v3541
      %v3757 = vpop.f32.mrf.mxu0
      %v3758 = vadd.f32 %v3709, %v3757
      %v3759 = vpop.f32.mrf.mxu0
      %v3760 = vadd.f32 %v3711, %v3759
      %3761 = vmatmul.bf16.gmra.mxu0 %v3544
      %v3762 = vpop.f32.mrf.mxu0
      %v3763 = vadd.f32 %v3714, %v3762
      %v3764 = vpop.f32.mrf.mxu0
      %v3765 = vadd.f32 %v3716, %v3764
      %3766 = vmatmul.bf16.gmra.mxu0 %v3547
      %v3767 = vpop.f32.mrf.mxu0
      %v3768 = vadd.f32 %v3719, %v3767
      %v3769 = vpop.f32.mrf.mxu0
      %v3770 = vadd.f32 %v3721, %v3769
      %3771 = vmatmul.bf16.gmra.mxu0 %v3550
      %v3772 = vpop.f32.mrf.mxu0
      %v3773 = vadd.f32 %v3724, %v3772
      %v3774 = vpop.f32.mrf.mxu0
      %v3775 = vadd.f32 %v3726, %v3774
      %3776 = vmatmul.bf16.gmra.mxu0 %v3553
      %v3777 = vpop.f32.mrf.mxu0
      %v3778 = vadd.f32 %v3729, %v3777
      %v3779 = vpop.f32.mrf.mxu0
      %v3780 = vadd.f32 %v3731, %v3779
      %3781 = vmatmul.bf16.gmra.mxu0 %v3556
      %v3782 = vpop.f32.mrf.mxu0
      %v3783 = vadd.f32 %v3734, %v3782
      %v3784 = vpop.f32.mrf.mxu0
      %v3785 = vadd.f32 %v3736, %v3784
      %3786 = vmatmul.bf16.gmra.mxu0 %v3559
      %v3787 = vpop.f32.mrf.mxu0
      %v3788 = vadd.f32 %v3739, %v3787
      %v3789 = vpop.f32.mrf.mxu0
      %v3790 = vadd.f32 %v3741, %v3789
      %3791 = vmatmul.bf16.gmra.mxu0 %v3562
      %v3792 = vpop.f32.mrf.mxu0
      %v3793 = vadd.f32 %v3744, %v3792
      %v3794 = vpop.f32.mrf.mxu0
      %v3795 = vadd.f32 %v3746, %v3794
      %3796 = vdwg.mxu0
      %3797 = vmatpush.bf16.msra.mxu0 0
      %3798 = vmatpush.bf16.msra.mxu0 0
      %3799 = vmatpush.bf16.msra.mxu0 0
      %3800 = vmatpush.bf16.msra.mxu0 0
      %3801 = vmatpush.bf16.msra.mxu0 0
      %3802 = vmatpush.bf16.msra.mxu0 0
      %3803 = vmatpush.bf16.msra.mxu0 %v3656
      %3804 = vmatpush.bf16.msra.mxu0 %v3655
      %3805 = vmatmul.bf16.gmra.mxu0 %v3676
      %v3806 = vpop.f32.mrf.mxu0
      %v3807 = vadd.f32 %v3758, %v3806
      %v3808 = vpop.f32.mrf.mxu0
      %v3809 = vadd.f32 %v3760, %v3808
      %3810 = vmatmul.bf16.gmra.mxu0 %v3679
      %v3811 = vpop.f32.mrf.mxu0
      %v3812 = vadd.f32 %v3763, %v3811
      %v3813 = vpop.f32.mrf.mxu0
      %v3814 = vadd.f32 %v3765, %v3813
      %3815 = vmatmul.bf16.gmra.mxu0 %v3682
      %v3816 = vpop.f32.mrf.mxu0
      %v3817 = vadd.f32 %v3768, %v3816
      %v3818 = vpop.f32.mrf.mxu0
      %v3819 = vadd.f32 %v3770, %v3818
      %3820 = vmatmul.bf16.gmra.mxu0 %v3685
      %v3821 = vpop.f32.mrf.mxu0
      %v3822 = vadd.f32 %v3773, %v3821
      %v3823 = vpop.f32.mrf.mxu0
      %v3824 = vadd.f32 %v3775, %v3823
      %3825 = vmatmul.bf16.gmra.mxu0 %v3688
      %v3826 = vpop.f32.mrf.mxu0
      %v3827 = vadd.f32 %v3778, %v3826
      %v3828 = vpop.f32.mrf.mxu0
      %v3829 = vadd.f32 %v3780, %v3828
      %3830 = vmatmul.bf16.gmra.mxu0 %v3691
      %v3831 = vpop.f32.mrf.mxu0
      %v3832 = vadd.f32 %v3783, %v3831
      %v3833 = vpop.f32.mrf.mxu0
      %v3834 = vadd.f32 %v3785, %v3833
      %3835 = vmatmul.bf16.gmra.mxu0 %v3694
      %v3836 = vpop.f32.mrf.mxu0
      %v3837 = vadd.f32 %v3788, %v3836
      %v3838 = vpop.f32.mrf.mxu0
      %v3839 = vadd.f32 %v3790, %v3838
      %3840 = vmatmul.bf16.gmra.mxu0 %v3697
      %v3841 = vpop.f32.mrf.mxu0
      %v3842 = vadd.f32 %v3793, %v3841
      %v3843 = vpop.f32.mrf.mxu0
      %v3844 = vadd.f32 %v3795, %v3843
      %3845 = vdwg.mxu0
      %v3846 = vld [vmem:[%s553] sm:$0x1]
      %v3847 = vld [vmem:[%s556] sm:$0x1]
      %v3848 = vsel %vm2066, %v3807, 0.0
      %v3849 = vsel %vm2066, %v3809, 0.0
      %v3850 = vadd.f32 %v3848, %v3849
      %v3851 = vsel %vm2066, %v3812, 0.0
      %v3852 = vadd.f32 %v3850, %v3851
      %v3853 = vsel %vm2066, %v3814, 0.0
      %v3854 = vadd.f32 %v3852, %v3853
      %v3855 = vsel %vm2066, %v3817, 0.0
      %v3856 = vadd.f32 %v3854, %v3855
      %v3857 = vsel %vm2066, %v3819, 0.0
      %v3858 = vadd.f32 %v3856, %v3857
      %v3859 = vsel %vm2066, %v3822, 0.0
      %v3860 = vadd.f32 %v3858, %v3859
      %v3861 = vsel %vm2066, %v3824, 0.0
      %v3862 = vadd.f32 %v3860, %v3861
      %v3863 = vsel %vm2066, %v3827, 0.0
      %v3864 = vadd.f32 %v3862, %v3863
      %v3865 = vsel %vm2066, %v3829, 0.0
      %v3866 = vadd.f32 %v3864, %v3865
      %v3867 = vsel %vm2066, %v3832, 0.0
      %v3868 = vadd.f32 %v3866, %v3867
      %v3869 = vsel %vm2066, %v3834, 0.0
      %v3870 = vadd.f32 %v3868, %v3869
      %v3871 = vsel %vm2066, %v3837, 0.0
      %v3872 = vadd.f32 %v3870, %v3871
      %v3873 = vsel %vm2066, %v3839, 0.0
      %v3874 = vadd.f32 %v3872, %v3873
      %v3875 = vsel %vm2066, %v3842, 0.0
      %v3876 = vadd.f32 %v3874, %v3875
      %v3877 = vsel %vm2066, %v3844, 0.0
      %v3878 = vadd.f32 %v3876, %v3877
      %v3879 = vrot.slane %v3878, 4
      %v3880 = vadd.f32 %v3878, %v3879
      %v3881 = vrot.slane %v3880, 2
      %v3882 = vadd.f32 %v3880, %v3881
      %v3883 = vrot.slane %v3882, 1
      %v3884 = vadd.f32 %v3882, %v3883
      %v3885 = vmul.f32 %v3884, %v2516
      %v3886 = vsub.f32 %v3807, %v3885
      %v3887 = vsub.f32 %v3809, %v3885
      %v3888 = vsub.f32 %v3812, %v3885
      %v3889 = vsub.f32 %v3814, %v3885
      %v3890 = vsub.f32 %v3817, %v3885
      %v3891 = vsub.f32 %v3819, %v3885
      %v3892 = vsub.f32 %v3822, %v3885
      %v3893 = vsub.f32 %v3824, %v3885
      %v3894 = vsub.f32 %v3827, %v3885
      %v3895 = vsub.f32 %v3829, %v3885
      %v3896 = vsub.f32 %v3832, %v3885
      %v3897 = vsub.f32 %v3834, %v3885
      %v3898 = vsub.f32 %v3837, %v3885
      %v3899 = vsub.f32 %v3839, %v3885
      %v3900 = vsub.f32 %v3842, %v3885
      %v3901 = vsub.f32 %v3844, %v3885
      %v3902 = vmul.f32 %v3886, %v3886
      %v3903 = vmul.f32 %v3887, %v3887
      %v3904 = vmul.f32 %v3888, %v3888
      %v3905 = vmul.f32 %v3889, %v3889
      %v3906 = vmul.f32 %v3890, %v3890
      %v3907 = vmul.f32 %v3891, %v3891
      %v3908 = vmul.f32 %v3892, %v3892
      %v3909 = vmul.f32 %v3893, %v3893
      %v3910 = vmul.f32 %v3894, %v3894
      %v3911 = vmul.f32 %v3895, %v3895
      %v3912 = vmul.f32 %v3896, %v3896
      %v3913 = vmul.f32 %v3897, %v3897
      %v3914 = vmul.f32 %v3898, %v3898
      %v3915 = vmul.f32 %v3899, %v3899
      %v3916 = vmul.f32 %v3900, %v3900
      %v3917 = vmul.f32 %v3901, %v3901
      %v3918 = vsel %vm2066, %v3902, 0.0
      %v3919 = vsel %vm2066, %v3903, 0.0
      %v3920 = vadd.f32 %v3918, %v3919
      %v3921 = vsel %vm2066, %v3904, 0.0
      %v3922 = vadd.f32 %v3920, %v3921
      %v3923 = vsel %vm2066, %v3905, 0.0
      %v3924 = vadd.f32 %v3922, %v3923
      %v3925 = vsel %vm2066, %v3906, 0.0
      %v3926 = vadd.f32 %v3924, %v3925
      %v3927 = vsel %vm2066, %v3907, 0.0
      %v3928 = vadd.f32 %v3926, %v3927
      %v3929 = vsel %vm2066, %v3908, 0.0
      %v3930 = vadd.f32 %v3928, %v3929
      %v3931 = vsel %vm2066, %v3909, 0.0
      %v3932 = vadd.f32 %v3930, %v3931
      %v3933 = vsel %vm2066, %v3910, 0.0
      %v3934 = vadd.f32 %v3932, %v3933
      %v3935 = vsel %vm2066, %v3911, 0.0
      %v3936 = vadd.f32 %v3934, %v3935
      %v3937 = vsel %vm2066, %v3912, 0.0
      %v3938 = vadd.f32 %v3936, %v3937
      %v3939 = vsel %vm2066, %v3913, 0.0
      %v3940 = vadd.f32 %v3938, %v3939
      %v3941 = vsel %vm2066, %v3914, 0.0
      %v3942 = vadd.f32 %v3940, %v3941
      %v3943 = vsel %vm2066, %v3915, 0.0
      %v3944 = vadd.f32 %v3942, %v3943
      %v3945 = vsel %vm2066, %v3916, 0.0
      %v3946 = vadd.f32 %v3944, %v3945
      %v3947 = vsel %vm2066, %v3917, 0.0
      %v3948 = vadd.f32 %v3946, %v3947
      %v3949 = vrot.slane %v3948, 4
      %v3950 = vadd.f32 %v3948, %v3949
      %v3951 = vrot.slane %v3950, 2
      %v3952 = vadd.f32 %v3950, %v3951
      %v3953 = vrot.slane %v3952, 1
      %v3954 = vadd.f32 %v3952, %v3953
      %v3955 = vmul.f32 %v3954, %v2516
      %v3956 = vadd.f32 %v3955, 1e-05
      %v3957 = vrsqrt.pop %v3956
      %v3958 = vmul.f32 %v3957, %v3956
      %v3959 = vmul.f32 %v3958, %v3957
      %v3960 = vmul.f32 0.5, %v3959
      %v3961 = vsub.f32 1.5, %v3960
      %v3962 = vmul.f32 %v3957, %v3961
      %vm3963 = vweird.f32 %v3956
      %vm3964 = vweird.f32 %v3957
      %vm3965 = vmor %vm3963, %vm3964
      %v3966 = vsel %vm3965, %v3957, %v3962
      %v3967 = vmul.f32 %v3886, %v3966
      %v3968 = vmul.f32 %v3887, %v3966
      %v3969 = vmul.f32 %v3888, %v3966
      %v3970 = vmul.f32 %v3889, %v3966
      %v3971 = vmul.f32 %v3890, %v3966
      %v3972 = vmul.f32 %v3891, %v3966
      %v3973 = vmul.f32 %v3892, %v3966
      %v3974 = vmul.f32 %v3893, %v3966
      %v3975 = vmul.f32 %v3894, %v3966
      %v3976 = vmul.f32 %v3895, %v3966
      %v3977 = vmul.f32 %v3896, %v3966
      %v3978 = vmul.f32 %v3897, %v3966
      %v3979 = vmul.f32 %v3898, %v3966
      %v3980 = vmul.f32 %v3899, %v3966
      %v3981 = vmul.f32 %v3900, %v3966
      %v3982 = vmul.f32 %v3901, %v3966
      %v3984 = vperm.slane %v3846, 0
      %v3986 = vmul.f32 %v3967, %v3984
      %v3987 = vmul.f32 %v3968, %v3984
      %v3988 = vmul.f32 %v3969, %v3984
      %v3989 = vmul.f32 %v3970, %v3984
      %v3990 = vmul.f32 %v3971, %v3984
      %v3991 = vmul.f32 %v3972, %v3984
      %v3992 = vmul.f32 %v3973, %v3984
      %v3993 = vmul.f32 %v3974, %v3984
      %v3994 = vmul.f32 %v3975, %v3984
      %v3995 = vmul.f32 %v3976, %v3984
      %v3996 = vmul.f32 %v3977, %v3984
      %v3997 = vmul.f32 %v3978, %v3984
      %v3998 = vmul.f32 %v3979, %v3984
      %v3999 = vmul.f32 %v3980, %v3984
      %v4000 = vmul.f32 %v3981, %v3984
      %v4001 = vmul.f32 %v3982, %v3984
      %v4003 = vperm.slane %v3847, 0
      %v4005 = vadd.f32 %v3986, %v4003
      %v4006 = vadd.f32 %v3987, %v4003
      %v4007 = vadd.f32 %v3988, %v4003
      %v4008 = vadd.f32 %v3989, %v4003
      %v4009 = vadd.f32 %v3990, %v4003
      %v4010 = vadd.f32 %v3991, %v4003
      %v4011 = vadd.f32 %v3992, %v4003
      %v4012 = vadd.f32 %v3993, %v4003
      %v4013 = vadd.f32 %v3994, %v4003
      %v4014 = vadd.f32 %v3995, %v4003
      %v4015 = vadd.f32 %v3996, %v4003
      %v4016 = vadd.f32 %v3997, %v4003
      %v4017 = vadd.f32 %v3998, %v4003
      %v4018 = vadd.f32 %v3999, %v4003
      %v4019 = vadd.f32 %v4000, %v4003
      %v4020 = vadd.f32 %v4001, %v4003
      %v4021 = vadd.f32 %v4005, %v777
      %v4022 = vadd.f32 %v4006, %v778
      %v4023 = vadd.f32 %v4007, %v779
      %v4024 = vadd.f32 %v4008, %v780
      %v4025 = vadd.f32 %v4009, %v781
      %v4026 = vadd.f32 %v4010, %v782
      %v4027 = vadd.f32 %v4011, %v783
      %v4028 = vadd.f32 %v4012, %v784
      %v4029 = vadd.f32 %v4013, %v785
      %v4030 = vadd.f32 %v4014, %v786
      %v4031 = vadd.f32 %v4015, %v787
      %v4032 = vadd.f32 %v4016, %v788
      %v4033 = vadd.f32 %v4017, %v789
      %v4034 = vadd.f32 %v4018, %v790
      %v4035 = vadd.f32 %v4019, %v791
      %v4036 = vadd.f32 %v4020, %v792
      %vm4037 = vcmp.gt.f32.partialorder %v4021, 0.0
      %vm4038 = vcmp.gt.f32.partialorder %v4022, 0.0
      %vm4039 = vcmp.gt.f32.partialorder %v4023, 0.0
      %vm4040 = vcmp.gt.f32.partialorder %v4024, 0.0
      %vm4041 = vcmp.gt.f32.partialorder %v4025, 0.0
      %vm4042 = vcmp.gt.f32.partialorder %v4026, 0.0
      %vm4043 = vcmp.gt.f32.partialorder %v4027, 0.0
      %vm4044 = vcmp.gt.f32.partialorder %v4028, 0.0
      %vm4045 = vcmp.gt.f32.partialorder %v4029, 0.0
      %vm4046 = vcmp.gt.f32.partialorder %v4030, 0.0
      %vm4047 = vcmp.gt.f32.partialorder %v4031, 0.0
      %vm4048 = vcmp.gt.f32.partialorder %v4032, 0.0
      %vm4049 = vcmp.gt.f32.partialorder %v4033, 0.0
      %vm4050 = vcmp.gt.f32.partialorder %v4034, 0.0
      %vm4051 = vcmp.gt.f32.partialorder %v4035, 0.0
      %vm4052 = vcmp.gt.f32.partialorder %v4036, 0.0
      %v4053 = vmul.f32 %v4021, 1.442695
      %v4054 = vpow.pop %v4053
      %v4055 = vmul.f32 %v4022, 1.442695
      %v4056 = vpow.pop %v4055
      %v4057 = vmul.f32 %v4023, 1.442695
      %v4058 = vpow.pop %v4057
      %v4059 = vmul.f32 %v4024, 1.442695
      %v4060 = vpow.pop %v4059
      %v4061 = vmul.f32 %v4025, 1.442695
      %v4062 = vpow.pop %v4061
      %v4063 = vmul.f32 %v4026, 1.442695
      %v4064 = vpow.pop %v4063
      %v4065 = vmul.f32 %v4027, 1.442695
      %v4066 = vpow.pop %v4065
      %v4067 = vmul.f32 %v4028, 1.442695
      %v4068 = vpow.pop %v4067
      %v4069 = vmul.f32 %v4029, 1.442695
      %v4070 = vpow.pop %v4069
      %v4071 = vmul.f32 %v4030, 1.442695
      %v4072 = vpow.pop %v4071
      %v4073 = vmul.f32 %v4031, 1.442695
      %v4074 = vpow.pop %v4073
      %v4075 = vmul.f32 %v4032, 1.442695
      %v4076 = vpow.pop %v4075
      %v4077 = vmul.f32 %v4033, 1.442695
      %v4078 = vpow.pop %v4077
      %v4079 = vmul.f32 %v4034, 1.442695
      %v4080 = vpow.pop %v4079
      %v4081 = vmul.f32 %v4035, 1.442695
      %v4082 = vpow.pop %v4081
      %v4083 = vmul.f32 %v4036, 1.442695
      %v4084 = vpow.pop %v4083
      %v4085 = vsub.f32 %v4054, 1.0
      %v4086 = vsub.f32 %v4056, 1.0
      %v4087 = vsub.f32 %v4058, 1.0
      %v4088 = vsub.f32 %v4060, 1.0
      %v4089 = vsub.f32 %v4062, 1.0
      %v4090 = vsub.f32 %v4064, 1.0
      %v4091 = vsub.f32 %v4066, 1.0
      %v4092 = vsub.f32 %v4068, 1.0
      %v4093 = vsub.f32 %v4070, 1.0
      %v4094 = vsub.f32 %v4072, 1.0
      %v4095 = vsub.f32 %v4074, 1.0
      %v4096 = vsub.f32 %v4076, 1.0
      %v4097 = vsub.f32 %v4078, 1.0
      %v4098 = vsub.f32 %v4080, 1.0
      %v4099 = vsub.f32 %v4082, 1.0
      %v4100 = vsub.f32 %v4084, 1.0
      %v4101 = vmul.f32 %v4085, 1.6732632
      %v4102 = vmul.f32 %v4086, 1.6732632
      %v4103 = vmul.f32 %v4087, 1.6732632
      %v4104 = vmul.f32 %v4088, 1.6732632
      %v4105 = vmul.f32 %v4089, 1.6732632
      %v4106 = vmul.f32 %v4090, 1.6732632
      %v4107 = vmul.f32 %v4091, 1.6732632
      %v4108 = vmul.f32 %v4092, 1.6732632
      %v4109 = vmul.f32 %v4093, 1.6732632
      %v4110 = vmul.f32 %v4094, 1.6732632
      %v4111 = vmul.f32 %v4095, 1.6732632
      %v4112 = vmul.f32 %v4096, 1.6732632
      %v4113 = vmul.f32 %v4097, 1.6732632
      %v4114 = vmul.f32 %v4098, 1.6732632
      %v4115 = vmul.f32 %v4099, 1.6732632
      %v4116 = vmul.f32 %v4100, 1.6732632
      %v4117 = vsel %vm4037, %v4021, %v4101
      %v4118 = vsel %vm4038, %v4022, %v4102
      %v4119 = vsel %vm4039, %v4023, %v4103
      %v4120 = vsel %vm4040, %v4024, %v4104
      %v4121 = vsel %vm4041, %v4025, %v4105
      %v4122 = vsel %vm4042, %v4026, %v4106
      %v4123 = vsel %vm4043, %v4027, %v4107
      %v4124 = vsel %vm4044, %v4028, %v4108
      %v4125 = vsel %vm4045, %v4029, %v4109
      %v4126 = vsel %vm4046, %v4030, %v4110
      %v4127 = vsel %vm4047, %v4031, %v4111
      %v4128 = vsel %vm4048, %v4032, %v4112
      %v4129 = vsel %vm4049, %v4033, %v4113
      %v4130 = vsel %vm4050, %v4034, %v4114
      %v4131 = vsel %vm4051, %v4035, %v4115
      %v4132 = vsel %vm4052, %v4036, %v4116
      %v4133 = vmul.f32 %v4117, 1.050701
      %v4134 = vmul.f32 %v4118, 1.050701
      %v4135 = vmul.f32 %v4119, 1.050701
      %v4136 = vmul.f32 %v4120, 1.050701
      %v4137 = vmul.f32 %v4121, 1.050701
      %v4138 = vmul.f32 %v4122, 1.050701
      %v4139 = vmul.f32 %v4123, 1.050701
      %v4140 = vmul.f32 %v4124, 1.050701
      %v4141 = vmul.f32 %v4125, 1.050701
      %v4142 = vmul.f32 %v4126, 1.050701
      %v4143 = vmul.f32 %v4127, 1.050701
      %v4144 = vmul.f32 %v4128, 1.050701
      %v4145 = vmul.f32 %v4129, 1.050701
      %v4146 = vmul.f32 %v4130, 1.050701
      %v4147 = vmul.f32 %v4131, 1.050701
      %v4148 = vmul.f32 %v4132, 1.050701
      %4149 = vst.msk [vmem:[#allocation2] sm:$0xff] %vm2066, %v4133
      %4150 = vst.msk [vmem:[#allocation2 + $0x8] sm:$0xff] %vm2066, %v4134
      %4151 = vst.msk [vmem:[#allocation2 + $0x10] sm:$0xff] %vm2066, %v4135
      %4152 = vst.msk [vmem:[#allocation2 + $0x18] sm:$0xff] %vm2066, %v4136
      %4153 = vst.msk [vmem:[#allocation2 + $0x20] sm:$0xff] %vm2066, %v4137
      %4154 = vst.msk [vmem:[#allocation2 + $0x28] sm:$0xff] %vm2066, %v4138
      %4155 = vst.msk [vmem:[#allocation2 + $0x30] sm:$0xff] %vm2066, %v4139
      %4156 = vst.msk [vmem:[#allocation2 + $0x38] sm:$0xff] %vm2066, %v4140
      %4157 = vst.msk [vmem:[#allocation2 + $0x40] sm:$0xff] %vm2066, %v4141
      %4158 = vst.msk [vmem:[#allocation2 + $0x48] sm:$0xff] %vm2066, %v4142
      %4159 = vst.msk [vmem:[#allocation2 + $0x50] sm:$0xff] %vm2066, %v4143
      %4160 = vst.msk [vmem:[#allocation2 + $0x58] sm:$0xff] %vm2066, %v4144
      %4161 = vst.msk [vmem:[#allocation2 + $0x60] sm:$0xff] %vm2066, %v4145
      %4162 = vst.msk [vmem:[#allocation2 + $0x68] sm:$0xff] %vm2066, %v4146
      %4163 = vst.msk [vmem:[#allocation2 + $0x70] sm:$0xff] %vm2066, %v4147
      %4164 = vst.msk [vmem:[#allocation2 + $0x78] sm:$0xff] %vm2066, %v4148
      %p4165 = scmp.eq.s32.totalorder %s25, 1
      // Predicated region
      $region81: #{_lambda_.1} parent=75 // pred_check
        %p4166 = pneg %p4165
      $region82: #{_lambda_.1} parent=75 // pred_check_branch
        %4168 = sbr.rel (%p4166) target = $region84
      $region83: #{_lambda_.1} parent=75 // pred_region
        %v4169 = vld [vmem:[%s12] sm:$0xf]
        %v4170 = vld [vmem:[%s12 + $0x4] sm:$0xf]
        %v4171 = vld [vmem:[%s12 + $0x8] sm:$0xf]
        %v4172 = vld [vmem:[%s12 + $0xc] sm:$0xf]
        %v4173 = vld [vmem:[%s12 + $0x10] sm:$0xf]
        %v4174 = vld [vmem:[%s12 + $0x14] sm:$0xf]
        %v4175 = vld [vmem:[%s12 + $0x18] sm:$0xf]
        %v4176 = vld [vmem:[%s12 + $0x1c] sm:$0xf]
        %v4177 = vld [vmem:[%s12 + $0x20] sm:$0xf]
        %v4178 = vld [vmem:[%s12 + $0x24] sm:$0xf]
        %v4179 = vld [vmem:[%s12 + $0x28] sm:$0xf]
        %v4180 = vld [vmem:[%s12 + $0x2c] sm:$0xf]
        %v4181 = vld [vmem:[%s12 + $0x30] sm:$0xf]
        %v4182 = vld [vmem:[%s12 + $0x34] sm:$0xf]
        %v4183 = vld [vmem:[%s12 + $0x38] sm:$0xf]
        %v4184 = vld [vmem:[%s12 + $0x3c] sm:$0xf]
        %v4185 = vld [vmem:[%s12 + $0x40] sm:$0xf]
        %v4186 = vld [vmem:[%s12 + $0x44] sm:$0xf]
        %v4187 = vld [vmem:[%s12 + $0x48] sm:$0xf]
        %v4188 = vld [vmem:[%s12 + $0x4c] sm:$0xf]
        %v4189 = vld [vmem:[%s12 + $0x50] sm:$0xf]
        %v4190 = vld [vmem:[%s12 + $0x54] sm:$0xf]
        %v4191 = vld [vmem:[%s12 + $0x58] sm:$0xf]
        %v4192 = vld [vmem:[%s12 + $0x5c] sm:$0xf]
        %v4193 = vld [vmem:[%s12 + $0x60] sm:$0xf]
        %v4194 = vld [vmem:[%s12 + $0x64] sm:$0xf]
        %v4195 = vld [vmem:[%s12 + $0x68] sm:$0xf]
        %v4196 = vld [vmem:[%s12 + $0x6c] sm:$0xf]
        %v4197 = vld [vmem:[%s12 + $0x70] sm:$0xf]
        %v4198 = vld [vmem:[%s12 + $0x74] sm:$0xf]
        %v4199 = vld [vmem:[%s12 + $0x78] sm:$0xf]
        %v4200 = vld [vmem:[%s12 + $0x7c] sm:$0xf]
        %v4201 = vld [vmem:[%s12 + $0x80] sm:$0xf]
        %v4202 = vld [vmem:[%s12 + $0x84] sm:$0xf]
        %v4203 = vld [vmem:[%s12 + $0x88] sm:$0xf]
        %v4204 = vld [vmem:[%s12 + $0x8c] sm:$0xf]
        %v4205 = vld [vmem:[%s13] sm:$0x1]
        %v4208 = vrot.slane %v4147, 7
        %v4209 = vrot.slane %v4148, 7
        %v4210 = vsel %vm832, %v4208, %v4209
        %v4227 = vrot.slane %v4133, 7
        %v4228 = vrot.slane %v4134, 7
        %v4229 = vsel %vm832, %v4227, %v4228
        %v4230 = vrot.slane %v4135, 7
        %v4231 = vsel %vm832, %v4228, %v4230
        %v4232 = vrot.slane %v4136, 7
        %v4233 = vsel %vm832, %v4230, %v4232
        %v4234 = vrot.slane %v4137, 7
        %v4235 = vsel %vm832, %v4232, %v4234
        %v4236 = vrot.slane %v4138, 7
        %v4237 = vsel %vm832, %v4234, %v4236
        %v4238 = vrot.slane %v4139, 7
        %v4239 = vsel %vm832, %v4236, %v4238
        %v4240 = vrot.slane %v4140, 7
        %v4241 = vsel %vm832, %v4238, %v4240
        %v4242 = vrot.slane %v4141, 7
        %v4243 = vsel %vm832, %v4240, %v4242
        %v4244 = vrot.slane %v4142, 7
        %v4245 = vsel %vm832, %v4242, %v4244
        %v4246 = vrot.slane %v4143, 7
        %v4247 = vsel %vm832, %v4244, %v4246
        %v4248 = vrot.slane %v4144, 7
        %v4249 = vsel %vm832, %v4246, %v4248
        %v4250 = vrot.slane %v4145, 7
        %v4251 = vsel %vm832, %v4248, %v4250
        %v4252 = vrot.slane %v4146, 7
        %v4253 = vsel %vm832, %v4250, %v4252
        %v4254 = vsel %vm832, %v4252, %v4208
        %v4270 = vsel %vm832, %v4209, %v4227
        %v4271 = vmul.f32 %v4210, %v899
        %v4272 = vmul.f32 %v4270, %v904
        %v4273 = vmul.f32 %v4229, %v909
        %v4274 = vmul.f32 %v4231, %v914
        %v4275 = vmul.f32 %v4233, %v919
        %v4276 = vmul.f32 %v4235, %v924
        %v4277 = vmul.f32 %v4237, %v929
        %v4278 = vmul.f32 %v4239, %v934
        %v4279 = vmul.f32 %v4241, %v939
        %v4280 = vmul.f32 %v4243, %v944
        %v4281 = vmul.f32 %v4245, %v949
        %v4282 = vmul.f32 %v4247, %v954
        %v4283 = vmul.f32 %v4249, %v959
        %v4284 = vmul.f32 %v4251, %v964
        %v4285 = vmul.f32 %v4253, %v969
        %v4286 = vmul.f32 %v4254, %v974
        %v4287 = vmul.f32 %v4148, %v994
        %v4288 = vmul.f32 %v4133, %v998
        %v4289 = vmul.f32 %v4134, %v1002
        %v4290 = vmul.f32 %v4135, %v1006
        %v4291 = vmul.f32 %v4136, %v1010
        %v4292 = vmul.f32 %v4137, %v1014
        %v4293 = vmul.f32 %v4138, %v1018
        %v4294 = vmul.f32 %v4139, %v1022
        %v4295 = vmul.f32 %v4140, %v1026
        %v4296 = vmul.f32 %v4141, %v1030
        %v4297 = vmul.f32 %v4142, %v1034
        %v4298 = vmul.f32 %v4143, %v1038
        %v4299 = vmul.f32 %v4144, %v1042
        %v4300 = vmul.f32 %v4145, %v1046
        %v4301 = vmul.f32 %v4146, %v1050
        %v4302 = vmul.f32 %v4147, %v1054
        %v4303 = vrot.slane %v4148, 1
        %v4305 = vrot.slane %v4133, 1
        %v4306 = vrot.slane %v4134, 1
        %v4307 = vsel %vm1074, %v4305, %v4306
        %v4308 = vrot.slane %v4135, 1
        %v4309 = vsel %vm1074, %v4306, %v4308
        %v4310 = vrot.slane %v4136, 1
        %v4311 = vsel %vm1074, %v4308, %v4310
        %v4312 = vrot.slane %v4137, 1
        %v4313 = vsel %vm1074, %v4310, %v4312
        %v4314 = vrot.slane %v4138, 1
        %v4315 = vsel %vm1074, %v4312, %v4314
        %v4316 = vrot.slane %v4139, 1
        %v4317 = vsel %vm1074, %v4314, %v4316
        %v4318 = vrot.slane %v4140, 1
        %v4319 = vsel %vm1074, %v4316, %v4318
        %v4320 = vrot.slane %v4141, 1
        %v4321 = vsel %vm1074, %v4318, %v4320
        %v4322 = vrot.slane %v4142, 1
        %v4323 = vsel %vm1074, %v4320, %v4322
        %v4324 = vrot.slane %v4143, 1
        %v4325 = vsel %vm1074, %v4322, %v4324
        %v4326 = vrot.slane %v4144, 1
        %v4327 = vsel %vm1074, %v4324, %v4326
        %v4328 = vrot.slane %v4145, 1
        %v4329 = vsel %vm1074, %v4326, %v4328
        %v4330 = vrot.slane %v4146, 1
        %v4331 = vsel %vm1074, %v4328, %v4330
        %v4332 = vrot.slane %v4147, 1
        %v4333 = vsel %vm1074, %v4330, %v4332
        %v4334 = vsel %vm1074, %v4332, %v4303
        %v4351 = vsel %vm1074, %v4303, %v4305
        %v4352 = vmul.f32 %v4351, %v1124
        %v4353 = vmul.f32 %v4307, %v1128
        %v4354 = vmul.f32 %v4309, %v1132
        %v4355 = vmul.f32 %v4311, %v1136
        %v4356 = vmul.f32 %v4313, %v1140
        %v4357 = vmul.f32 %v4315, %v1144
        %v4358 = vmul.f32 %v4317, %v1148
        %v4359 = vmul.f32 %v4319, %v1152
        %v4360 = vmul.f32 %v4321, %v1156
        %v4361 = vmul.f32 %v4323, %v1160
        %v4362 = vmul.f32 %v4325, %v1164
        %v4363 = vmul.f32 %v4327, %v1168
        %v4364 = vmul.f32 %v4329, %v1172
        %v4365 = vmul.f32 %v4331, %v1176
        %v4366 = vmul.f32 %v4333, %v1180
        %v4367 = vmul.f32 %v4334, %v1184
        %v4368 = vmul.f32 %v4270, %v1204
        %v4369 = vmul.f32 %v4229, %v1208
        %v4370 = vmul.f32 %v4231, %v1212
        %v4371 = vmul.f32 %v4233, %v1216
        %v4372 = vmul.f32 %v4235, %v1220
        %v4373 = vmul.f32 %v4237, %v1224
        %v4374 = vmul.f32 %v4239, %v1228
        %v4375 = vmul.f32 %v4241, %v1232
        %v4376 = vmul.f32 %v4243, %v1236
        %v4377 = vmul.f32 %v4245, %v1240
        %v4378 = vmul.f32 %v4247, %v1244
        %v4379 = vmul.f32 %v4249, %v1248
        %v4380 = vmul.f32 %v4251, %v1252
        %v4381 = vmul.f32 %v4253, %v1256
        %v4382 = vmul.f32 %v4254, %v1260
        %v4383 = vmul.f32 %v4210, %v1264
        %v4384 = vmul.f32 %v4133, %v1284
        %v4385 = vmul.f32 %v4134, %v1288
        %v4386 = vmul.f32 %v4135, %v1292
        %v4387 = vmul.f32 %v4136, %v1296
        %v4388 = vmul.f32 %v4137, %v1300
        %v4389 = vmul.f32 %v4138, %v1304
        %v4390 = vmul.f32 %v4139, %v1308
        %v4391 = vmul.f32 %v4140, %v1312
        %v4392 = vmul.f32 %v4141, %v1316
        %v4393 = vmul.f32 %v4142, %v1320
        %v4394 = vmul.f32 %v4143, %v1324
        %v4395 = vmul.f32 %v4144, %v1328
        %v4396 = vmul.f32 %v4145, %v1332
        %v4397 = vmul.f32 %v4146, %v1336
        %v4398 = vmul.f32 %v4147, %v1340
        %v4399 = vmul.f32 %v4148, %v1344
        %v4400 = vmul.f32 %v4307, %v1364
        %v4401 = vmul.f32 %v4309, %v1368
        %v4402 = vmul.f32 %v4311, %v1372
        %v4403 = vmul.f32 %v4313, %v1376
        %v4404 = vmul.f32 %v4315, %v1380
        %v4405 = vmul.f32 %v4317, %v1384
        %v4406 = vmul.f32 %v4319, %v1388
        %v4407 = vmul.f32 %v4321, %v1392
        %v4408 = vmul.f32 %v4323, %v1396
        %v4409 = vmul.f32 %v4325, %v1400
        %v4410 = vmul.f32 %v4327, %v1404
        %v4411 = vmul.f32 %v4329, %v1408
        %v4412 = vmul.f32 %v4331, %v1412
        %v4413 = vmul.f32 %v4333, %v1416
        %v4414 = vmul.f32 %v4334, %v1420
        %v4415 = vmul.f32 %v4351, %v1424
        %v4416 = vmul.f32 %v4229, %v1444
        %v4417 = vmul.f32 %v4231, %v1448
        %v4418 = vmul.f32 %v4233, %v1452
        %v4419 = vmul.f32 %v4235, %v1456
        %v4420 = vmul.f32 %v4237, %v1460
        %v4421 = vmul.f32 %v4239, %v1464
        %v4422 = vmul.f32 %v4241, %v1468
        %v4423 = vmul.f32 %v4243, %v1472
        %v4424 = vmul.f32 %v4245, %v1476
        %v4425 = vmul.f32 %v4247, %v1480
        %v4426 = vmul.f32 %v4249, %v1484
        %v4427 = vmul.f32 %v4251, %v1488
        %v4428 = vmul.f32 %v4253, %v1492
        %v4429 = vmul.f32 %v4254, %v1496
        %v4430 = vmul.f32 %v4210, %v1500
        %v4431 = vmul.f32 %v4270, %v1504
        %v4432 = vmul.f32 %v4134, %v1524
        %v4433 = vmul.f32 %v4135, %v1528
        %v4434 = vmul.f32 %v4136, %v1532
        %v4435 = vmul.f32 %v4137, %v1536
        %v4436 = vmul.f32 %v4138, %v1540
        %v4437 = vmul.f32 %v4139, %v1544
        %v4438 = vmul.f32 %v4140, %v1548
        %v4439 = vmul.f32 %v4141, %v1552
        %v4440 = vmul.f32 %v4142, %v1556
        %v4441 = vmul.f32 %v4143, %v1560
        %v4442 = vmul.f32 %v4144, %v1564
        %v4443 = vmul.f32 %v4145, %v1568
        %v4444 = vmul.f32 %v4146, %v1572
        %v4445 = vmul.f32 %v4147, %v1576
        %v4446 = vmul.f32 %v4148, %v1580
        %v4447 = vmul.f32 %v4133, %v1584
        %v4448 = vmul.f32 %v4309, %v1604
        %v4449 = vmul.f32 %v4311, %v1608
        %v4450 = vmul.f32 %v4313, %v1612
        %v4451 = vmul.f32 %v4315, %v1616
        %v4452 = vmul.f32 %v4317, %v1620
        %v4453 = vmul.f32 %v4319, %v1624
        %v4454 = vmul.f32 %v4321, %v1628
        %v4455 = vmul.f32 %v4323, %v1632
        %v4456 = vmul.f32 %v4325, %v1636
        %v4457 = vmul.f32 %v4327, %v1640
        %v4458 = vmul.f32 %v4329, %v1644
        %v4459 = vmul.f32 %v4331, %v1648
        %v4460 = vmul.f32 %v4333, %v1652
        %v4461 = vmul.f32 %v4334, %v1656
        %v4462 = vmul.f32 %v4351, %v1660
        %v4463 = vmul.f32 %v4307, %v1664
        %4480 = vrot.lane.b32.xlu0 %v4287, 32
        %v4481 = vpop.permute.xlu0 %4480
        %4482 = vrot.lane.b32.xlu0 %v4288, 32
        %v4483 = vpop.permute.xlu0 %4482
        %4484 = vrot.lane.b32.xlu0 %v4289, 32
        %v4485 = vpop.permute.xlu0 %4484
        %4486 = vrot.lane.b32.xlu0 %v4290, 32
        %v4487 = vpop.permute.xlu0 %4486
        %4488 = vrot.lane.b32.xlu0 %v4291, 32
        %v4489 = vpop.permute.xlu0 %4488
        %4490 = vrot.lane.b32.xlu0 %v4292, 32
        %v4491 = vpop.permute.xlu0 %4490
        %4492 = vrot.lane.b32.xlu0 %v4293, 32
        %v4493 = vpop.permute.xlu0 %4492
        %4494 = vrot.lane.b32.xlu0 %v4294, 32
        %v4495 = vpop.permute.xlu0 %4494
        %4496 = vrot.lane.b32.xlu0 %v4295, 32
        %v4497 = vpop.permute.xlu0 %4496
        %4498 = vrot.lane.b32.xlu0 %v4296, 32
        %v4499 = vpop.permute.xlu0 %4498
        %4500 = vrot.lane.b32.xlu0 %v4297, 32
        %v4501 = vpop.permute.xlu0 %4500
        %4502 = vrot.lane.b32.xlu0 %v4298, 32
        %v4503 = vpop.permute.xlu0 %4502
        %4504 = vrot.lane.b32.xlu0 %v4299, 32
        %v4505 = vpop.permute.xlu0 %4504
        %4506 = vrot.lane.b32.xlu0 %v4300, 32
        %v4507 = vpop.permute.xlu0 %4506
        %4508 = vrot.lane.b32.xlu0 %v4301, 32
        %v4509 = vpop.permute.xlu0 %4508
        %4510 = vrot.lane.b32.xlu0 %v4302, 32
        %v4511 = vpop.permute.xlu0 %4510
        %4544 = vrot.lane.b32.xlu0 %v4352, 64
        %v4545 = vpop.permute.xlu0 %4544
        %4546 = vrot.lane.b32.xlu0 %v4353, 64
        %v4547 = vpop.permute.xlu0 %4546
        %4548 = vrot.lane.b32.xlu0 %v4354, 64
        %v4549 = vpop.permute.xlu0 %4548
        %4550 = vrot.lane.b32.xlu0 %v4355, 64
        %v4551 = vpop.permute.xlu0 %4550
        %4552 = vrot.lane.b32.xlu0 %v4356, 64
        %v4553 = vpop.permute.xlu0 %4552
        %4554 = vrot.lane.b32.xlu0 %v4357, 64
        %v4555 = vpop.permute.xlu0 %4554
        %4556 = vrot.lane.b32.xlu0 %v4358, 64
        %v4557 = vpop.permute.xlu0 %4556
        %4558 = vrot.lane.b32.xlu0 %v4359, 64
        %v4559 = vpop.permute.xlu0 %4558
        %4560 = vrot.lane.b32.xlu0 %v4360, 64
        %v4561 = vpop.permute.xlu0 %4560
        %4562 = vrot.lane.b32.xlu0 %v4361, 64
        %v4563 = vpop.permute.xlu0 %4562
        %4564 = vrot.lane.b32.xlu0 %v4362, 64
        %v4565 = vpop.permute.xlu0 %4564
        %4566 = vrot.lane.b32.xlu0 %v4363, 64
        %v4567 = vpop.permute.xlu0 %4566
        %4568 = vrot.lane.b32.xlu0 %v4364, 64
        %v4569 = vpop.permute.xlu0 %4568
        %4570 = vrot.lane.b32.xlu0 %v4365, 64
        %v4571 = vpop.permute.xlu0 %4570
        %4572 = vrot.lane.b32.xlu0 %v4366, 64
        %v4573 = vpop.permute.xlu0 %4572
        %4574 = vrot.lane.b32.xlu0 %v4367, 64
        %v4575 = vpop.permute.xlu0 %4574
        %4608 = vrot.lane.b32.xlu0 %v4368, 96
        %v4609 = vpop.permute.xlu0 %4608
        %4610 = vrot.lane.b32.xlu0 %v4369, 96
        %v4611 = vpop.permute.xlu0 %4610
        %4612 = vrot.lane.b32.xlu0 %v4370, 96
        %v4613 = vpop.permute.xlu0 %4612
        %4614 = vrot.lane.b32.xlu0 %v4371, 96
        %v4615 = vpop.permute.xlu0 %4614
        %4616 = vrot.lane.b32.xlu0 %v4372, 96
        %v4617 = vpop.permute.xlu0 %4616
        %4618 = vrot.lane.b32.xlu0 %v4373, 96
        %v4619 = vpop.permute.xlu0 %4618
        %4620 = vrot.lane.b32.xlu0 %v4374, 96
        %v4621 = vpop.permute.xlu0 %4620
        %4622 = vrot.lane.b32.xlu0 %v4375, 96
        %v4623 = vpop.permute.xlu0 %4622
        %4624 = vrot.lane.b32.xlu0 %v4376, 96
        %v4625 = vpop.permute.xlu0 %4624
        %4626 = vrot.lane.b32.xlu0 %v4377, 96
        %v4627 = vpop.permute.xlu0 %4626
        %4628 = vrot.lane.b32.xlu0 %v4378, 96
        %v4629 = vpop.permute.xlu0 %4628
        %4630 = vrot.lane.b32.xlu0 %v4379, 96
        %v4631 = vpop.permute.xlu0 %4630
        %4632 = vrot.lane.b32.xlu0 %v4380, 96
        %v4633 = vpop.permute.xlu0 %4632
        %4634 = vrot.lane.b32.xlu0 %v4381, 96
        %v4635 = vpop.permute.xlu0 %4634
        %4636 = vrot.lane.b32.xlu0 %v4382, 96
        %v4637 = vpop.permute.xlu0 %4636
        %4638 = vrot.lane.b32.xlu0 %v4383, 96
        %v4639 = vpop.permute.xlu0 %4638
        %4672 = vrot.lane.b32.xlu0 %v4400, 32
        %v4673 = vpop.permute.xlu0 %4672
        %4674 = vrot.lane.b32.xlu0 %v4401, 32
        %v4675 = vpop.permute.xlu0 %4674
        %4676 = vrot.lane.b32.xlu0 %v4402, 32
        %v4677 = vpop.permute.xlu0 %4676
        %4678 = vrot.lane.b32.xlu0 %v4403, 32
        %v4679 = vpop.permute.xlu0 %4678
        %4680 = vrot.lane.b32.xlu0 %v4404, 32
        %v4681 = vpop.permute.xlu0 %4680
        %4682 = vrot.lane.b32.xlu0 %v4405, 32
        %v4683 = vpop.permute.xlu0 %4682
        %4684 = vrot.lane.b32.xlu0 %v4406, 32
        %v4685 = vpop.permute.xlu0 %4684
        %4686 = vrot.lane.b32.xlu0 %v4407, 32
        %v4687 = vpop.permute.xlu0 %4686
        %4688 = vrot.lane.b32.xlu0 %v4408, 32
        %v4689 = vpop.permute.xlu0 %4688
        %4690 = vrot.lane.b32.xlu0 %v4409, 32
        %v4691 = vpop.permute.xlu0 %4690
        %4692 = vrot.lane.b32.xlu0 %v4410, 32
        %v4693 = vpop.permute.xlu0 %4692
        %4694 = vrot.lane.b32.xlu0 %v4411, 32
        %v4695 = vpop.permute.xlu0 %4694
        %4696 = vrot.lane.b32.xlu0 %v4412, 32
        %v4697 = vpop.permute.xlu0 %4696
        %4698 = vrot.lane.b32.xlu0 %v4413, 32
        %v4699 = vpop.permute.xlu0 %4698
        %4700 = vrot.lane.b32.xlu0 %v4414, 32
        %v4701 = vpop.permute.xlu0 %4700
        %4702 = vrot.lane.b32.xlu0 %v4415, 32
        %v4703 = vpop.permute.xlu0 %4702
        %4736 = vrot.lane.b32.xlu0 %v4416, 64
        %v4737 = vpop.permute.xlu0 %4736
        %4738 = vrot.lane.b32.xlu0 %v4417, 64
        %v4739 = vpop.permute.xlu0 %4738
        %4740 = vrot.lane.b32.xlu0 %v4418, 64
        %v4741 = vpop.permute.xlu0 %4740
        %4742 = vrot.lane.b32.xlu0 %v4419, 64
        %v4743 = vpop.permute.xlu0 %4742
        %4744 = vrot.lane.b32.xlu0 %v4420, 64
        %v4745 = vpop.permute.xlu0 %4744
        %4746 = vrot.lane.b32.xlu0 %v4421, 64
        %v4747 = vpop.permute.xlu0 %4746
        %4748 = vrot.lane.b32.xlu0 %v4422, 64
        %v4749 = vpop.permute.xlu0 %4748
        %4750 = vrot.lane.b32.xlu0 %v4423, 64
        %v4751 = vpop.permute.xlu0 %4750
        %4752 = vrot.lane.b32.xlu0 %v4424, 64
        %v4753 = vpop.permute.xlu0 %4752
        %4754 = vrot.lane.b32.xlu0 %v4425, 64
        %v4755 = vpop.permute.xlu0 %4754
        %4756 = vrot.lane.b32.xlu0 %v4426, 64
        %v4757 = vpop.permute.xlu0 %4756
        %4758 = vrot.lane.b32.xlu0 %v4427, 64
        %v4759 = vpop.permute.xlu0 %4758
        %4760 = vrot.lane.b32.xlu0 %v4428, 64
        %v4761 = vpop.permute.xlu0 %4760
        %4762 = vrot.lane.b32.xlu0 %v4429, 64
        %v4763 = vpop.permute.xlu0 %4762
        %4764 = vrot.lane.b32.xlu0 %v4430, 64
        %v4765 = vpop.permute.xlu0 %4764
        %4766 = vrot.lane.b32.xlu0 %v4431, 64
        %v4767 = vpop.permute.xlu0 %4766
        %4800 = vrot.lane.b32.xlu0 %v4432, 96
        %v4801 = vpop.permute.xlu0 %4800
        %4802 = vrot.lane.b32.xlu0 %v4433, 96
        %v4803 = vpop.permute.xlu0 %4802
        %4804 = vrot.lane.b32.xlu0 %v4434, 96
        %v4805 = vpop.permute.xlu0 %4804
        %4806 = vrot.lane.b32.xlu0 %v4435, 96
        %v4807 = vpop.permute.xlu0 %4806
        %4808 = vrot.lane.b32.xlu0 %v4436, 96
        %v4809 = vpop.permute.xlu0 %4808
        %4810 = vrot.lane.b32.xlu0 %v4437, 96
        %v4811 = vpop.permute.xlu0 %4810
        %4812 = vrot.lane.b32.xlu0 %v4438, 96
        %v4813 = vpop.permute.xlu0 %4812
        %4814 = vrot.lane.b32.xlu0 %v4439, 96
        %v4815 = vpop.permute.xlu0 %4814
        %4816 = vrot.lane.b32.xlu0 %v4440, 96
        %v4817 = vpop.permute.xlu0 %4816
        %4818 = vrot.lane.b32.xlu0 %v4441, 96
        %v4819 = vpop.permute.xlu0 %4818
        %4820 = vrot.lane.b32.xlu0 %v4442, 96
        %v4821 = vpop.permute.xlu0 %4820
        %4822 = vrot.lane.b32.xlu0 %v4443, 96
        %v4823 = vpop.permute.xlu0 %4822
        %4824 = vrot.lane.b32.xlu0 %v4444, 96
        %v4825 = vpop.permute.xlu0 %4824
        %4826 = vrot.lane.b32.xlu0 %v4445, 96
        %v4827 = vpop.permute.xlu0 %4826
        %4828 = vrot.lane.b32.xlu0 %v4446, 96
        %v4829 = vpop.permute.xlu0 %4828
        %4830 = vrot.lane.b32.xlu0 %v4447, 96
        %v4831 = vpop.permute.xlu0 %4830
        %v4848 = vsel %vm2066, %v4271, %v4481
        %v4849 = vsel %vm2066, %v4272, %v4483
        %v4850 = vsel %vm2066, %v4273, %v4485
        %v4851 = vsel %vm2066, %v4274, %v4487
        %v4852 = vsel %vm2066, %v4275, %v4489
        %v4853 = vsel %vm2066, %v4276, %v4491
        %v4854 = vsel %vm2066, %v4277, %v4493
        %v4855 = vsel %vm2066, %v4278, %v4495
        %v4856 = vsel %vm2066, %v4279, %v4497
        %v4857 = vsel %vm2066, %v4280, %v4499
        %v4858 = vsel %vm2066, %v4281, %v4501
        %v4859 = vsel %vm2066, %v4282, %v4503
        %v4860 = vsel %vm2066, %v4283, %v4505
        %v4861 = vsel %vm2066, %v4284, %v4507
        %v4862 = vsel %vm2066, %v4285, %v4509
        %v4863 = vsel %vm2066, %v4286, %v4511
        %v4864 = vsel %vm2083, %v4848, %v4545
        %v4865 = vsel %vm2083, %v4849, %v4547
        %v4866 = vsel %vm2083, %v4850, %v4549
        %v4867 = vsel %vm2083, %v4851, %v4551
        %v4868 = vsel %vm2083, %v4852, %v4553
        %v4869 = vsel %vm2083, %v4853, %v4555
        %v4870 = vsel %vm2083, %v4854, %v4557
        %v4871 = vsel %vm2083, %v4855, %v4559
        %v4872 = vsel %vm2083, %v4856, %v4561
        %v4873 = vsel %vm2083, %v4857, %v4563
        %v4874 = vsel %vm2083, %v4858, %v4565
        %v4875 = vsel %vm2083, %v4859, %v4567
        %v4876 = vsel %vm2083, %v4860, %v4569
        %v4877 = vsel %vm2083, %v4861, %v4571
        %v4878 = vsel %vm2083, %v4862, %v4573
        %v4879 = vsel %vm2083, %v4863, %v4575
        %v4880 = vsel %vm2100, %v4864, %v4609
        %v4881 = vsel %vm2100, %v4865, %v4611
        %v4882 = vsel %vm2100, %v4866, %v4613
        %v4883 = vsel %vm2100, %v4867, %v4615
        %v4884 = vsel %vm2100, %v4868, %v4617
        %v4885 = vsel %vm2100, %v4869, %v4619
        %v4886 = vsel %vm2100, %v4870, %v4621
        %v4887 = vsel %vm2100, %v4871, %v4623
        %v4888 = vsel %vm2100, %v4872, %v4625
        %v4889 = vsel %vm2100, %v4873, %v4627
        %v4890 = vsel %vm2100, %v4874, %v4629
        %v4891 = vsel %vm2100, %v4875, %v4631
        %v4892 = vsel %vm2100, %v4876, %v4633
        %v4893 = vsel %vm2100, %v4877, %v4635
        %v4894 = vsel %vm2100, %v4878, %v4637
        %v4895 = vsel %vm2100, %v4879, %v4639
        %v4896 = vsel %vm2066, %v4384, %v4673
        %v4897 = vsel %vm2066, %v4385, %v4675
        %v4898 = vsel %vm2066, %v4386, %v4677
        %v4899 = vsel %vm2066, %v4387, %v4679
        %v4900 = vsel %vm2066, %v4388, %v4681
        %v4901 = vsel %vm2066, %v4389, %v4683
        %v4902 = vsel %vm2066, %v4390, %v4685
        %v4903 = vsel %vm2066, %v4391, %v4687
        %v4904 = vsel %vm2066, %v4392, %v4689
        %v4905 = vsel %vm2066, %v4393, %v4691
        %v4906 = vsel %vm2066, %v4394, %v4693
        %v4907 = vsel %vm2066, %v4395, %v4695
        %v4908 = vsel %vm2066, %v4396, %v4697
        %v4909 = vsel %vm2066, %v4397, %v4699
        %v4910 = vsel %vm2066, %v4398, %v4701
        %v4911 = vsel %vm2066, %v4399, %v4703
        %v4912 = vsel %vm2083, %v4896, %v4737
        %v4913 = vsel %vm2083, %v4897, %v4739
        %v4914 = vsel %vm2083, %v4898, %v4741
        %v4915 = vsel %vm2083, %v4899, %v4743
        %v4916 = vsel %vm2083, %v4900, %v4745
        %v4917 = vsel %vm2083, %v4901, %v4747
        %v4918 = vsel %vm2083, %v4902, %v4749
        %v4919 = vsel %vm2083, %v4903, %v4751
        %v4920 = vsel %vm2083, %v4904, %v4753
        %v4921 = vsel %vm2083, %v4905, %v4755
        %v4922 = vsel %vm2083, %v4906, %v4757
        %v4923 = vsel %vm2083, %v4907, %v4759
        %v4924 = vsel %vm2083, %v4908, %v4761
        %v4925 = vsel %vm2083, %v4909, %v4763
        %v4926 = vsel %vm2083, %v4910, %v4765
        %v4927 = vsel %vm2083, %v4911, %v4767
        %v4928 = vsel %vm2100, %v4912, %v4801
        %v4929 = vsel %vm2100, %v4913, %v4803
        %v4930 = vsel %vm2100, %v4914, %v4805
        %v4931 = vsel %vm2100, %v4915, %v4807
        %v4932 = vsel %vm2100, %v4916, %v4809
        %v4933 = vsel %vm2100, %v4917, %v4811
        %v4934 = vsel %vm2100, %v4918, %v4813
        %v4935 = vsel %vm2100, %v4919, %v4815
        %v4936 = vsel %vm2100, %v4920, %v4817
        %v4937 = vsel %vm2100, %v4921, %v4819
        %v4938 = vsel %vm2100, %v4922, %v4821
        %v4939 = vsel %vm2100, %v4923, %v4823
        %v4940 = vsel %vm2100, %v4924, %v4825
        %v4941 = vsel %vm2100, %v4925, %v4827
        %v4942 = vsel %vm2100, %v4926, %v4829
        %v4943 = vsel %vm2100, %v4927, %v4831
        %v4944 = vpack.c.bf16 %v4881, %v4880
        %v4945 = vpack.c.bf16 %v4929, %v4928
        %v4946 = vpack.c.bf16 %v4449, %v4448
        %v4947 = vpack.c.bf16 %v4883, %v4882
        %v4948 = vpack.c.bf16 %v4931, %v4930
        %v4949 = vpack.c.bf16 %v4451, %v4450
        %v4950 = vpack.c.bf16 %v4885, %v4884
        %v4951 = vpack.c.bf16 %v4933, %v4932
        %v4952 = vpack.c.bf16 %v4453, %v4452
        %v4953 = vpack.c.bf16 %v4887, %v4886
        %v4954 = vpack.c.bf16 %v4935, %v4934
        %v4955 = vpack.c.bf16 %v4455, %v4454
        %v4956 = vpack.c.bf16 %v4889, %v4888
        %v4957 = vpack.c.bf16 %v4937, %v4936
        %v4958 = vpack.c.bf16 %v4457, %v4456
        %v4959 = vpack.c.bf16 %v4891, %v4890
        %v4960 = vpack.c.bf16 %v4939, %v4938
        %v4961 = vpack.c.bf16 %v4459, %v4458
        %v4962 = vpack.c.bf16 %v4893, %v4892
        %v4963 = vpack.c.bf16 %v4941, %v4940
        %v4964 = vpack.c.bf16 %v4461, %v4460
        %v4965 = vpack.c.bf16 %v4895, %v4894
        %v4966 = vpack.c.bf16 %v4943, %v4942
        %v4967 = vpack.c.bf16 %v4463, %v4462
        %v4969 = vperm.slane %v4205, 0
        %v5007 = vunpack.c.l.b16 %v4169
        %v5008 = vunpack.c.l.b16 %v4170
        %v5009 = vunpack.c.l.b16 %v4171
        %v5010 = vunpack.c.l.b16 %v4172
        %v5011 = vunpack.c.l.b16 %v4173
        %v5012 = vunpack.c.l.b16 %v4174
        %v5013 = vunpack.c.l.b16 %v4175
        %v5014 = vunpack.c.l.b16 %v4176
        %v5015 = vunpack.c.l.b16 %v4177
        %v5016 = vunpack.c.l.b16 %v4178
        %v5017 = vunpack.c.l.b16 %v4179
        %v5018 = vunpack.c.l.b16 %v4180
        %v5019 = vunpack.c.l.b16 %v4181
        %v5020 = vunpack.c.l.b16 %v4182
        %v5021 = vunpack.c.l.b16 %v4183
        %v5022 = vunpack.c.l.b16 %v4184
        %v5023 = vunpack.c.l.b16 %v4185
        %v5024 = vunpack.c.l.b16 %v4186
        %v5025 = vunpack.c.l.b16 %v4187
        %v5026 = vunpack.c.l.b16 %v4188
        %v5027 = vunpack.c.l.b16 %v4189
        %v5028 = vunpack.c.l.b16 %v4190
        %v5029 = vunpack.c.l.b16 %v4191
        %v5030 = vunpack.c.l.b16 %v4192
        %v5031 = vunpack.c.l.b16 %v4193
        %v5032 = vunpack.c.l.b16 %v4194
        %v5033 = vunpack.c.l.b16 %v4195
        %v5034 = vunpack.c.l.b16 %v4196
        %v5035 = vunpack.c.l.b16 %v4197
        %v5036 = vunpack.c.l.b16 %v4198
        %v5037 = vunpack.c.l.b16 %v4199
        %v5038 = vunpack.c.l.b16 %v4200
        %v5039 = vunpack.c.l.b16 %v4201
        %v5040 = vunpack.c.l.b16 %v4202
        %v5041 = vunpack.c.l.b16 %v4203
        %v5042 = vunpack.c.l.b16 %v4204
        %v5043 = vpack.c.b16 %v5008, %v5007
        %v5044 = vpack.c.b16 %v5010, %v5009
        %v5045 = vpack.c.b16 %v5012, %v5011
        %v5046 = vpack.c.b16 %v5014, %v5013
        %v5047 = vpack.c.b16 %v5016, %v5015
        %v5048 = vpack.c.b16 %v5018, %v5017
        %v5049 = vpack.c.b16 %v5020, %v5019
        %v5050 = vpack.c.b16 %v5022, %v5021
        %v5051 = vpack.c.b16 %v5024, %v5023
        %v5052 = vpack.c.b16 %v5026, %v5025
        %v5053 = vpack.c.b16 %v5028, %v5027
        %v5054 = vpack.c.b16 %v5030, %v5029
        %v5055 = vpack.c.b16 %v5032, %v5031
        %v5056 = vpack.c.b16 %v5034, %v5033
        %v5057 = vpack.c.b16 %v5036, %v5035
        %v5058 = vpack.c.b16 %v5038, %v5037
        %v5059 = vpack.c.b16 %v5040, %v5039
        %v5060 = vpack.c.b16 %v5042, %v5041
        %v5080 = vsel %vm2066, %v4946, 0
        %v5083 = vsel %vm2066, %v4949, 0
        %v5086 = vsel %vm2066, %v4952, 0
        %v5089 = vsel %vm2066, %v4955, 0
        %v5092 = vsel %vm2066, %v4958, 0
        %v5095 = vsel %vm2066, %v4961, 0
        %v5098 = vsel %vm2066, %v4964, 0
        %v5101 = vsel %vm2066, %v4967, 0
        %5103 = vmatpush.bf16.msra.mxu0 %v5050
        %5104 = vmatpush.bf16.msra.mxu0 %v5049
        %5105 = vmatpush.bf16.msra.mxu0 %v5048
        %5106 = vmatpush.bf16.msra.mxu0 %v5047
        %5107 = vmatpush.bf16.msra.mxu0 %v5046
        %5108 = vmatpush.bf16.msra.mxu0 %v5045
        %5109 = vmatpush.bf16.msra.mxu0 %v5044
        %5110 = vmatpush.bf16.msra.mxu0 %v5043
        %5111 = vmatmul.bf16.gmra.mxu0 %v4944
        %v5112 = vpop.f32.mrf.mxu0
        %v5113 = vadd.f32 %v4969, %v5112
        %v5114 = vpop.f32.mrf.mxu0
        %v5115 = vadd.f32 %v4969, %v5114
        %5116 = vmatmul.bf16.gmra.mxu0 %v4947
        %v5117 = vpop.f32.mrf.mxu0
        %v5118 = vadd.f32 %v4969, %v5117
        %v5119 = vpop.f32.mrf.mxu0
        %v5120 = vadd.f32 %v4969, %v5119
        %5121 = vmatmul.bf16.gmra.mxu0 %v4950
        %v5122 = vpop.f32.mrf.mxu0
        %v5123 = vadd.f32 %v4969, %v5122
        %v5124 = vpop.f32.mrf.mxu0
        %v5125 = vadd.f32 %v4969, %v5124
        %5126 = vmatmul.bf16.gmra.mxu0 %v4953
        %v5127 = vpop.f32.mrf.mxu0
        %v5128 = vadd.f32 %v4969, %v5127
        %v5129 = vpop.f32.mrf.mxu0
        %v5130 = vadd.f32 %v4969, %v5129
        %5131 = vmatmul.bf16.gmra.mxu0 %v4956
        %v5132 = vpop.f32.mrf.mxu0
        %v5133 = vadd.f32 %v4969, %v5132
        %v5134 = vpop.f32.mrf.mxu0
        %v5135 = vadd.f32 %v4969, %v5134
        %5136 = vmatmul.bf16.gmra.mxu0 %v4959
        %v5137 = vpop.f32.mrf.mxu0
        %v5138 = vadd.f32 %v4969, %v5137
        %v5139 = vpop.f32.mrf.mxu0
        %v5140 = vadd.f32 %v4969, %v5139
        %5141 = vmatmul.bf16.gmra.mxu0 %v4962
        %v5142 = vpop.f32.mrf.mxu0
        %v5143 = vadd.f32 %v4969, %v5142
        %v5144 = vpop.f32.mrf.mxu0
        %v5145 = vadd.f32 %v4969, %v5144
        %5146 = vmatmul.bf16.gmra.mxu0 %v4965
        %v5147 = vpop.f32.mrf.mxu0
        %v5148 = vadd.f32 %v4969, %v5147
        %v5149 = vpop.f32.mrf.mxu0
        %v5150 = vadd.f32 %v4969, %v5149
        %5151 = vdwg.mxu0
        %5152 = vmatpush.bf16.msra.mxu0 %v5058
        %5153 = vmatpush.bf16.msra.mxu0 %v5057
        %5154 = vmatpush.bf16.msra.mxu0 %v5056
        %5155 = vmatpush.bf16.msra.mxu0 %v5055
        %5156 = vmatpush.bf16.msra.mxu0 %v5054
        %5157 = vmatpush.bf16.msra.mxu0 %v5053
        %5158 = vmatpush.bf16.msra.mxu0 %v5052
        %5159 = vmatpush.bf16.msra.mxu0 %v5051
        %5160 = vmatmul.bf16.gmra.mxu0 %v4945
        %v5161 = vpop.f32.mrf.mxu0
        %v5162 = vadd.f32 %v5113, %v5161
        %v5163 = vpop.f32.mrf.mxu0
        %v5164 = vadd.f32 %v5115, %v5163
        %5165 = vmatmul.bf16.gmra.mxu0 %v4948
        %v5166 = vpop.f32.mrf.mxu0
        %v5167 = vadd.f32 %v5118, %v5166
        %v5168 = vpop.f32.mrf.mxu0
        %v5169 = vadd.f32 %v5120, %v5168
        %5170 = vmatmul.bf16.gmra.mxu0 %v4951
        %v5171 = vpop.f32.mrf.mxu0
        %v5172 = vadd.f32 %v5123, %v5171
        %v5173 = vpop.f32.mrf.mxu0
        %v5174 = vadd.f32 %v5125, %v5173
        %5175 = vmatmul.bf16.gmra.mxu0 %v4954
        %v5176 = vpop.f32.mrf.mxu0
        %v5177 = vadd.f32 %v5128, %v5176
        %v5178 = vpop.f32.mrf.mxu0
        %v5179 = vadd.f32 %v5130, %v5178
        %5180 = vmatmul.bf16.gmra.mxu0 %v4957
        %v5181 = vpop.f32.mrf.mxu0
        %v5182 = vadd.f32 %v5133, %v5181
        %v5183 = vpop.f32.mrf.mxu0
        %v5184 = vadd.f32 %v5135, %v5183
        %5185 = vmatmul.bf16.gmra.mxu0 %v4960
        %v5186 = vpop.f32.mrf.mxu0
        %v5187 = vadd.f32 %v5138, %v5186
        %v5188 = vpop.f32.mrf.mxu0
        %v5189 = vadd.f32 %v5140, %v5188
        %5190 = vmatmul.bf16.gmra.mxu0 %v4963
        %v5191 = vpop.f32.mrf.mxu0
        %v5192 = vadd.f32 %v5143, %v5191
        %v5193 = vpop.f32.mrf.mxu0
        %v5194 = vadd.f32 %v5145, %v5193
        %5195 = vmatmul.bf16.gmra.mxu0 %v4966
        %v5196 = vpop.f32.mrf.mxu0
        %v5197 = vadd.f32 %v5148, %v5196
        %v5198 = vpop.f32.mrf.mxu0
        %v5199 = vadd.f32 %v5150, %v5198
        %5200 = vdwg.mxu0
        %5201 = vmatpush.bf16.msra.mxu0 0
        %5202 = vmatpush.bf16.msra.mxu0 0
        %5203 = vmatpush.bf16.msra.mxu0 0
        %5204 = vmatpush.bf16.msra.mxu0 0
        %5205 = vmatpush.bf16.msra.mxu0 0
        %5206 = vmatpush.bf16.msra.mxu0 0
        %5207 = vmatpush.bf16.msra.mxu0 %v5060
        %5208 = vmatpush.bf16.msra.mxu0 %v5059
        %5209 = vmatmul.bf16.gmra.mxu0 %v5080
        %v5210 = vpop.f32.mrf.mxu0
        %v5211 = vadd.f32 %v5162, %v5210
        %v5212 = vpop.f32.mrf.mxu0
        %v5213 = vadd.f32 %v5164, %v5212
        %5214 = vmatmul.bf16.gmra.mxu0 %v5083
        %v5215 = vpop.f32.mrf.mxu0
        %v5216 = vadd.f32 %v5167, %v5215
        %v5217 = vpop.f32.mrf.mxu0
        %v5218 = vadd.f32 %v5169, %v5217
        %5219 = vmatmul.bf16.gmra.mxu0 %v5086
        %v5220 = vpop.f32.mrf.mxu0
        %v5221 = vadd.f32 %v5172, %v5220
        %v5222 = vpop.f32.mrf.mxu0
        %v5223 = vadd.f32 %v5174, %v5222
        %5224 = vmatmul.bf16.gmra.mxu0 %v5089
        %v5225 = vpop.f32.mrf.mxu0
        %v5226 = vadd.f32 %v5177, %v5225
        %v5227 = vpop.f32.mrf.mxu0
        %v5228 = vadd.f32 %v5179, %v5227
        %5229 = vmatmul.bf16.gmra.mxu0 %v5092
        %v5230 = vpop.f32.mrf.mxu0
        %v5231 = vadd.f32 %v5182, %v5230
        %v5232 = vpop.f32.mrf.mxu0
        %v5233 = vadd.f32 %v5184, %v5232
        %5234 = vmatmul.bf16.gmra.mxu0 %v5095
        %v5235 = vpop.f32.mrf.mxu0
        %v5236 = vadd.f32 %v5187, %v5235
        %v5237 = vpop.f32.mrf.mxu0
        %v5238 = vadd.f32 %v5189, %v5237
        %5239 = vmatmul.bf16.gmra.mxu0 %v5098
        %v5240 = vpop.f32.mrf.mxu0
        %v5241 = vadd.f32 %v5192, %v5240
        %v5242 = vpop.f32.mrf.mxu0
        %v5243 = vadd.f32 %v5194, %v5242
        %5244 = vmatmul.bf16.gmra.mxu0 %v5101
        %v5245 = vpop.f32.mrf.mxu0
        %v5246 = vadd.f32 %v5197, %v5245
        %v5247 = vpop.f32.mrf.mxu0
        %v5248 = vadd.f32 %v5199, %v5247
        %5249 = vdwg.mxu0
        %5250 = vst [vmem:[%s14] sm:$0xff] %v5211
        %5251 = vst [vmem:[%s14 + $0x8] sm:$0xff] %v5213
        %5252 = vst [vmem:[%s14 + $0x10] sm:$0xff] %v5216
        %5253 = vst [vmem:[%s14 + $0x18] sm:$0xff] %v5218
        %5254 = vst [vmem:[%s14 + $0x20] sm:$0xff] %v5221
        %5255 = vst [vmem:[%s14 + $0x28] sm:$0xff] %v5223
        %5256 = vst [vmem:[%s14 + $0x30] sm:$0xff] %v5226
        %5257 = vst [vmem:[%s14 + $0x38] sm:$0xff] %v5228
        %5258 = vst [vmem:[%s14 + $0x40] sm:$0xff] %v5231
        %5259 = vst [vmem:[%s14 + $0x48] sm:$0xff] %v5233
        %5260 = vst [vmem:[%s14 + $0x50] sm:$0xff] %v5236
        %5261 = vst [vmem:[%s14 + $0x58] sm:$0xff] %v5238
        %5262 = vst [vmem:[%s14 + $0x60] sm:$0xff] %v5241
        %5263 = vst [vmem:[%s14 + $0x68] sm:$0xff] %v5243
        %5264 = vst [vmem:[%s14 + $0x70] sm:$0xff] %v5246
        %5265 = vst [vmem:[%s14 + $0x78] sm:$0xff] %v5248
      $region84: #{_lambda_.1} parent=75 // pred_fallthru
        _
      // Predicated region
      $region85: #{_lambda_.1} parent=75 // pred_check
        %p5266 = pneg %p372
      $region86: #{_lambda_.1} parent=75 // pred_check_branch
        %5268 = sbr.rel (%p5266) target = $region88
      $region87: #{_lambda_.1} parent=75 // pred_region
        _
      $region88: #{_lambda_.1} parent=75 // pred_fallthru
        _
      // Predicated region
      $region89: #{_lambda_.1} parent=75 // pred_check
        %p5269 = pneg %p372
      $region90: #{_lambda_.1} parent=75 // pred_check_branch
        %5271 = sbr.rel (%p5269) target = $region92
      $region91: #{_lambda_.1} parent=75 // pred_region
        _
      $region92: #{_lambda_.1} parent=75 // pred_fallthru
        _
    $region76: #{_lambda_.1} parent=5 // pred_fallthru
      _
    %p5272 = scmp.le.s32.totalorder 2, %s20
    // Predicated region
    $region93: #{_lambda_.1} parent=5 // pred_check
      %p5273 = pneg %p5272
    $region94: #{_lambda_.1} parent=5 // pred_check_branch
      %5275 = sbr.rel (%p5273) target = $region96
    $region95: #{_lambda_.1} parent=5 // pred_region
      %s5276 = ssub.s32 %s20, 2
    $region96: #{_lambda_.1} parent=5 // pred_fallthru
      _
  $region6: #{_lambda_.1} parent=0 // loop_footer
    %s24 = sadd.s32 1, %s20
  $region7: #{_lambda_.1} parent=0 // loop_footer_branch
    %19 = sbr.rel target = $region3
  $region8: #{_lambda_.1} parent=0 // loop_exit
    _

</llo_original>
